<compile_context>
chip_gen: v6e
topology: v6e:2x2x1
jax: 0.10.0
libtpu: 0.0.40
codegen_flags: <defaults>
</compile_context>

<pallas_src>
import functools

import numpy as np
import jax
import jax.numpy as jnp
from jax.experimental import pallas as pl
from jax.experimental.pallas import tpu as pltpu

# ---------------- model hyper-parameters (from the PyTorch module) ----------
VOCAB_SIZE = 40
EMBED_DIM = 128
WINDOW_SIZES = [2, 4, 3]
MAX_LEN = 21
FEATURE_SIZE = 256
N_CLASS = 2
LEAKY_SLOPE = 0.01                     # nn.LeakyReLU default

N_WIN = len(WINDOW_SIZES)
T_MAX = max(WINDOW_SIZES)              # 4 conv taps (zero-padded per window)
K_DIM = T_MAX * EMBED_DIM              # 512  (matmul K, 128-lane aligned)
D_DIM = N_WIN * FEATURE_SIZE           # 768  (representation width)
C_PAD = 128                            # lane-padded class dim (sliced outside)
L_PAD = ((MAX_LEN + 7) // 8) * 8       # 24   (sublane-aligned seq length)


def _round_up(x, m):
    return ((x + m - 1) // m) * m


# ---------------- fused Pallas kernel ----------------------------------------
def fused_textcnn_kernel(xcol_ref, wbig_ref, mask_ref, bias_ref,
                         fcw_ref, fcb_ref, rep_ref, logits_ref,
                         *, batch, l_pad):
    # All conv branches & taps in a single 2-D MXU matmul (bf16 in, f32 acc).
    s = jnp.dot(xcol_ref[...], wbig_ref[...],
                preferred_element_type=jnp.float32)            # (B*Lp, 3F) f32
    d = s.shape[-1]
    # Tile-aligned split of the row dim, mask invalid time positions (p >= P_h).
    s = s.reshape(batch, l_pad, d) + mask_ref[...][None, :, :]
    # Max-over-time first, then bias + LeakyReLU on the tiny pooled tensor.
    m = jnp.max(s, axis=1) + bias_ref[...]                     # (B, 3F)
    rep = jnp.where(m > 0, m, LEAKY_SLOPE * m)                 # LeakyReLU
    rep_ref[...] = rep
    # Final Linear as epilogue; output lanes padded to 128 (sliced outside).
    logits_ref[...] = (jnp.dot(rep, fcw_ref[...],
                               preferred_element_type=jnp.float32)
                       + fcb_ref[...])


def fused_textcnn(xcol, wbig, mask, bias, fcw, fcb, *, batch, l_pad):
    kernel = functools.partial(fused_textcnn_kernel, batch=batch, l_pad=l_pad)
    return pl.pallas_call(
        kernel,
        out_shape=(jax.ShapeDtypeStruct((batch, D_DIM), jnp.float32),
                   jax.ShapeDtypeStruct((batch, C_PAD), jnp.float32)),
        grid=(1,),
        in_specs=[
            pl.BlockSpec(xcol.shape, lambda i: (0, 0)),
            pl.BlockSpec(wbig.shape, lambda i: (0, 0)),
            pl.BlockSpec(mask.shape, lambda i: (0, 0)),
            pl.BlockSpec(bias.shape, lambda i: (0, 0)),
            pl.BlockSpec(fcw.shape, lambda i: (0, 0)),
            pl.BlockSpec(fcb.shape, lambda i: (0, 0)),
        ],
        out_specs=(pl.BlockSpec((batch, D_DIM), lambda i: (0, 0)),
                   pl.BlockSpec((batch, C_PAD), lambda i: (0, 0))),
        compiler_params=pltpu.CompilerParams(
            dimension_semantics=("arbitrary",)),
    )(xcol, wbig, mask, bias, fcw, fcb)


# ---------------- parameters (torch layout) + packing -------------------------
def init_params(key):
    keys = jax.random.split(key, 2 + 2 * N_WIN + 2)
    params = {
        "embed": jax.random.normal(keys[0], (VOCAB_SIZE, EMBED_DIM),
                                   jnp.float32) * 0.1,
        "conv_w": [], "conv_b": [],
    }
    for i, h in enumerate(WINDOW_SIZES):
        params["conv_w"].append(                                  # (F, E, h)
            jax.random.normal(keys[2 + 2 * i], (FEATURE_SIZE, EMBED_DIM, h),
                              jnp.float32) * 0.05)
        params["conv_b"].append(                                  # (F,)
            jax.random.normal(keys[2 + 2 * i + 1], (FEATURE_SIZE,),
                              jnp.float32) * 0.05)
    params["fc_w"] = jax.random.normal(keys[-2], (N_CLASS, D_DIM),
                                       jnp.float32) * 0.05        # torch (C, D)
    params["fc_b"] = jax.random.normal(keys[-1], (N_CLASS,), jnp.float32) * 0.05
    return params


def pack_params(params):
    """Pack torch-layout weights into the fused-kernel layout."""
    wbig = np.zeros((K_DIM, D_DIM), np.float32)
    bias = np.zeros((1, D_DIM), np.float32)
    mask = np.zeros((L_PAD, D_DIM), np.float32)
    for i, h in enumerate(WINDOW_SIZES):
        w = np.asarray(params["conv_w"][i])                       # (F, E, h)
        # (F, E, h) -> (h, E, F) -> (h*E, F): row t*E+e pairs with emb[p+t, e]
        wmat = np.transpose(w, (2, 1, 0)).reshape(h * EMBED_DIM, FEATURE_SIZE)
        wbig[: h * EMBED_DIM, i * FEATURE_SIZE:(i + 1) * FEATURE_SIZE] = wmat
        bias[0, i * FEATURE_SIZE:(i + 1) * FEATURE_SIZE] = np.asarray(
            params["conv_b"][i])
        p_valid = MAX_LEN - h + 1
        mask[p_valid:, i * FEATURE_SIZE:(i + 1) * FEATURE_SIZE] = -1e30
    fcw = np.zeros((D_DIM, C_PAD), np.float32)
    fcw[:, :N_CLASS] = np.asarray(params["fc_w"]).T
    fcb = np.zeros((1, C_PAD), np.float32)
    fcb[0, :N_CLASS] = np.asarray(params["fc_b"])
    return {
        "embed": params["embed"],
        "wbig": jnp.asarray(wbig, jnp.bfloat16),   # bf16 MXU operand
        "bias": jnp.asarray(bias),
        "mask": jnp.asarray(mask),
        "fcw": jnp.asarray(fcw),
        "fcb": jnp.asarray(fcb),
    }


# ---------------- forward pass -------------------------------------------------
def textcnn_forward(packed, tokens):
    """tokens: (B, MAX_LEN) int32 ids. Returns (logits, representation)."""
    B, L = tokens.shape
    emb = jnp.take(packed["embed"], tokens, axis=0)               # (B, L, E)
    b_pad = _round_up(max(B, 8), 8)
    emb_p = jnp.pad(emb, ((0, b_pad - B), (0, L_PAD - L), (0, 0)))
    # Shared tap layout (one array for all window sizes): block t = emb shifted by t.
    cols = [jnp.pad(emb_p[:, t:, :], ((0, 0), (0, t), (0, 0)))
            for t in range(T_MAX)]
    xcol = jnp.concatenate(cols, axis=-1).astype(jnp.bfloat16)    # (b_pad, Lp, K)
    xcol = xcol.reshape(b_pad * L_PAD, K_DIM)

    rep_p, logits_p = fused_textcnn(
        xcol, packed["wbig"], packed["mask"], packed["bias"],
        packed["fcw"], packed["fcb"], batch=b_pad, l_pad=L_PAD)

    # TODO(synk): training-mode dropout (random masking/scaling) not reproduced;
    #             identity == eval-mode semantics.
    return logits_p[:B, :N_CLASS], rep_p[:B]


# ---------------- pure-JAX reference (f32) for correctness -----------------------
def reference_forward(params, tokens):
    emb = jnp.take(params["embed"], tokens, axis=0)               # (B, L, E)
    pooled = []
    for i, h in enumerate(WINDOW_SIZES):
        w = params["conv_w"][i]                                   # (F, E, h)
        b = params["conv_b"][i]                                   # (F,)
        P = MAX_LEN - h + 1
        s = sum(jnp.einsum("bpe,fe->bpf", emb[:, t:t + P, :], w[:, :, t])
                for t in range(h)) + b[None, None, :]
        s = jnp.where(s > 0, s, LEAKY_SLOPE * s)                  # LeakyReLU
        pooled.append(jnp.max(s, axis=1))                         # MaxPool1d
    rep = jnp.concatenate(pooled, axis=-1)
    logits = rep @ params["fc_w"].T + params["fc_b"][None, :]
    return logits, rep


# ---------------- main -----------------------------------------------------------
if __name__ == "__main__":
    key = jax.random.PRNGKey(0)
    pkey, xkey = jax.random.split(key)
    params = init_params(pkey)
    packed = pack_params(params)

    B = 2
    tokens = jax.random.randint(xkey, (B, MAX_LEN), 0, VOCAB_SIZE,
                                dtype=jnp.int32)

    fwd = jax.jit(functools.partial(textcnn_forward, packed))
    logits, rep = fwd(tokens)
    jax.block_until_ready((logits, rep))

    assert logits.shape == (B, N_CLASS)
    assert rep.shape == (B, D_DIM)

    ref_logits, ref_rep = reference_forward(params, tokens)
    np.testing.assert_allclose(np.asarray(rep), np.asarray(ref_rep),
                               atol=3e-2, rtol=0)
    np.testing.assert_allclose(np.asarray(logits), np.asarray(ref_logits),
                               atol=3e-2, rtol=0)

    print("KERNEL_OK")
</pallas_src>

<mosaic_0001>
module attributes {stable_mosaic.version = 11 : i64} {
  func.func @fused_textcnn_kernel(%arg0: i32, %arg1: memref<192x512xbf16, #tpu.memory_space<vmem>>, %arg2: memref<512x768xbf16, #tpu.memory_space<vmem>>, %arg3: memref<24x768xf32, #tpu.memory_space<vmem>>, %arg4: memref<1x768xf32, #tpu.memory_space<vmem>>, %arg5: memref<768x128xf32, #tpu.memory_space<vmem>>, %arg6: memref<1x128xf32, #tpu.memory_space<vmem>>, %arg7: memref<8x768xf32, #tpu.memory_space<vmem>>, %arg8: memref<8x128xf32, #tpu.memory_space<vmem>>) attributes {dimension_semantics = [#tpu.dimension_semantics<arbitrary>], iteration_bounds = array<i64: 1>, scalar_prefetch = 0 : i64, scratch_operands = 0 : i64, tpu.core_type = #tpu.core_type<tc>, window_params = [{pipeline_mode = #tpu.pipeline_mode<synchronous>, transform_indices = @transform_0, window_bounds = array<i64: 192, 512>}, {pipeline_mode = #tpu.pipeline_mode<synchronous>, transform_indices = @transform_1, window_bounds = array<i64: 512, 768>}, {pipeline_mode = #tpu.pipeline_mode<synchronous>, transform_indices = @transform_2, window_bounds = array<i64: 24, 768>}, {pipeline_mode = #tpu.pipeline_mode<synchronous>, transform_indices = @transform_3, window_bounds = array<i64: 1, 768>}, {pipeline_mode = #tpu.pipeline_mode<synchronous>, transform_indices = @transform_4, window_bounds = array<i64: 768, 128>}, {pipeline_mode = #tpu.pipeline_mode<synchronous>, transform_indices = @transform_5, window_bounds = array<i64: 1, 128>}, {pipeline_mode = #tpu.pipeline_mode<synchronous>, transform_indices = @transform_6, window_bounds = array<i64: 8, 768>}, {pipeline_mode = #tpu.pipeline_mode<synchronous>, transform_indices = @transform_7, window_bounds = array<i64: 8, 128>}]} {
    %c0 = arith.constant 0 : index
    %c0_0 = arith.constant 0 : index
    %0 = vector.load %arg1[%c0, %c0_0] : memref<192x512xbf16, #tpu.memory_space<vmem>>, vector<192x512xbf16>
    %c0_1 = arith.constant 0 : index
    %c0_2 = arith.constant 0 : index
    %1 = vector.load %arg2[%c0_1, %c0_2] : memref<512x768xbf16, #tpu.memory_space<vmem>>, vector<512x768xbf16>
    %cst = arith.constant dense<0.000000e+00> : vector<192x768xf32>
    %2 = tpu.matmul %0, %1, %cst {dimension_numbers = #tpu.dot_dimension_numbers<[1], [0], [0], [1], [0, 0, 1, 1], [], []>} : vector<192x512xbf16>, vector<512x768xbf16>, vector<192x768xf32> -> vector<192x768xf32>
    %3 = vector.shape_cast %2 : vector<192x768xf32> to vector<8x24x768xf32>
    %c0_3 = arith.constant 0 : index
    %c0_4 = arith.constant 0 : index
    %4 = vector.load %arg3[%c0_3, %c0_4] : memref<24x768xf32, #tpu.memory_space<vmem>>, vector<24x768xf32>
    %5 = vector.shape_cast %4 : vector<24x768xf32> to vector<1x24x768xf32>
    %6 = vector.broadcast %5 : vector<1x24x768xf32> to vector<8x24x768xf32>
    %7 = arith.addf %3, %6 : vector<8x24x768xf32>
    %cst_5 = arith.constant dense<0xFF800000> : vector<8x768xf32>
    %8 = vector.multi_reduction <maximumf>, %7, %cst_5 [1] : vector<8x24x768xf32> to vector<8x768xf32>
    %c0_6 = arith.constant 0 : index
    %c0_7 = arith.constant 0 : index
    %9 = vector.load %arg4[%c0_6, %c0_7] : memref<1x768xf32, #tpu.memory_space<vmem>>, vector<1x768xf32>
    %10 = vector.broadcast %9 : vector<1x768xf32> to vector<8x768xf32>
    %11 = arith.addf %8, %10 : vector<8x768xf32>
    %cst_8 = arith.constant 0.000000e+00 : f32
    %12 = vector.broadcast %cst_8 : f32 to vector<8x768xf32>
    %13 = arith.cmpf ogt, %11, %12 : vector<8x768xf32>
    %cst_9 = arith.constant 0.00999999977 : f32
    %14 = vector.broadcast %cst_9 : f32 to vector<8x768xf32>
    %15 = arith.mulf %14, %11 : vector<8x768xf32>
    %16 = arith.select %13, %11, %15 : vector<8x768xi1>, vector<8x768xf32>
    %c0_10 = arith.constant 0 : index
    %c0_11 = arith.constant 0 : index
    %17 = vector.load %arg7[%c0_10, %c0_11] : memref<8x768xf32, #tpu.memory_space<vmem>>, vector<8x768xf32>
    tpu.vector_store %arg7[%c0_10, %c0_11], %16 {strides = array<i32>} : memref<8x768xf32, #tpu.memory_space<vmem>>, vector<8x768xf32>,
    %c0_12 = arith.constant 0 : index
    %c0_13 = arith.constant 0 : index
    %18 = vector.load %arg5[%c0_12, %c0_13] : memref<768x128xf32, #tpu.memory_space<vmem>>, vector<768x128xf32>
    %cst_14 = arith.constant dense<0.000000e+00> : vector<8x128xf32>
    %19 = tpu.matmul %16, %18, %cst_14 {dimension_numbers = #tpu.dot_dimension_numbers<[1], [0], [0], [1], [0, 0, 1, 1], [], []>} : vector<8x768xf32>, vector<768x128xf32>, vector<8x128xf32> -> vector<8x128xf32>
    %c0_15 = arith.constant 0 : index
    %c0_16 = arith.constant 0 : index
    %20 = vector.load %arg6[%c0_15, %c0_16] : memref<1x128xf32, #tpu.memory_space<vmem>>, vector<1x128xf32>
    %21 = vector.broadcast %20 : vector<1x128xf32> to vector<8x128xf32>
    %22 = arith.addf %19, %21 : vector<8x128xf32>
    %c0_17 = arith.constant 0 : index
    %c0_18 = arith.constant 0 : index
    %23 = vector.load %arg8[%c0_17, %c0_18] : memref<8x128xf32, #tpu.memory_space<vmem>>, vector<8x128xf32>
    tpu.vector_store %arg8[%c0_17, %c0_18], %22 {strides = array<i32>} : memref<8x128xf32, #tpu.memory_space<vmem>>, vector<8x128xf32>,
    return
  }
  func.func @transform_0(%arg0: i32) -> (i32, i32) {
    %c0_i32 = arith.constant 0 : i32
    %c0_i32_0 = arith.constant 0 : i32
    %c0_i32_1 = arith.constant 0 : i32
    return %c0_i32, %c0_i32_0 : i32, i32
  }
  func.func @transform_1(%arg0: i32) -> (i32, i32) {
    %c0_i32 = arith.constant 0 : i32
    %c0_i32_0 = arith.constant 0 : i32
    %c0_i32_1 = arith.constant 0 : i32
    return %c0_i32, %c0_i32_0 : i32, i32
  }
  func.func @transform_2(%arg0: i32) -> (i32, i32) {
    %c0_i32 = arith.constant 0 : i32
    %c0_i32_0 = arith.constant 0 : i32
    %c0_i32_1 = arith.constant 0 : i32
    return %c0_i32, %c0_i32_0 : i32, i32
  }
  func.func @transform_3(%arg0: i32) -> (i32, i32) {
    %c0_i32 = arith.constant 0 : i32
    %c0_i32_0 = arith.constant 0 : i32
    %c0_i32_1 = arith.constant 0 : i32
    return %c0_i32, %c0_i32_0 : i32, i32
  }
  func.func @transform_4(%arg0: i32) -> (i32, i32) {
    %c0_i32 = arith.constant 0 : i32
    %c0_i32_0 = arith.constant 0 : i32
    %c0_i32_1 = arith.constant 0 : i32
    return %c0_i32, %c0_i32_0 : i32, i32
  }
  func.func @transform_5(%arg0: i32) -> (i32, i32) {
    %c0_i32 = arith.constant 0 : i32
    %c0_i32_0 = arith.constant 0 : i32
    %c0_i32_1 = arith.constant 0 : i32
    return %c0_i32, %c0_i32_0 : i32, i32
  }
  func.func @transform_6(%arg0: i32) -> (i32, i32) {
    %c0_i32 = arith.constant 0 : i32
    %c0_i32_0 = arith.constant 0 : i32
    %c0_i32_1 = arith.constant 0 : i32
    return %c0_i32, %c0_i32_0 : i32, i32
  }
  func.func @transform_7(%arg0: i32) -> (i32, i32) {
    %c0_i32 = arith.constant 0 : i32
    %c0_i32_0 = arith.constant 0 : i32
    %c0_i32_1 = arith.constant 0 : i32
    return %c0_i32, %c0_i32_0 : i32, i32
  }
}

</mosaic_0001>

<llo_original>
// kernel: textcnn_forward.1
$region0: #{textcnn_forward.1}
  #allocation0 [shape = 'u32[]', space=smem, size = 0x4, offset = 0x4, fixed_abs, tag = 'smem constant byte address 0x4 - core index']
  #allocation1 [shape = 'u32[144,128]{1,0:T(1,128)}', space=vmem, size = 0x12000, scoped, tag = 'internal scratch']
  %s0 = inlined_call_operand.vmem [shape: bf16[192,512], index: 0, kind: input, shape index: {}]
  %s1 = inlined_call_operand.vmem [shape: bf16[512,768], index: 1, kind: input, shape index: {}]
  %s2 = inlined_call_operand.hbm [shape: f32[24,768], index: 2, kind: input, shape index: {}]
  %s3 = inlined_call_operand.vmem [shape: f32[1,768], index: 3, kind: input, shape index: {}]
  %s4 = inlined_call_operand.vmem [shape: f32[768,128], index: 4, kind: input, shape index: {}]
  %s5 = inlined_call_operand.vmem [shape: f32[1,128], index: 5, kind: input, shape index: {}]
  %s6 = inlined_call_operand.vmem [shape: f32[8,768], index: 6, kind: output, shape index: {0}]
  %s7 = inlined_call_operand.vmem [shape: f32[8,128], index: 7, kind: output, shape index: {1}]
  %8 = xla_tuple %s6, %s7
  %s9 = sld [smem:[#allocation0]]
  $region46: #{textcnn_forward.1} parent=0
    _
  %s11 = ssub.s32 1, %s9
  %s12 = scalar_select 0, %s11, %s9
  $region1: #{textcnn_forward.1} parent=0
    #allocation2 [shape = 'u8[73728]{0}', space=vmem, size = 0x12000, scoped, tag = 'input window, operand 2, single buffered']
    #allocation3 [shape = 's32[1]{0}', space=sflag, size = 0x4, scoped, tag = 'scoped memory for textcnn_forward.1']
    %13 = vsyncpa [#allocation3], 0
    // Predicated region
    $region2: #{textcnn_forward.1} parent=1 // pred_check
      _
    $region3: #{textcnn_forward.1} parent=1 // pred_check_branch
      %15 = sbr.rel (0) target = $region5
    $region4: #{textcnn_forward.1} parent=1 // pred_region
      _
    $region5: #{textcnn_forward.1} parent=1 // pred_fallthru
      _
    // Predicated region
    $region6: #{textcnn_forward.1} parent=1 // pred_check
      _
    $region7: #{textcnn_forward.1} parent=1 // pred_check_branch
      %17 = sbr.rel (0) target = $region9
    $region8: #{textcnn_forward.1} parent=1 // pred_region
      _
    $region9: #{textcnn_forward.1} parent=1 // pred_fallthru
      _
    // Predicated region
    $region10: #{textcnn_forward.1} parent=1 // pred_check
      _
    $region11: #{textcnn_forward.1} parent=1 // pred_check_branch
      %19 = sbr.rel (0) target = $region13
    $region12: #{textcnn_forward.1} parent=1 // pred_region
      %s21 = ssub.s32 2304, 2304
      %22 = vsyncadd [#allocation3], %s21
      %s23 = sshll.u32 [#allocation2], 4
      %s24 = int_to_ptr.vmem [resolvable:$true] %s23
      %29 = dma.hbm_to_vmem [thread:$0]  %s2, 2304, %s24, [#allocation3], 768, 768, 48
    $region13: #{textcnn_forward.1} parent=1 // pred_fallthru
      _
    // Predicated region
    $region14: #{textcnn_forward.1} parent=1 // pred_check
      _
    $region15: #{textcnn_forward.1} parent=1 // pred_check_branch
      %31 = sbr.rel (0) target = $region17
    $region16: #{textcnn_forward.1} parent=1 // pred_region
      _
    $region17: #{textcnn_forward.1} parent=1 // pred_fallthru
      _
    // Predicated region
    $region18: #{textcnn_forward.1} parent=1 // pred_check
      _
    $region19: #{textcnn_forward.1} parent=1 // pred_check_branch
      %33 = sbr.rel (0) target = $region21
    $region20: #{textcnn_forward.1} parent=1 // pred_region
      _
    $region21: #{textcnn_forward.1} parent=1 // pred_fallthru
      _
    // Predicated region
    $region22: #{textcnn_forward.1} parent=1 // pred_check
      _
    $region23: #{textcnn_forward.1} parent=1 // pred_check_branch
      %35 = sbr.rel (0) target = $region25
    $region24: #{textcnn_forward.1} parent=1 // pred_region
      _
    $region25: #{textcnn_forward.1} parent=1 // pred_fallthru
      _
    // Predicated region
    $region26: #{textcnn_forward.1} parent=1 // pred_check
      _
    $region27: #{textcnn_forward.1} parent=1 // pred_check_branch
      %37 = sbr.rel (0) target = $region29
    $region28: #{textcnn_forward.1} parent=1 // pred_region
      %38 = dma.done [#allocation3], 2304
    $region29: #{textcnn_forward.1} parent=1 // pred_fallthru
      _
    %v39 = vld [vmem:[%s0] sm:$0xff]
    %v40 = vld [vmem:[%s0 + $0x8] sm:$0xff]
    %v41 = vld [vmem:[%s0 + $0x10] sm:$0xff]
    %v42 = vld [vmem:[%s0 + $0x18] sm:$0xff]
    %v43 = vld [vmem:[%s0 + $0x20] sm:$0xff]
    %v44 = vld [vmem:[%s0 + $0x28] sm:$0xff]
    %v45 = vld [vmem:[%s0 + $0x30] sm:$0xff]
    %v46 = vld [vmem:[%s0 + $0x38] sm:$0xff]
    %v47 = vld [vmem:[%s0 + $0x40] sm:$0xff]
    %v48 = vld [vmem:[%s0 + $0x48] sm:$0xff]
    %v49 = vld [vmem:[%s0 + $0x50] sm:$0xff]
    %v50 = vld [vmem:[%s0 + $0x58] sm:$0xff]
    %v51 = vld [vmem:[%s0 + $0x60] sm:$0xff]
    %v52 = vld [vmem:[%s0 + $0x68] sm:$0xff]
    %v53 = vld [vmem:[%s0 + $0x70] sm:$0xff]
    %v54 = vld [vmem:[%s0 + $0x78] sm:$0xff]
    %v55 = vld [vmem:[%s0 + $0x80] sm:$0xff]
    %v56 = vld [vmem:[%s0 + $0x88] sm:$0xff]
    %v57 = vld [vmem:[%s0 + $0x90] sm:$0xff]
    %v58 = vld [vmem:[%s0 + $0x98] sm:$0xff]
    %v59 = vld [vmem:[%s0 + $0xa0] sm:$0xff]
    %v60 = vld [vmem:[%s0 + $0xa8] sm:$0xff]
    %v61 = vld [vmem:[%s0 + $0xb0] sm:$0xff]
    %v62 = vld [vmem:[%s0 + $0xb8] sm:$0xff]
    %v63 = vld [vmem:[%s0 + $0xc0] sm:$0xff]
    %v64 = vld [vmem:[%s0 + $0xc8] sm:$0xff]
    %v65 = vld [vmem:[%s0 + $0xd0] sm:$0xff]
    %v66 = vld [vmem:[%s0 + $0xd8] sm:$0xff]
    %v67 = vld [vmem:[%s0 + $0xe0] sm:$0xff]
    %v68 = vld [vmem:[%s0 + $0xe8] sm:$0xff]
    %v69 = vld [vmem:[%s0 + $0xf0] sm:$0xff]
    %v70 = vld [vmem:[%s0 + $0xf8] sm:$0xff]
    %v71 = vld [vmem:[%s0 + $0x100] sm:$0xff]
    %v72 = vld [vmem:[%s0 + $0x108] sm:$0xff]
    %v73 = vld [vmem:[%s0 + $0x110] sm:$0xff]
    %v74 = vld [vmem:[%s0 + $0x118] sm:$0xff]
    %v75 = vld [vmem:[%s0 + $0x120] sm:$0xff]
    %v76 = vld [vmem:[%s0 + $0x128] sm:$0xff]
    %v77 = vld [vmem:[%s0 + $0x130] sm:$0xff]
    %v78 = vld [vmem:[%s0 + $0x138] sm:$0xff]
    %v79 = vld [vmem:[%s0 + $0x140] sm:$0xff]
    %v80 = vld [vmem:[%s0 + $0x148] sm:$0xff]
    %v81 = vld [vmem:[%s0 + $0x150] sm:$0xff]
    %v82 = vld [vmem:[%s0 + $0x158] sm:$0xff]
    %v83 = vld [vmem:[%s0 + $0x160] sm:$0xff]
    %v84 = vld [vmem:[%s0 + $0x168] sm:$0xff]
    %v85 = vld [vmem:[%s0 + $0x170] sm:$0xff]
    %v86 = vld [vmem:[%s0 + $0x178] sm:$0xff]
    %v87 = vld [vmem:[%s1] sm:$0xff]
    %v88 = vld [vmem:[%s1 + $0x8] sm:$0xff]
    %v89 = vld [vmem:[%s1 + $0x10] sm:$0xff]
    %v90 = vld [vmem:[%s1 + $0x18] sm:$0xff]
    %v91 = vld [vmem:[%s1 + $0x20] sm:$0xff]
    %v92 = vld [vmem:[%s1 + $0x28] sm:$0xff]
    %v93 = vld [vmem:[%s1 + $0x30] sm:$0xff]
    %v94 = vld [vmem:[%s1 + $0x38] sm:$0xff]
    %v95 = vld [vmem:[%s1 + $0x40] sm:$0xff]
    %v96 = vld [vmem:[%s1 + $0x48] sm:$0xff]
    %v97 = vld [vmem:[%s1 + $0x50] sm:$0xff]
    %v98 = vld [vmem:[%s1 + $0x58] sm:$0xff]
    %v99 = vld [vmem:[%s1 + $0x60] sm:$0xff]
    %v100 = vld [vmem:[%s1 + $0x68] sm:$0xff]
    %v101 = vld [vmem:[%s1 + $0x70] sm:$0xff]
    %v102 = vld [vmem:[%s1 + $0x78] sm:$0xff]
    %v103 = vld [vmem:[%s1 + $0x80] sm:$0xff]
    %v104 = vld [vmem:[%s1 + $0x88] sm:$0xff]
    %v105 = vld [vmem:[%s1 + $0x90] sm:$0xff]
    %v106 = vld [vmem:[%s1 + $0x98] sm:$0xff]
    %v107 = vld [vmem:[%s1 + $0xa0] sm:$0xff]
    %v108 = vld [vmem:[%s1 + $0xa8] sm:$0xff]
    %v109 = vld [vmem:[%s1 + $0xb0] sm:$0xff]
    %v110 = vld [vmem:[%s1 + $0xb8] sm:$0xff]
    %v111 = vld [vmem:[%s1 + $0xc0] sm:$0xff]
    %v112 = vld [vmem:[%s1 + $0xc8] sm:$0xff]
    %v113 = vld [vmem:[%s1 + $0xd0] sm:$0xff]
    %v114 = vld [vmem:[%s1 + $0xd8] sm:$0xff]
    %v115 = vld [vmem:[%s1 + $0xe0] sm:$0xff]
    %v116 = vld [vmem:[%s1 + $0xe8] sm:$0xff]
    %v117 = vld [vmem:[%s1 + $0xf0] sm:$0xff]
    %v118 = vld [vmem:[%s1 + $0xf8] sm:$0xff]
    %v119 = vld [vmem:[%s1 + $0x100] sm:$0xff]
    %v120 = vld [vmem:[%s1 + $0x108] sm:$0xff]
    %v121 = vld [vmem:[%s1 + $0x110] sm:$0xff]
    %v122 = vld [vmem:[%s1 + $0x118] sm:$0xff]
    %v123 = vld [vmem:[%s1 + $0x120] sm:$0xff]
    %v124 = vld [vmem:[%s1 + $0x128] sm:$0xff]
    %v125 = vld [vmem:[%s1 + $0x130] sm:$0xff]
    %v126 = vld [vmem:[%s1 + $0x138] sm:$0xff]
    %v127 = vld [vmem:[%s1 + $0x140] sm:$0xff]
    %v128 = vld [vmem:[%s1 + $0x148] sm:$0xff]
    %v129 = vld [vmem:[%s1 + $0x150] sm:$0xff]
    %v130 = vld [vmem:[%s1 + $0x158] sm:$0xff]
    %v131 = vld [vmem:[%s1 + $0x160] sm:$0xff]
    %v132 = vld [vmem:[%s1 + $0x168] sm:$0xff]
    %v133 = vld [vmem:[%s1 + $0x170] sm:$0xff]
    %v134 = vld [vmem:[%s1 + $0x178] sm:$0xff]
    %v135 = vld [vmem:[%s1 + $0x180] sm:$0xff]
    %v136 = vld [vmem:[%s1 + $0x188] sm:$0xff]
    %v137 = vld [vmem:[%s1 + $0x190] sm:$0xff]
    %v138 = vld [vmem:[%s1 + $0x198] sm:$0xff]
    %v139 = vld [vmem:[%s1 + $0x1a0] sm:$0xff]
    %v140 = vld [vmem:[%s1 + $0x1a8] sm:$0xff]
    %v141 = vld [vmem:[%s1 + $0x1b0] sm:$0xff]
    %v142 = vld [vmem:[%s1 + $0x1b8] sm:$0xff]
    %v143 = vld [vmem:[%s1 + $0x1c0] sm:$0xff]
    %v144 = vld [vmem:[%s1 + $0x1c8] sm:$0xff]
    %v145 = vld [vmem:[%s1 + $0x1d0] sm:$0xff]
    %v146 = vld [vmem:[%s1 + $0x1d8] sm:$0xff]
    %v147 = vld [vmem:[%s1 + $0x1e0] sm:$0xff]
    %v148 = vld [vmem:[%s1 + $0x1e8] sm:$0xff]
    %v149 = vld [vmem:[%s1 + $0x1f0] sm:$0xff]
    %v150 = vld [vmem:[%s1 + $0x1f8] sm:$0xff]
    %v151 = vld [vmem:[%s1 + $0x200] sm:$0xff]
    %v152 = vld [vmem:[%s1 + $0x208] sm:$0xff]
    %v153 = vld [vmem:[%s1 + $0x210] sm:$0xff]
    %v154 = vld [vmem:[%s1 + $0x218] sm:$0xff]
    %v155 = vld [vmem:[%s1 + $0x220] sm:$0xff]
    %v156 = vld [vmem:[%s1 + $0x228] sm:$0xff]
    %v157 = vld [vmem:[%s1 + $0x230] sm:$0xff]
    %v158 = vld [vmem:[%s1 + $0x238] sm:$0xff]
    %v159 = vld [vmem:[%s1 + $0x240] sm:$0xff]
    %v160 = vld [vmem:[%s1 + $0x248] sm:$0xff]
    %v161 = vld [vmem:[%s1 + $0x250] sm:$0xff]
    %v162 = vld [vmem:[%s1 + $0x258] sm:$0xff]
    %v163 = vld [vmem:[%s1 + $0x260] sm:$0xff]
    %v164 = vld [vmem:[%s1 + $0x268] sm:$0xff]
    %v165 = vld [vmem:[%s1 + $0x270] sm:$0xff]
    %v166 = vld [vmem:[%s1 + $0x278] sm:$0xff]
    %v167 = vld [vmem:[%s1 + $0x280] sm:$0xff]
    %v168 = vld [vmem:[%s1 + $0x288] sm:$0xff]
    %v169 = vld [vmem:[%s1 + $0x290] sm:$0xff]
    %v170 = vld [vmem:[%s1 + $0x298] sm:$0xff]
    %v171 = vld [vmem:[%s1 + $0x2a0] sm:$0xff]
    %v172 = vld [vmem:[%s1 + $0x2a8] sm:$0xff]
    %v173 = vld [vmem:[%s1 + $0x2b0] sm:$0xff]
    %v174 = vld [vmem:[%s1 + $0x2b8] sm:$0xff]
    %v175 = vld [vmem:[%s1 + $0x2c0] sm:$0xff]
    %v176 = vld [vmem:[%s1 + $0x2c8] sm:$0xff]
    %v177 = vld [vmem:[%s1 + $0x2d0] sm:$0xff]
    %v178 = vld [vmem:[%s1 + $0x2d8] sm:$0xff]
    %v179 = vld [vmem:[%s1 + $0x2e0] sm:$0xff]
    %v180 = vld [vmem:[%s1 + $0x2e8] sm:$0xff]
    %v181 = vld [vmem:[%s1 + $0x2f0] sm:$0xff]
    %v182 = vld [vmem:[%s1 + $0x2f8] sm:$0xff]
    %v183 = vld [vmem:[%s1 + $0x300] sm:$0xff]
    %v184 = vld [vmem:[%s1 + $0x308] sm:$0xff]
    %v185 = vld [vmem:[%s1 + $0x310] sm:$0xff]
    %v186 = vld [vmem:[%s1 + $0x318] sm:$0xff]
    %v187 = vld [vmem:[%s1 + $0x320] sm:$0xff]
    %v188 = vld [vmem:[%s1 + $0x328] sm:$0xff]
    %v189 = vld [vmem:[%s1 + $0x330] sm:$0xff]
    %v190 = vld [vmem:[%s1 + $0x338] sm:$0xff]
    %v191 = vld [vmem:[%s1 + $0x340] sm:$0xff]
    %v192 = vld [vmem:[%s1 + $0x348] sm:$0xff]
    %v193 = vld [vmem:[%s1 + $0x350] sm:$0xff]
    %v194 = vld [vmem:[%s1 + $0x358] sm:$0xff]
    %v195 = vld [vmem:[%s1 + $0x360] sm:$0xff]
    %v196 = vld [vmem:[%s1 + $0x368] sm:$0xff]
    %v197 = vld [vmem:[%s1 + $0x370] sm:$0xff]
    %v198 = vld [vmem:[%s1 + $0x378] sm:$0xff]
    %v199 = vld [vmem:[%s1 + $0x380] sm:$0xff]
    %v200 = vld [vmem:[%s1 + $0x388] sm:$0xff]
    %v201 = vld [vmem:[%s1 + $0x390] sm:$0xff]
    %v202 = vld [vmem:[%s1 + $0x398] sm:$0xff]
    %v203 = vld [vmem:[%s1 + $0x3a0] sm:$0xff]
    %v204 = vld [vmem:[%s1 + $0x3a8] sm:$0xff]
    %v205 = vld [vmem:[%s1 + $0x3b0] sm:$0xff]
    %v206 = vld [vmem:[%s1 + $0x3b8] sm:$0xff]
    %v207 = vld [vmem:[%s1 + $0x3c0] sm:$0xff]
    %v208 = vld [vmem:[%s1 + $0x3c8] sm:$0xff]
    %v209 = vld [vmem:[%s1 + $0x3d0] sm:$0xff]
    %v210 = vld [vmem:[%s1 + $0x3d8] sm:$0xff]
    %v211 = vld [vmem:[%s1 + $0x3e0] sm:$0xff]
    %v212 = vld [vmem:[%s1 + $0x3e8] sm:$0xff]
    %v213 = vld [vmem:[%s1 + $0x3f0] sm:$0xff]
    %v214 = vld [vmem:[%s1 + $0x3f8] sm:$0xff]
    %v215 = vld [vmem:[%s1 + $0x400] sm:$0xff]
    %v216 = vld [vmem:[%s1 + $0x408] sm:$0xff]
    %v217 = vld [vmem:[%s1 + $0x410] sm:$0xff]
    %v218 = vld [vmem:[%s1 + $0x418] sm:$0xff]
    %v219 = vld [vmem:[%s1 + $0x420] sm:$0xff]
    %v220 = vld [vmem:[%s1 + $0x428] sm:$0xff]
    %v221 = vld [vmem:[%s1 + $0x430] sm:$0xff]
    %v222 = vld [vmem:[%s1 + $0x438] sm:$0xff]
    %v223 = vld [vmem:[%s1 + $0x440] sm:$0xff]
    %v224 = vld [vmem:[%s1 + $0x448] sm:$0xff]
    %v225 = vld [vmem:[%s1 + $0x450] sm:$0xff]
    %v226 = vld [vmem:[%s1 + $0x458] sm:$0xff]
    %v227 = vld [vmem:[%s1 + $0x460] sm:$0xff]
    %v228 = vld [vmem:[%s1 + $0x468] sm:$0xff]
    %v229 = vld [vmem:[%s1 + $0x470] sm:$0xff]
    %v230 = vld [vmem:[%s1 + $0x478] sm:$0xff]
    %v231 = vld [vmem:[%s1 + $0x480] sm:$0xff]
    %v232 = vld [vmem:[%s1 + $0x488] sm:$0xff]
    %v233 = vld [vmem:[%s1 + $0x490] sm:$0xff]
    %v234 = vld [vmem:[%s1 + $0x498] sm:$0xff]
    %v235 = vld [vmem:[%s1 + $0x4a0] sm:$0xff]
    %v236 = vld [vmem:[%s1 + $0x4a8] sm:$0xff]
    %v237 = vld [vmem:[%s1 + $0x4b0] sm:$0xff]
    %v238 = vld [vmem:[%s1 + $0x4b8] sm:$0xff]
    %v239 = vld [vmem:[%s1 + $0x4c0] sm:$0xff]
    %v240 = vld [vmem:[%s1 + $0x4c8] sm:$0xff]
    %v241 = vld [vmem:[%s1 + $0x4d0] sm:$0xff]
    %v242 = vld [vmem:[%s1 + $0x4d8] sm:$0xff]
    %v243 = vld [vmem:[%s1 + $0x4e0] sm:$0xff]
    %v244 = vld [vmem:[%s1 + $0x4e8] sm:$0xff]
    %v245 = vld [vmem:[%s1 + $0x4f0] sm:$0xff]
    %v246 = vld [vmem:[%s1 + $0x4f8] sm:$0xff]
    %v247 = vld [vmem:[%s1 + $0x500] sm:$0xff]
    %v248 = vld [vmem:[%s1 + $0x508] sm:$0xff]
    %v249 = vld [vmem:[%s1 + $0x510] sm:$0xff]
    %v250 = vld [vmem:[%s1 + $0x518] sm:$0xff]
    %v251 = vld [vmem:[%s1 + $0x520] sm:$0xff]
    %v252 = vld [vmem:[%s1 + $0x528] sm:$0xff]
    %v253 = vld [vmem:[%s1 + $0x530] sm:$0xff]
    %v254 = vld [vmem:[%s1 + $0x538] sm:$0xff]
    %v255 = vld [vmem:[%s1 + $0x540] sm:$0xff]
    %v256 = vld [vmem:[%s1 + $0x548] sm:$0xff]
    %v257 = vld [vmem:[%s1 + $0x550] sm:$0xff]
    %v258 = vld [vmem:[%s1 + $0x558] sm:$0xff]
    %v259 = vld [vmem:[%s1 + $0x560] sm:$0xff]
    %v260 = vld [vmem:[%s1 + $0x568] sm:$0xff]
    %v261 = vld [vmem:[%s1 + $0x570] sm:$0xff]
    %v262 = vld [vmem:[%s1 + $0x578] sm:$0xff]
    %v263 = vld [vmem:[%s1 + $0x580] sm:$0xff]
    %v264 = vld [vmem:[%s1 + $0x588] sm:$0xff]
    %v265 = vld [vmem:[%s1 + $0x590] sm:$0xff]
    %v266 = vld [vmem:[%s1 + $0x598] sm:$0xff]
    %v267 = vld [vmem:[%s1 + $0x5a0] sm:$0xff]
    %v268 = vld [vmem:[%s1 + $0x5a8] sm:$0xff]
    %v269 = vld [vmem:[%s1 + $0x5b0] sm:$0xff]
    %v270 = vld [vmem:[%s1 + $0x5b8] sm:$0xff]
    %v271 = vld [vmem:[%s1 + $0x5c0] sm:$0xff]
    %v272 = vld [vmem:[%s1 + $0x5c8] sm:$0xff]
    %v273 = vld [vmem:[%s1 + $0x5d0] sm:$0xff]
    %v274 = vld [vmem:[%s1 + $0x5d8] sm:$0xff]
    %v275 = vld [vmem:[%s1 + $0x5e0] sm:$0xff]
    %v276 = vld [vmem:[%s1 + $0x5e8] sm:$0xff]
    %v277 = vld [vmem:[%s1 + $0x5f0] sm:$0xff]
    %v278 = vld [vmem:[%s1 + $0x5f8] sm:$0xff]
    %v327 = vunpack.c.l.b16 %v39
    %v328 = vunpack.c.h.b16 %v39
    %v329 = vunpack.c.l.b16 %v40
    %v330 = vunpack.c.h.b16 %v40
    %v331 = vunpack.c.l.b16 %v41
    %v332 = vunpack.c.h.b16 %v41
    %v333 = vunpack.c.l.b16 %v42
    %v334 = vunpack.c.h.b16 %v42
    %v335 = vunpack.c.l.b16 %v43
    %v336 = vunpack.c.h.b16 %v43
    %v337 = vunpack.c.l.b16 %v44
    %v338 = vunpack.c.h.b16 %v44
    %v339 = vunpack.c.l.b16 %v45
    %v340 = vunpack.c.h.b16 %v45
    %v341 = vunpack.c.l.b16 %v46
    %v342 = vunpack.c.h.b16 %v46
    %v343 = vunpack.c.l.b16 %v47
    %v344 = vunpack.c.h.b16 %v47
    %v345 = vunpack.c.l.b16 %v48
    %v346 = vunpack.c.h.b16 %v48
    %v347 = vunpack.c.l.b16 %v49
    %v348 = vunpack.c.h.b16 %v49
    %v349 = vunpack.c.l.b16 %v50
    %v350 = vunpack.c.h.b16 %v50
    %v351 = vunpack.c.l.b16 %v51
    %v352 = vunpack.c.h.b16 %v51
    %v353 = vunpack.c.l.b16 %v52
    %v354 = vunpack.c.h.b16 %v52
    %v355 = vunpack.c.l.b16 %v53
    %v356 = vunpack.c.h.b16 %v53
    %v357 = vunpack.c.l.b16 %v54
    %v358 = vunpack.c.h.b16 %v54
    %v359 = vunpack.c.l.b16 %v55
    %v360 = vunpack.c.h.b16 %v55
    %v361 = vunpack.c.l.b16 %v56
    %v362 = vunpack.c.h.b16 %v56
    %v363 = vunpack.c.l.b16 %v57
    %v364 = vunpack.c.h.b16 %v57
    %v365 = vunpack.c.l.b16 %v58
    %v366 = vunpack.c.h.b16 %v58
    %v367 = vunpack.c.l.b16 %v59
    %v368 = vunpack.c.h.b16 %v59
    %v369 = vunpack.c.l.b16 %v60
    %v370 = vunpack.c.h.b16 %v60
    %v371 = vunpack.c.l.b16 %v61
    %v372 = vunpack.c.h.b16 %v61
    %v373 = vunpack.c.l.b16 %v62
    %v374 = vunpack.c.h.b16 %v62
    %v375 = vunpack.c.l.b16 %v63
    %v376 = vunpack.c.h.b16 %v63
    %v377 = vunpack.c.l.b16 %v64
    %v378 = vunpack.c.h.b16 %v64
    %v379 = vunpack.c.l.b16 %v65
    %v380 = vunpack.c.h.b16 %v65
    %v381 = vunpack.c.l.b16 %v66
    %v382 = vunpack.c.h.b16 %v66
    %v383 = vunpack.c.l.b16 %v67
    %v384 = vunpack.c.h.b16 %v67
    %v385 = vunpack.c.l.b16 %v68
    %v386 = vunpack.c.h.b16 %v68
    %v387 = vunpack.c.l.b16 %v69
    %v388 = vunpack.c.h.b16 %v69
    %v389 = vunpack.c.l.b16 %v70
    %v390 = vunpack.c.h.b16 %v70
    %v391 = vunpack.c.l.b16 %v71
    %v392 = vunpack.c.h.b16 %v71
    %v393 = vunpack.c.l.b16 %v72
    %v394 = vunpack.c.h.b16 %v72
    %v395 = vunpack.c.l.b16 %v73
    %v396 = vunpack.c.h.b16 %v73
    %v397 = vunpack.c.l.b16 %v74
    %v398 = vunpack.c.h.b16 %v74
    %v399 = vunpack.c.l.b16 %v75
    %v400 = vunpack.c.h.b16 %v75
    %v401 = vunpack.c.l.b16 %v76
    %v402 = vunpack.c.h.b16 %v76
    %v403 = vunpack.c.l.b16 %v77
    %v404 = vunpack.c.h.b16 %v77
    %v405 = vunpack.c.l.b16 %v78
    %v406 = vunpack.c.h.b16 %v78
    %v407 = vunpack.c.l.b16 %v79
    %v408 = vunpack.c.h.b16 %v79
    %v409 = vunpack.c.l.b16 %v80
    %v410 = vunpack.c.h.b16 %v80
    %v411 = vunpack.c.l.b16 %v81
    %v412 = vunpack.c.h.b16 %v81
    %v413 = vunpack.c.l.b16 %v82
    %v414 = vunpack.c.h.b16 %v82
    %v415 = vunpack.c.l.b16 %v83
    %v416 = vunpack.c.h.b16 %v83
    %v417 = vunpack.c.l.b16 %v84
    %v418 = vunpack.c.h.b16 %v84
    %v419 = vunpack.c.l.b16 %v85
    %v420 = vunpack.c.h.b16 %v85
    %v421 = vunpack.c.l.b16 %v86
    %v422 = vunpack.c.h.b16 %v86
    %v423 = vpack.c.b16 %v331, %v327
    %v424 = vpack.c.b16 %v332, %v328
    %v425 = vpack.c.b16 %v333, %v329
    %v426 = vpack.c.b16 %v334, %v330
    %v427 = vpack.c.b16 %v339, %v335
    %v428 = vpack.c.b16 %v340, %v336
    %v429 = vpack.c.b16 %v341, %v337
    %v430 = vpack.c.b16 %v342, %v338
    %v431 = vpack.c.b16 %v347, %v343
    %v432 = vpack.c.b16 %v348, %v344
    %v433 = vpack.c.b16 %v349, %v345
    %v434 = vpack.c.b16 %v350, %v346
    %v435 = vpack.c.b16 %v355, %v351
    %v436 = vpack.c.b16 %v356, %v352
    %v437 = vpack.c.b16 %v357, %v353
    %v438 = vpack.c.b16 %v358, %v354
    %v439 = vpack.c.b16 %v363, %v359
    %v440 = vpack.c.b16 %v364, %v360
    %v441 = vpack.c.b16 %v365, %v361
    %v442 = vpack.c.b16 %v366, %v362
    %v443 = vpack.c.b16 %v371, %v367
    %v444 = vpack.c.b16 %v372, %v368
    %v445 = vpack.c.b16 %v373, %v369
    %v446 = vpack.c.b16 %v374, %v370
    %v447 = vpack.c.b16 %v379, %v375
    %v448 = vpack.c.b16 %v380, %v376
    %v449 = vpack.c.b16 %v381, %v377
    %v450 = vpack.c.b16 %v382, %v378
    %v451 = vpack.c.b16 %v387, %v383
    %v452 = vpack.c.b16 %v388, %v384
    %v453 = vpack.c.b16 %v389, %v385
    %v454 = vpack.c.b16 %v390, %v386
    %v455 = vpack.c.b16 %v395, %v391
    %v456 = vpack.c.b16 %v396, %v392
    %v457 = vpack.c.b16 %v397, %v393
    %v458 = vpack.c.b16 %v398, %v394
    %v459 = vpack.c.b16 %v403, %v399
    %v460 = vpack.c.b16 %v404, %v400
    %v461 = vpack.c.b16 %v405, %v401
    %v462 = vpack.c.b16 %v406, %v402
    %v463 = vpack.c.b16 %v411, %v407
    %v464 = vpack.c.b16 %v412, %v408
    %v465 = vpack.c.b16 %v413, %v409
    %v466 = vpack.c.b16 %v414, %v410
    %v467 = vpack.c.b16 %v419, %v415
    %v468 = vpack.c.b16 %v420, %v416
    %v469 = vpack.c.b16 %v421, %v417
    %v470 = vpack.c.b16 %v422, %v418
    %v711 = vunpack.c.l.b16 %v87
    %v712 = vunpack.c.h.b16 %v87
    %v713 = vunpack.c.l.b16 %v88
    %v714 = vunpack.c.h.b16 %v88
    %v715 = vunpack.c.l.b16 %v89
    %v716 = vunpack.c.h.b16 %v89
    %v717 = vunpack.c.l.b16 %v90
    %v718 = vunpack.c.h.b16 %v90
    %v719 = vunpack.c.l.b16 %v91
    %v720 = vunpack.c.h.b16 %v91
    %v721 = vunpack.c.l.b16 %v92
    %v722 = vunpack.c.h.b16 %v92
    %v723 = vunpack.c.l.b16 %v93
    %v724 = vunpack.c.h.b16 %v93
    %v725 = vunpack.c.l.b16 %v94
    %v726 = vunpack.c.h.b16 %v94
    %v727 = vunpack.c.l.b16 %v95
    %v728 = vunpack.c.h.b16 %v95
    %v729 = vunpack.c.l.b16 %v96
    %v730 = vunpack.c.h.b16 %v96
    %v731 = vunpack.c.l.b16 %v97
    %v732 = vunpack.c.h.b16 %v97
    %v733 = vunpack.c.l.b16 %v98
    %v734 = vunpack.c.h.b16 %v98
    %v735 = vunpack.c.l.b16 %v99
    %v736 = vunpack.c.h.b16 %v99
    %v737 = vunpack.c.l.b16 %v100
    %v738 = vunpack.c.h.b16 %v100
    %v739 = vunpack.c.l.b16 %v101
    %v740 = vunpack.c.h.b16 %v101
    %v741 = vunpack.c.l.b16 %v102
    %v742 = vunpack.c.h.b16 %v102
    %v743 = vunpack.c.l.b16 %v103
    %v744 = vunpack.c.h.b16 %v103
    %v745 = vunpack.c.l.b16 %v104
    %v746 = vunpack.c.h.b16 %v104
    %v747 = vunpack.c.l.b16 %v105
    %v748 = vunpack.c.h.b16 %v105
    %v749 = vunpack.c.l.b16 %v106
    %v750 = vunpack.c.h.b16 %v106
    %v751 = vunpack.c.l.b16 %v107
    %v752 = vunpack.c.h.b16 %v107
    %v753 = vunpack.c.l.b16 %v108
    %v754 = vunpack.c.h.b16 %v108
    %v755 = vunpack.c.l.b16 %v109
    %v756 = vunpack.c.h.b16 %v109
    %v757 = vunpack.c.l.b16 %v110
    %v758 = vunpack.c.h.b16 %v110
    %v759 = vunpack.c.l.b16 %v111
    %v760 = vunpack.c.h.b16 %v111
    %v761 = vunpack.c.l.b16 %v112
    %v762 = vunpack.c.h.b16 %v112
    %v763 = vunpack.c.l.b16 %v113
    %v764 = vunpack.c.h.b16 %v113
    %v765 = vunpack.c.l.b16 %v114
    %v766 = vunpack.c.h.b16 %v114
    %v767 = vunpack.c.l.b16 %v115
    %v768 = vunpack.c.h.b16 %v115
    %v769 = vunpack.c.l.b16 %v116
    %v770 = vunpack.c.h.b16 %v116
    %v771 = vunpack.c.l.b16 %v117
    %v772 = vunpack.c.h.b16 %v117
    %v773 = vunpack.c.l.b16 %v118
    %v774 = vunpack.c.h.b16 %v118
    %v775 = vunpack.c.l.b16 %v119
    %v776 = vunpack.c.h.b16 %v119
    %v777 = vunpack.c.l.b16 %v120
    %v778 = vunpack.c.h.b16 %v120
    %v779 = vunpack.c.l.b16 %v121
    %v780 = vunpack.c.h.b16 %v121
    %v781 = vunpack.c.l.b16 %v122
    %v782 = vunpack.c.h.b16 %v122
    %v783 = vunpack.c.l.b16 %v123
    %v784 = vunpack.c.h.b16 %v123
    %v785 = vunpack.c.l.b16 %v124
    %v786 = vunpack.c.h.b16 %v124
    %v787 = vunpack.c.l.b16 %v125
    %v788 = vunpack.c.h.b16 %v125
    %v789 = vunpack.c.l.b16 %v126
    %v790 = vunpack.c.h.b16 %v126
    %v791 = vunpack.c.l.b16 %v127
    %v792 = vunpack.c.h.b16 %v127
    %v793 = vunpack.c.l.b16 %v128
    %v794 = vunpack.c.h.b16 %v128
    %v795 = vunpack.c.l.b16 %v129
    %v796 = vunpack.c.h.b16 %v129
    %v797 = vunpack.c.l.b16 %v130
    %v798 = vunpack.c.h.b16 %v130
    %v799 = vunpack.c.l.b16 %v131
    %v800 = vunpack.c.h.b16 %v131
    %v801 = vunpack.c.l.b16 %v132
    %v802 = vunpack.c.h.b16 %v132
    %v803 = vunpack.c.l.b16 %v133
    %v804 = vunpack.c.h.b16 %v133
    %v805 = vunpack.c.l.b16 %v134
    %v806 = vunpack.c.h.b16 %v134
    %v807 = vunpack.c.l.b16 %v135
    %v808 = vunpack.c.h.b16 %v135
    %v809 = vunpack.c.l.b16 %v136
    %v810 = vunpack.c.h.b16 %v136
    %v811 = vunpack.c.l.b16 %v137
    %v812 = vunpack.c.h.b16 %v137
    %v813 = vunpack.c.l.b16 %v138
    %v814 = vunpack.c.h.b16 %v138
    %v815 = vunpack.c.l.b16 %v139
    %v816 = vunpack.c.h.b16 %v139
    %v817 = vunpack.c.l.b16 %v140
    %v818 = vunpack.c.h.b16 %v140
    %v819 = vunpack.c.l.b16 %v141
    %v820 = vunpack.c.h.b16 %v141
    %v821 = vunpack.c.l.b16 %v142
    %v822 = vunpack.c.h.b16 %v142
    %v823 = vunpack.c.l.b16 %v143
    %v824 = vunpack.c.h.b16 %v143
    %v825 = vunpack.c.l.b16 %v144
    %v826 = vunpack.c.h.b16 %v144
    %v827 = vunpack.c.l.b16 %v145
    %v828 = vunpack.c.h.b16 %v145
    %v829 = vunpack.c.l.b16 %v146
    %v830 = vunpack.c.h.b16 %v146
    %v831 = vunpack.c.l.b16 %v147
    %v832 = vunpack.c.h.b16 %v147
    %v833 = vunpack.c.l.b16 %v148
    %v834 = vunpack.c.h.b16 %v148
    %v835 = vunpack.c.l.b16 %v149
    %v836 = vunpack.c.h.b16 %v149
    %v837 = vunpack.c.l.b16 %v150
    %v838 = vunpack.c.h.b16 %v150
    %v839 = vunpack.c.l.b16 %v151
    %v840 = vunpack.c.h.b16 %v151
    %v841 = vunpack.c.l.b16 %v152
    %v842 = vunpack.c.h.b16 %v152
    %v843 = vunpack.c.l.b16 %v153
    %v844 = vunpack.c.h.b16 %v153
    %v845 = vunpack.c.l.b16 %v154
    %v846 = vunpack.c.h.b16 %v154
    %v847 = vunpack.c.l.b16 %v155
    %v848 = vunpack.c.h.b16 %v155
    %v849 = vunpack.c.l.b16 %v156
    %v850 = vunpack.c.h.b16 %v156
    %v851 = vunpack.c.l.b16 %v157
    %v852 = vunpack.c.h.b16 %v157
    %v853 = vunpack.c.l.b16 %v158
    %v854 = vunpack.c.h.b16 %v158
    %v855 = vunpack.c.l.b16 %v159
    %v856 = vunpack.c.h.b16 %v159
    %v857 = vunpack.c.l.b16 %v160
    %v858 = vunpack.c.h.b16 %v160
    %v859 = vunpack.c.l.b16 %v161
    %v860 = vunpack.c.h.b16 %v161
    %v861 = vunpack.c.l.b16 %v162
    %v862 = vunpack.c.h.b16 %v162
    %v863 = vunpack.c.l.b16 %v163
    %v864 = vunpack.c.h.b16 %v163
    %v865 = vunpack.c.l.b16 %v164
    %v866 = vunpack.c.h.b16 %v164
    %v867 = vunpack.c.l.b16 %v165
    %v868 = vunpack.c.h.b16 %v165
    %v869 = vunpack.c.l.b16 %v166
    %v870 = vunpack.c.h.b16 %v166
    %v871 = vunpack.c.l.b16 %v167
    %v872 = vunpack.c.h.b16 %v167
    %v873 = vunpack.c.l.b16 %v168
    %v874 = vunpack.c.h.b16 %v168
    %v875 = vunpack.c.l.b16 %v169
    %v876 = vunpack.c.h.b16 %v169
    %v877 = vunpack.c.l.b16 %v170
    %v878 = vunpack.c.h.b16 %v170
    %v879 = vunpack.c.l.b16 %v171
    %v880 = vunpack.c.h.b16 %v171
    %v881 = vunpack.c.l.b16 %v172
    %v882 = vunpack.c.h.b16 %v172
    %v883 = vunpack.c.l.b16 %v173
    %v884 = vunpack.c.h.b16 %v173
    %v885 = vunpack.c.l.b16 %v174
    %v886 = vunpack.c.h.b16 %v174
    %v887 = vunpack.c.l.b16 %v175
    %v888 = vunpack.c.h.b16 %v175
    %v889 = vunpack.c.l.b16 %v176
    %v890 = vunpack.c.h.b16 %v176
    %v891 = vunpack.c.l.b16 %v177
    %v892 = vunpack.c.h.b16 %v177
    %v893 = vunpack.c.l.b16 %v178
    %v894 = vunpack.c.h.b16 %v178
    %v895 = vunpack.c.l.b16 %v179
    %v896 = vunpack.c.h.b16 %v179
    %v897 = vunpack.c.l.b16 %v180
    %v898 = vunpack.c.h.b16 %v180
    %v899 = vunpack.c.l.b16 %v181
    %v900 = vunpack.c.h.b16 %v181
    %v901 = vunpack.c.l.b16 %v182
    %v902 = vunpack.c.h.b16 %v182
    %v903 = vunpack.c.l.b16 %v183
    %v904 = vunpack.c.h.b16 %v183
    %v905 = vunpack.c.l.b16 %v184
    %v906 = vunpack.c.h.b16 %v184
    %v907 = vunpack.c.l.b16 %v185
    %v908 = vunpack.c.h.b16 %v185
    %v909 = vunpack.c.l.b16 %v186
    %v910 = vunpack.c.h.b16 %v186
    %v911 = vunpack.c.l.b16 %v187
    %v912 = vunpack.c.h.b16 %v187
    %v913 = vunpack.c.l.b16 %v188
    %v914 = vunpack.c.h.b16 %v188
    %v915 = vunpack.c.l.b16 %v189
    %v916 = vunpack.c.h.b16 %v189
    %v917 = vunpack.c.l.b16 %v190
    %v918 = vunpack.c.h.b16 %v190
    %v919 = vunpack.c.l.b16 %v191
    %v920 = vunpack.c.h.b16 %v191
    %v921 = vunpack.c.l.b16 %v192
    %v922 = vunpack.c.h.b16 %v192
    %v923 = vunpack.c.l.b16 %v193
    %v924 = vunpack.c.h.b16 %v193
    %v925 = vunpack.c.l.b16 %v194
    %v926 = vunpack.c.h.b16 %v194
    %v927 = vunpack.c.l.b16 %v195
    %v928 = vunpack.c.h.b16 %v195
    %v929 = vunpack.c.l.b16 %v196
    %v930 = vunpack.c.h.b16 %v196
    %v931 = vunpack.c.l.b16 %v197
    %v932 = vunpack.c.h.b16 %v197
    %v933 = vunpack.c.l.b16 %v198
    %v934 = vunpack.c.h.b16 %v198
    %v935 = vunpack.c.l.b16 %v199
    %v936 = vunpack.c.h.b16 %v199
    %v937 = vunpack.c.l.b16 %v200
    %v938 = vunpack.c.h.b16 %v200
    %v939 = vunpack.c.l.b16 %v201
    %v940 = vunpack.c.h.b16 %v201
    %v941 = vunpack.c.l.b16 %v202
    %v942 = vunpack.c.h.b16 %v202
    %v943 = vunpack.c.l.b16 %v203
    %v944 = vunpack.c.h.b16 %v203
    %v945 = vunpack.c.l.b16 %v204
    %v946 = vunpack.c.h.b16 %v204
    %v947 = vunpack.c.l.b16 %v205
    %v948 = vunpack.c.h.b16 %v205
    %v949 = vunpack.c.l.b16 %v206
    %v950 = vunpack.c.h.b16 %v206
    %v951 = vunpack.c.l.b16 %v207
    %v952 = vunpack.c.h.b16 %v207
    %v953 = vunpack.c.l.b16 %v208
    %v954 = vunpack.c.h.b16 %v208
    %v955 = vunpack.c.l.b16 %v209
    %v956 = vunpack.c.h.b16 %v209
    %v957 = vunpack.c.l.b16 %v210
    %v958 = vunpack.c.h.b16 %v210
    %v959 = vunpack.c.l.b16 %v211
    %v960 = vunpack.c.h.b16 %v211
    %v961 = vunpack.c.l.b16 %v212
    %v962 = vunpack.c.h.b16 %v212
    %v963 = vunpack.c.l.b16 %v213
    %v964 = vunpack.c.h.b16 %v213
    %v965 = vunpack.c.l.b16 %v214
    %v966 = vunpack.c.h.b16 %v214
    %v967 = vunpack.c.l.b16 %v215
    %v968 = vunpack.c.h.b16 %v215
    %v969 = vunpack.c.l.b16 %v216
    %v970 = vunpack.c.h.b16 %v216
    %v971 = vunpack.c.l.b16 %v217
    %v972 = vunpack.c.h.b16 %v217
    %v973 = vunpack.c.l.b16 %v218
    %v974 = vunpack.c.h.b16 %v218
    %v975 = vunpack.c.l.b16 %v219
    %v976 = vunpack.c.h.b16 %v219
    %v977 = vunpack.c.l.b16 %v220
    %v978 = vunpack.c.h.b16 %v220
    %v979 = vunpack.c.l.b16 %v221
    %v980 = vunpack.c.h.b16 %v221
    %v981 = vunpack.c.l.b16 %v222
    %v982 = vunpack.c.h.b16 %v222
    %v983 = vunpack.c.l.b16 %v223
    %v984 = vunpack.c.h.b16 %v223
    %v985 = vunpack.c.l.b16 %v224
    %v986 = vunpack.c.h.b16 %v224
    %v987 = vunpack.c.l.b16 %v225
    %v988 = vunpack.c.h.b16 %v225
    %v989 = vunpack.c.l.b16 %v226
    %v990 = vunpack.c.h.b16 %v226
    %v991 = vunpack.c.l.b16 %v227
    %v992 = vunpack.c.h.b16 %v227
    %v993 = vunpack.c.l.b16 %v228
    %v994 = vunpack.c.h.b16 %v228
    %v995 = vunpack.c.l.b16 %v229
    %v996 = vunpack.c.h.b16 %v229
    %v997 = vunpack.c.l.b16 %v230
    %v998 = vunpack.c.h.b16 %v230
    %v999 = vunpack.c.l.b16 %v231
    %v1000 = vunpack.c.h.b16 %v231
    %v1001 = vunpack.c.l.b16 %v232
    %v1002 = vunpack.c.h.b16 %v232
    %v1003 = vunpack.c.l.b16 %v233
    %v1004 = vunpack.c.h.b16 %v233
    %v1005 = vunpack.c.l.b16 %v234
    %v1006 = vunpack.c.h.b16 %v234
    %v1007 = vunpack.c.l.b16 %v235
    %v1008 = vunpack.c.h.b16 %v235
    %v1009 = vunpack.c.l.b16 %v236
    %v1010 = vunpack.c.h.b16 %v236
    %v1011 = vunpack.c.l.b16 %v237
    %v1012 = vunpack.c.h.b16 %v237
    %v1013 = vunpack.c.l.b16 %v238
    %v1014 = vunpack.c.h.b16 %v238
    %v1015 = vunpack.c.l.b16 %v239
    %v1016 = vunpack.c.h.b16 %v239
    %v1017 = vunpack.c.l.b16 %v240
    %v1018 = vunpack.c.h.b16 %v240
    %v1019 = vunpack.c.l.b16 %v241
    %v1020 = vunpack.c.h.b16 %v241
    %v1021 = vunpack.c.l.b16 %v242
    %v1022 = vunpack.c.h.b16 %v242
    %v1023 = vunpack.c.l.b16 %v243
    %v1024 = vunpack.c.h.b16 %v243
    %v1025 = vunpack.c.l.b16 %v244
    %v1026 = vunpack.c.h.b16 %v244
    %v1027 = vunpack.c.l.b16 %v245
    %v1028 = vunpack.c.h.b16 %v245
    %v1029 = vunpack.c.l.b16 %v246
    %v1030 = vunpack.c.h.b16 %v246
    %v1031 = vunpack.c.l.b16 %v247
    %v1032 = vunpack.c.h.b16 %v247
    %v1033 = vunpack.c.l.b16 %v248
    %v1034 = vunpack.c.h.b16 %v248
    %v1035 = vunpack.c.l.b16 %v249
    %v1036 = vunpack.c.h.b16 %v249
    %v1037 = vunpack.c.l.b16 %v250
    %v1038 = vunpack.c.h.b16 %v250
    %v1039 = vunpack.c.l.b16 %v251
    %v1040 = vunpack.c.h.b16 %v251
    %v1041 = vunpack.c.l.b16 %v252
    %v1042 = vunpack.c.h.b16 %v252
    %v1043 = vunpack.c.l.b16 %v253
    %v1044 = vunpack.c.h.b16 %v253
    %v1045 = vunpack.c.l.b16 %v254
    %v1046 = vunpack.c.h.b16 %v254
    %v1047 = vunpack.c.l.b16 %v255
    %v1048 = vunpack.c.h.b16 %v255
    %v1049 = vunpack.c.l.b16 %v256
    %v1050 = vunpack.c.h.b16 %v256
    %v1051 = vunpack.c.l.b16 %v257
    %v1052 = vunpack.c.h.b16 %v257
    %v1053 = vunpack.c.l.b16 %v258
    %v1054 = vunpack.c.h.b16 %v258
    %v1055 = vunpack.c.l.b16 %v259
    %v1056 = vunpack.c.h.b16 %v259
    %v1057 = vunpack.c.l.b16 %v260
    %v1058 = vunpack.c.h.b16 %v260
    %v1059 = vunpack.c.l.b16 %v261
    %v1060 = vunpack.c.h.b16 %v261
    %v1061 = vunpack.c.l.b16 %v262
    %v1062 = vunpack.c.h.b16 %v262
    %v1063 = vunpack.c.l.b16 %v263
    %v1064 = vunpack.c.h.b16 %v263
    %v1065 = vunpack.c.l.b16 %v264
    %v1066 = vunpack.c.h.b16 %v264
    %v1067 = vunpack.c.l.b16 %v265
    %v1068 = vunpack.c.h.b16 %v265
    %v1069 = vunpack.c.l.b16 %v266
    %v1070 = vunpack.c.h.b16 %v266
    %v1071 = vunpack.c.l.b16 %v267
    %v1072 = vunpack.c.h.b16 %v267
    %v1073 = vunpack.c.l.b16 %v268
    %v1074 = vunpack.c.h.b16 %v268
    %v1075 = vunpack.c.l.b16 %v269
    %v1076 = vunpack.c.h.b16 %v269
    %v1077 = vunpack.c.l.b16 %v270
    %v1078 = vunpack.c.h.b16 %v270
    %v1079 = vunpack.c.l.b16 %v271
    %v1080 = vunpack.c.h.b16 %v271
    %v1081 = vunpack.c.l.b16 %v272
    %v1082 = vunpack.c.h.b16 %v272
    %v1083 = vunpack.c.l.b16 %v273
    %v1084 = vunpack.c.h.b16 %v273
    %v1085 = vunpack.c.l.b16 %v274
    %v1086 = vunpack.c.h.b16 %v274
    %v1087 = vunpack.c.l.b16 %v275
    %v1088 = vunpack.c.h.b16 %v275
    %v1089 = vunpack.c.l.b16 %v276
    %v1090 = vunpack.c.h.b16 %v276
    %v1091 = vunpack.c.l.b16 %v277
    %v1092 = vunpack.c.h.b16 %v277
    %v1093 = vunpack.c.l.b16 %v278
    %v1094 = vunpack.c.h.b16 %v278
    %v1095 = vpack.c.b16 %v717, %v711
    %v1096 = vpack.c.b16 %v718, %v712
    %v1097 = vpack.c.b16 %v719, %v713
    %v1098 = vpack.c.b16 %v720, %v714
    %v1099 = vpack.c.b16 %v721, %v715
    %v1100 = vpack.c.b16 %v722, %v716
    %v1101 = vpack.c.b16 %v729, %v723
    %v1102 = vpack.c.b16 %v730, %v724
    %v1103 = vpack.c.b16 %v731, %v725
    %v1104 = vpack.c.b16 %v732, %v726
    %v1105 = vpack.c.b16 %v733, %v727
    %v1106 = vpack.c.b16 %v734, %v728
    %v1107 = vpack.c.b16 %v741, %v735
    %v1108 = vpack.c.b16 %v742, %v736
    %v1109 = vpack.c.b16 %v743, %v737
    %v1110 = vpack.c.b16 %v744, %v738
    %v1111 = vpack.c.b16 %v745, %v739
    %v1112 = vpack.c.b16 %v746, %v740
    %v1113 = vpack.c.b16 %v753, %v747
    %v1114 = vpack.c.b16 %v754, %v748
    %v1115 = vpack.c.b16 %v755, %v749
    %v1116 = vpack.c.b16 %v756, %v750
    %v1117 = vpack.c.b16 %v757, %v751
    %v1118 = vpack.c.b16 %v758, %v752
    %v1119 = vpack.c.b16 %v765, %v759
    %v1120 = vpack.c.b16 %v766, %v760
    %v1121 = vpack.c.b16 %v767, %v761
    %v1122 = vpack.c.b16 %v768, %v762
    %v1123 = vpack.c.b16 %v769, %v763
    %v1124 = vpack.c.b16 %v770, %v764
    %v1125 = vpack.c.b16 %v777, %v771
    %v1126 = vpack.c.b16 %v778, %v772
    %v1127 = vpack.c.b16 %v779, %v773
    %v1128 = vpack.c.b16 %v780, %v774
    %v1129 = vpack.c.b16 %v781, %v775
    %v1130 = vpack.c.b16 %v782, %v776
    %v1131 = vpack.c.b16 %v789, %v783
    %v1132 = vpack.c.b16 %v790, %v784
    %v1133 = vpack.c.b16 %v791, %v785
    %v1134 = vpack.c.b16 %v792, %v786
    %v1135 = vpack.c.b16 %v793, %v787
    %v1136 = vpack.c.b16 %v794, %v788
    %v1137 = vpack.c.b16 %v801, %v795
    %v1138 = vpack.c.b16 %v802, %v796
    %v1139 = vpack.c.b16 %v803, %v797
    %v1140 = vpack.c.b16 %v804, %v798
    %v1141 = vpack.c.b16 %v805, %v799
    %v1142 = vpack.c.b16 %v806, %v800
    %v1143 = vpack.c.b16 %v813, %v807
    %v1144 = vpack.c.b16 %v814, %v808
    %v1145 = vpack.c.b16 %v815, %v809
    %v1146 = vpack.c.b16 %v816, %v810
    %v1147 = vpack.c.b16 %v817, %v811
    %v1148 = vpack.c.b16 %v818, %v812
    %v1149 = vpack.c.b16 %v825, %v819
    %v1150 = vpack.c.b16 %v826, %v820
    %v1151 = vpack.c.b16 %v827, %v821
    %v1152 = vpack.c.b16 %v828, %v822
    %v1153 = vpack.c.b16 %v829, %v823
    %v1154 = vpack.c.b16 %v830, %v824
    %v1155 = vpack.c.b16 %v837, %v831
    %v1156 = vpack.c.b16 %v838, %v832
    %v1157 = vpack.c.b16 %v839, %v833
    %v1158 = vpack.c.b16 %v840, %v834
    %v1159 = vpack.c.b16 %v841, %v835
    %v1160 = vpack.c.b16 %v842, %v836
    %v1161 = vpack.c.b16 %v849, %v843
    %v1162 = vpack.c.b16 %v850, %v844
    %v1163 = vpack.c.b16 %v851, %v845
    %v1164 = vpack.c.b16 %v852, %v846
    %v1165 = vpack.c.b16 %v853, %v847
    %v1166 = vpack.c.b16 %v854, %v848
    %v1167 = vpack.c.b16 %v861, %v855
    %v1168 = vpack.c.b16 %v862, %v856
    %v1169 = vpack.c.b16 %v863, %v857
    %v1170 = vpack.c.b16 %v864, %v858
    %v1171 = vpack.c.b16 %v865, %v859
    %v1172 = vpack.c.b16 %v866, %v860
    %v1173 = vpack.c.b16 %v873, %v867
    %v1174 = vpack.c.b16 %v874, %v868
    %v1175 = vpack.c.b16 %v875, %v869
    %v1176 = vpack.c.b16 %v876, %v870
    %v1177 = vpack.c.b16 %v877, %v871
    %v1178 = vpack.c.b16 %v878, %v872
    %v1179 = vpack.c.b16 %v885, %v879
    %v1180 = vpack.c.b16 %v886, %v880
    %v1181 = vpack.c.b16 %v887, %v881
    %v1182 = vpack.c.b16 %v888, %v882
    %v1183 = vpack.c.b16 %v889, %v883
    %v1184 = vpack.c.b16 %v890, %v884
    %v1185 = vpack.c.b16 %v897, %v891
    %v1186 = vpack.c.b16 %v898, %v892
    %v1187 = vpack.c.b16 %v899, %v893
    %v1188 = vpack.c.b16 %v900, %v894
    %v1189 = vpack.c.b16 %v901, %v895
    %v1190 = vpack.c.b16 %v902, %v896
    %v1191 = vpack.c.b16 %v909, %v903
    %v1192 = vpack.c.b16 %v910, %v904
    %v1193 = vpack.c.b16 %v911, %v905
    %v1194 = vpack.c.b16 %v912, %v906
    %v1195 = vpack.c.b16 %v913, %v907
    %v1196 = vpack.c.b16 %v914, %v908
    %v1197 = vpack.c.b16 %v921, %v915
    %v1198 = vpack.c.b16 %v922, %v916
    %v1199 = vpack.c.b16 %v923, %v917
    %v1200 = vpack.c.b16 %v924, %v918
    %v1201 = vpack.c.b16 %v925, %v919
    %v1202 = vpack.c.b16 %v926, %v920
    %v1203 = vpack.c.b16 %v933, %v927
    %v1204 = vpack.c.b16 %v934, %v928
    %v1205 = vpack.c.b16 %v935, %v929
    %v1206 = vpack.c.b16 %v936, %v930
    %v1207 = vpack.c.b16 %v937, %v931
    %v1208 = vpack.c.b16 %v938, %v932
    %v1209 = vpack.c.b16 %v945, %v939
    %v1210 = vpack.c.b16 %v946, %v940
    %v1211 = vpack.c.b16 %v947, %v941
    %v1212 = vpack.c.b16 %v948, %v942
    %v1213 = vpack.c.b16 %v949, %v943
    %v1214 = vpack.c.b16 %v950, %v944
    %v1215 = vpack.c.b16 %v957, %v951
    %v1216 = vpack.c.b16 %v958, %v952
    %v1217 = vpack.c.b16 %v959, %v953
    %v1218 = vpack.c.b16 %v960, %v954
    %v1219 = vpack.c.b16 %v961, %v955
    %v1220 = vpack.c.b16 %v962, %v956
    %v1221 = vpack.c.b16 %v969, %v963
    %v1222 = vpack.c.b16 %v970, %v964
    %v1223 = vpack.c.b16 %v971, %v965
    %v1224 = vpack.c.b16 %v972, %v966
    %v1225 = vpack.c.b16 %v973, %v967
    %v1226 = vpack.c.b16 %v974, %v968
    %v1227 = vpack.c.b16 %v981, %v975
    %v1228 = vpack.c.b16 %v982, %v976
    %v1229 = vpack.c.b16 %v983, %v977
    %v1230 = vpack.c.b16 %v984, %v978
    %v1231 = vpack.c.b16 %v985, %v979
    %v1232 = vpack.c.b16 %v986, %v980
    %v1233 = vpack.c.b16 %v993, %v987
    %v1234 = vpack.c.b16 %v994, %v988
    %v1235 = vpack.c.b16 %v995, %v989
    %v1236 = vpack.c.b16 %v996, %v990
    %v1237 = vpack.c.b16 %v997, %v991
    %v1238 = vpack.c.b16 %v998, %v992
    %v1239 = vpack.c.b16 %v1005, %v999
    %v1240 = vpack.c.b16 %v1006, %v1000
    %v1241 = vpack.c.b16 %v1007, %v1001
    %v1242 = vpack.c.b16 %v1008, %v1002
    %v1243 = vpack.c.b16 %v1009, %v1003
    %v1244 = vpack.c.b16 %v1010, %v1004
    %v1245 = vpack.c.b16 %v1017, %v1011
    %v1246 = vpack.c.b16 %v1018, %v1012
    %v1247 = vpack.c.b16 %v1019, %v1013
    %v1248 = vpack.c.b16 %v1020, %v1014
    %v1249 = vpack.c.b16 %v1021, %v1015
    %v1250 = vpack.c.b16 %v1022, %v1016
    %v1251 = vpack.c.b16 %v1029, %v1023
    %v1252 = vpack.c.b16 %v1030, %v1024
    %v1253 = vpack.c.b16 %v1031, %v1025
    %v1254 = vpack.c.b16 %v1032, %v1026
    %v1255 = vpack.c.b16 %v1033, %v1027
    %v1256 = vpack.c.b16 %v1034, %v1028
    %v1257 = vpack.c.b16 %v1041, %v1035
    %v1258 = vpack.c.b16 %v1042, %v1036
    %v1259 = vpack.c.b16 %v1043, %v1037
    %v1260 = vpack.c.b16 %v1044, %v1038
    %v1261 = vpack.c.b16 %v1045, %v1039
    %v1262 = vpack.c.b16 %v1046, %v1040
    %v1263 = vpack.c.b16 %v1053, %v1047
    %v1264 = vpack.c.b16 %v1054, %v1048
    %v1265 = vpack.c.b16 %v1055, %v1049
    %v1266 = vpack.c.b16 %v1056, %v1050
    %v1267 = vpack.c.b16 %v1057, %v1051
    %v1268 = vpack.c.b16 %v1058, %v1052
    %v1269 = vpack.c.b16 %v1065, %v1059
    %v1270 = vpack.c.b16 %v1066, %v1060
    %v1271 = vpack.c.b16 %v1067, %v1061
    %v1272 = vpack.c.b16 %v1068, %v1062
    %v1273 = vpack.c.b16 %v1069, %v1063
    %v1274 = vpack.c.b16 %v1070, %v1064
    %v1275 = vpack.c.b16 %v1077, %v1071
    %v1276 = vpack.c.b16 %v1078, %v1072
    %v1277 = vpack.c.b16 %v1079, %v1073
    %v1278 = vpack.c.b16 %v1080, %v1074
    %v1279 = vpack.c.b16 %v1081, %v1075
    %v1280 = vpack.c.b16 %v1082, %v1076
    %v1281 = vpack.c.b16 %v1089, %v1083
    %v1282 = vpack.c.b16 %v1090, %v1084
    %v1283 = vpack.c.b16 %v1091, %v1085
    %v1284 = vpack.c.b16 %v1092, %v1086
    %v1285 = vpack.c.b16 %v1093, %v1087
    %v1286 = vpack.c.b16 %v1094, %v1088
    %1479 = vmatprep.subr.bf16.mxu0 %v1138
    %1480 = vmatpush1.bf16.msra.mxu0 %v1137
    %1481 = vmatprep.subr.bf16.mxu0 %v1132
    %1482 = vmatpush1.bf16.msra.mxu0 %v1131
    %1483 = vmatprep.subr.bf16.mxu0 %v1126
    %1484 = vmatpush1.bf16.msra.mxu0 %v1125
    %1485 = vmatprep.subr.bf16.mxu0 %v1120
    %1486 = vmatpush1.bf16.msra.mxu0 %v1119
    %1487 = vmatprep.subr.bf16.mxu0 %v1114
    %1488 = vmatpush1.bf16.msra.mxu0 %v1113
    %1489 = vmatprep.subr.bf16.mxu0 %v1108
    %1490 = vmatpush1.bf16.msra.mxu0 %v1107
    %1491 = vmatprep.subr.bf16.mxu0 %v1102
    %1492 = vmatpush1.bf16.msra.mxu0 %v1101
    %1493 = vmatprep.subr.bf16.mxu0 %v1096
    %1494 = vmatpush1.bf16.msra.mxu0 %v1095
    %1495 = vmatprep.subr.bf16.mxu0 %v1186
    %1496 = vmatpush2.bf16.msra.mxu0 %v1185
    %1497 = vmatprep.subr.bf16.mxu0 %v1180
    %1498 = vmatpush2.bf16.msra.mxu0 %v1179
    %1499 = vmatprep.subr.bf16.mxu0 %v1174
    %1500 = vmatpush2.bf16.msra.mxu0 %v1173
    %1501 = vmatprep.subr.bf16.mxu0 %v1168
    %1502 = vmatpush2.bf16.msra.mxu0 %v1167
    %1503 = vmatprep.subr.bf16.mxu0 %v1162
    %1504 = vmatpush2.bf16.msra.mxu0 %v1161
    %1505 = vmatprep.subr.bf16.mxu0 %v1156
    %1506 = vmatpush2.bf16.msra.mxu0 %v1155
    %1507 = vmatprep.subr.bf16.mxu0 %v1150
    %1508 = vmatpush2.bf16.msra.mxu0 %v1149
    %1509 = vmatprep.subr.bf16.mxu0 %v1144
    %1510 = vmatpush2.bf16.msra.mxu0 %v1143
    %1511 = vmatprep.mubr.bf16.mxu0 %v424
    %1512 = vmatmul.mubr.bf16.gmra.mxu0 %v423
    %v1513 = vpop.f32.mrf.mxu0
    %v1514 = vadd.f32 0.0, %v1513
    %v1515 = vpop.f32.mrf.mxu0
    %v1516 = vadd.f32 0.0, %v1515
    %v1517 = vpop.f32.mrf.mxu0
    %v1518 = vadd.f32 0.0, %v1517
    %v1519 = vpop.f32.mrf.mxu0
    %v1520 = vadd.f32 0.0, %v1519
    %1521 = vmatprep.mubr.bf16.mxu0 %v428
    %1522 = vmatmul.mubr.bf16.gmra.mxu0 %v427
    %v1523 = vpop.f32.mrf.mxu0
    %v1524 = vadd.f32 0.0, %v1523
    %v1525 = vpop.f32.mrf.mxu0
    %v1526 = vadd.f32 0.0, %v1525
    %v1527 = vpop.f32.mrf.mxu0
    %v1528 = vadd.f32 0.0, %v1527
    %v1529 = vpop.f32.mrf.mxu0
    %v1530 = vadd.f32 0.0, %v1529
    %1531 = vmatprep.mubr.bf16.mxu0 %v432
    %1532 = vmatmul.mubr.bf16.gmra.mxu0 %v431
    %v1533 = vpop.f32.mrf.mxu0
    %v1534 = vadd.f32 0.0, %v1533
    %v1535 = vpop.f32.mrf.mxu0
    %v1536 = vadd.f32 0.0, %v1535
    %v1537 = vpop.f32.mrf.mxu0
    %v1538 = vadd.f32 0.0, %v1537
    %v1539 = vpop.f32.mrf.mxu0
    %v1540 = vadd.f32 0.0, %v1539
    %1541 = vmatprep.mubr.bf16.mxu0 %v436
    %1542 = vmatmul.mubr.bf16.gmra.mxu0 %v435
    %v1543 = vpop.f32.mrf.mxu0
    %v1544 = vadd.f32 0.0, %v1543
    %v1545 = vpop.f32.mrf.mxu0
    %v1546 = vadd.f32 0.0, %v1545
    %v1547 = vpop.f32.mrf.mxu0
    %v1548 = vadd.f32 0.0, %v1547
    %v1549 = vpop.f32.mrf.mxu0
    %v1550 = vadd.f32 0.0, %v1549
    %1551 = vmatprep.mubr.bf16.mxu0 %v440
    %1552 = vmatmul.mubr.bf16.gmra.mxu0 %v439
    %v1553 = vpop.f32.mrf.mxu0
    %v1554 = vadd.f32 0.0, %v1553
    %v1555 = vpop.f32.mrf.mxu0
    %v1556 = vadd.f32 0.0, %v1555
    %v1557 = vpop.f32.mrf.mxu0
    %v1558 = vadd.f32 0.0, %v1557
    %v1559 = vpop.f32.mrf.mxu0
    %v1560 = vadd.f32 0.0, %v1559
    %1561 = vmatprep.mubr.bf16.mxu0 %v444
    %1562 = vmatmul.mubr.bf16.gmra.mxu0 %v443
    %v1563 = vpop.f32.mrf.mxu0
    %v1564 = vadd.f32 0.0, %v1563
    %v1565 = vpop.f32.mrf.mxu0
    %v1566 = vadd.f32 0.0, %v1565
    %v1567 = vpop.f32.mrf.mxu0
    %v1568 = vadd.f32 0.0, %v1567
    %v1569 = vpop.f32.mrf.mxu0
    %v1570 = vadd.f32 0.0, %v1569
    %1571 = vmatprep.mubr.bf16.mxu0 %v448
    %1572 = vmatmul.mubr.bf16.gmra.mxu0 %v447
    %v1573 = vpop.f32.mrf.mxu0
    %v1574 = vadd.f32 0.0, %v1573
    %v1575 = vpop.f32.mrf.mxu0
    %v1576 = vadd.f32 0.0, %v1575
    %v1577 = vpop.f32.mrf.mxu0
    %v1578 = vadd.f32 0.0, %v1577
    %v1579 = vpop.f32.mrf.mxu0
    %v1580 = vadd.f32 0.0, %v1579
    %1581 = vmatprep.mubr.bf16.mxu0 %v452
    %1582 = vmatmul.mubr.bf16.gmra.mxu0 %v451
    %v1583 = vpop.f32.mrf.mxu0
    %v1584 = vadd.f32 0.0, %v1583
    %v1585 = vpop.f32.mrf.mxu0
    %v1586 = vadd.f32 0.0, %v1585
    %v1587 = vpop.f32.mrf.mxu0
    %v1588 = vadd.f32 0.0, %v1587
    %v1589 = vpop.f32.mrf.mxu0
    %v1590 = vadd.f32 0.0, %v1589
    %1591 = vmatprep.mubr.bf16.mxu0 %v456
    %1592 = vmatmul.mubr.bf16.gmra.mxu0 %v455
    %v1593 = vpop.f32.mrf.mxu0
    %v1594 = vadd.f32 0.0, %v1593
    %v1595 = vpop.f32.mrf.mxu0
    %v1596 = vadd.f32 0.0, %v1595
    %v1597 = vpop.f32.mrf.mxu0
    %v1598 = vadd.f32 0.0, %v1597
    %v1599 = vpop.f32.mrf.mxu0
    %v1600 = vadd.f32 0.0, %v1599
    %1601 = vmatprep.mubr.bf16.mxu0 %v460
    %1602 = vmatmul.mubr.bf16.gmra.mxu0 %v459
    %v1603 = vpop.f32.mrf.mxu0
    %v1604 = vadd.f32 0.0, %v1603
    %v1605 = vpop.f32.mrf.mxu0
    %v1606 = vadd.f32 0.0, %v1605
    %v1607 = vpop.f32.mrf.mxu0
    %v1608 = vadd.f32 0.0, %v1607
    %v1609 = vpop.f32.mrf.mxu0
    %v1610 = vadd.f32 0.0, %v1609
    %1611 = vmatprep.mubr.bf16.mxu0 %v464
    %1612 = vmatmul.mubr.bf16.gmra.mxu0 %v463
    %v1613 = vpop.f32.mrf.mxu0
    %v1614 = vadd.f32 0.0, %v1613
    %v1615 = vpop.f32.mrf.mxu0
    %v1616 = vadd.f32 0.0, %v1615
    %v1617 = vpop.f32.mrf.mxu0
    %v1618 = vadd.f32 0.0, %v1617
    %v1619 = vpop.f32.mrf.mxu0
    %v1620 = vadd.f32 0.0, %v1619
    %1621 = vmatprep.mubr.bf16.mxu0 %v468
    %1622 = vmatmul.mubr.bf16.gmra.mxu0 %v467
    %v1623 = vpop.f32.mrf.mxu0
    %v1624 = vadd.f32 0.0, %v1623
    %v1625 = vpop.f32.mrf.mxu0
    %v1626 = vadd.f32 0.0, %v1625
    %v1627 = vpop.f32.mrf.mxu0
    %v1628 = vadd.f32 0.0, %v1627
    %v1629 = vpop.f32.mrf.mxu0
    %v1630 = vadd.f32 0.0, %v1629
    %1631 = vdwg.mxu0
    %1632 = vmatprep.subr.bf16.mxu0 %v1234
    %1633 = vmatpush1.bf16.msra.mxu0 %v1233
    %1634 = vmatprep.subr.bf16.mxu0 %v1228
    %1635 = vmatpush1.bf16.msra.mxu0 %v1227
    %1636 = vmatprep.subr.bf16.mxu0 %v1222
    %1637 = vmatpush1.bf16.msra.mxu0 %v1221
    %1638 = vmatprep.subr.bf16.mxu0 %v1216
    %1639 = vmatpush1.bf16.msra.mxu0 %v1215
    %1640 = vmatprep.subr.bf16.mxu0 %v1210
    %1641 = vmatpush1.bf16.msra.mxu0 %v1209
    %1642 = vmatprep.subr.bf16.mxu0 %v1204
    %1643 = vmatpush1.bf16.msra.mxu0 %v1203
    %1644 = vmatprep.subr.bf16.mxu0 %v1198
    %1645 = vmatpush1.bf16.msra.mxu0 %v1197
    %1646 = vmatprep.subr.bf16.mxu0 %v1192
    %1647 = vmatpush1.bf16.msra.mxu0 %v1191
    %1648 = vmatprep.subr.bf16.mxu0 %v1282
    %1649 = vmatpush2.bf16.msra.mxu0 %v1281
    %1650 = vmatprep.subr.bf16.mxu0 %v1276
    %1651 = vmatpush2.bf16.msra.mxu0 %v1275
    %1652 = vmatprep.subr.bf16.mxu0 %v1270
    %1653 = vmatpush2.bf16.msra.mxu0 %v1269
    %1654 = vmatprep.subr.bf16.mxu0 %v1264
    %1655 = vmatpush2.bf16.msra.mxu0 %v1263
    %1656 = vmatprep.subr.bf16.mxu0 %v1258
    %1657 = vmatpush2.bf16.msra.mxu0 %v1257
    %1658 = vmatprep.subr.bf16.mxu0 %v1252
    %1659 = vmatpush2.bf16.msra.mxu0 %v1251
    %1660 = vmatprep.subr.bf16.mxu0 %v1246
    %1661 = vmatpush2.bf16.msra.mxu0 %v1245
    %1662 = vmatprep.subr.bf16.mxu0 %v1240
    %1663 = vmatpush2.bf16.msra.mxu0 %v1239
    %1664 = vmatprep.mubr.bf16.mxu0 %v426
    %1665 = vmatmul.mubr.bf16.gmra.mxu0 %v425
    %v1666 = vpop.f32.mrf.mxu0
    %v1667 = vadd.f32 %v1514, %v1666
    %v1668 = vpop.f32.mrf.mxu0
    %v1669 = vadd.f32 %v1516, %v1668
    %v1670 = vpop.f32.mrf.mxu0
    %v1671 = vadd.f32 %v1518, %v1670
    %v1672 = vpop.f32.mrf.mxu0
    %v1673 = vadd.f32 %v1520, %v1672
    %1674 = vmatprep.mubr.bf16.mxu0 %v430
    %1675 = vmatmul.mubr.bf16.gmra.mxu0 %v429
    %v1676 = vpop.f32.mrf.mxu0
    %v1677 = vadd.f32 %v1524, %v1676
    %v1678 = vpop.f32.mrf.mxu0
    %v1679 = vadd.f32 %v1526, %v1678
    %v1680 = vpop.f32.mrf.mxu0
    %v1681 = vadd.f32 %v1528, %v1680
    %v1682 = vpop.f32.mrf.mxu0
    %v1683 = vadd.f32 %v1530, %v1682
    %1684 = vmatprep.mubr.bf16.mxu0 %v434
    %1685 = vmatmul.mubr.bf16.gmra.mxu0 %v433
    %v1686 = vpop.f32.mrf.mxu0
    %v1687 = vadd.f32 %v1534, %v1686
    %v1688 = vpop.f32.mrf.mxu0
    %v1689 = vadd.f32 %v1536, %v1688
    %v1690 = vpop.f32.mrf.mxu0
    %v1691 = vadd.f32 %v1538, %v1690
    %v1692 = vpop.f32.mrf.mxu0
    %v1693 = vadd.f32 %v1540, %v1692
    %1694 = vmatprep.mubr.bf16.mxu0 %v438
    %1695 = vmatmul.mubr.bf16.gmra.mxu0 %v437
    %v1696 = vpop.f32.mrf.mxu0
    %v1697 = vadd.f32 %v1544, %v1696
    %v1698 = vpop.f32.mrf.mxu0
    %v1699 = vadd.f32 %v1546, %v1698
    %v1700 = vpop.f32.mrf.mxu0
    %v1701 = vadd.f32 %v1548, %v1700
    %v1702 = vpop.f32.mrf.mxu0
    %v1703 = vadd.f32 %v1550, %v1702
    %1704 = vmatprep.mubr.bf16.mxu0 %v442
    %1705 = vmatmul.mubr.bf16.gmra.mxu0 %v441
    %v1706 = vpop.f32.mrf.mxu0
    %v1707 = vadd.f32 %v1554, %v1706
    %v1708 = vpop.f32.mrf.mxu0
    %v1709 = vadd.f32 %v1556, %v1708
    %v1710 = vpop.f32.mrf.mxu0
    %v1711 = vadd.f32 %v1558, %v1710
    %v1712 = vpop.f32.mrf.mxu0
    %v1713 = vadd.f32 %v1560, %v1712
    %1714 = vmatprep.mubr.bf16.mxu0 %v446
    %1715 = vmatmul.mubr.bf16.gmra.mxu0 %v445
    %v1716 = vpop.f32.mrf.mxu0
    %v1717 = vadd.f32 %v1564, %v1716
    %v1718 = vpop.f32.mrf.mxu0
    %v1719 = vadd.f32 %v1566, %v1718
    %v1720 = vpop.f32.mrf.mxu0
    %v1721 = vadd.f32 %v1568, %v1720
    %v1722 = vpop.f32.mrf.mxu0
    %v1723 = vadd.f32 %v1570, %v1722
    %1724 = vmatprep.mubr.bf16.mxu0 %v450
    %1725 = vmatmul.mubr.bf16.gmra.mxu0 %v449
    %v1726 = vpop.f32.mrf.mxu0
    %v1727 = vadd.f32 %v1574, %v1726
    %v1728 = vpop.f32.mrf.mxu0
    %v1729 = vadd.f32 %v1576, %v1728
    %v1730 = vpop.f32.mrf.mxu0
    %v1731 = vadd.f32 %v1578, %v1730
    %v1732 = vpop.f32.mrf.mxu0
    %v1733 = vadd.f32 %v1580, %v1732
    %1734 = vmatprep.mubr.bf16.mxu0 %v454
    %1735 = vmatmul.mubr.bf16.gmra.mxu0 %v453
    %v1736 = vpop.f32.mrf.mxu0
    %v1737 = vadd.f32 %v1584, %v1736
    %v1738 = vpop.f32.mrf.mxu0
    %v1739 = vadd.f32 %v1586, %v1738
    %v1740 = vpop.f32.mrf.mxu0
    %v1741 = vadd.f32 %v1588, %v1740
    %v1742 = vpop.f32.mrf.mxu0
    %v1743 = vadd.f32 %v1590, %v1742
    %1744 = vmatprep.mubr.bf16.mxu0 %v458
    %1745 = vmatmul.mubr.bf16.gmra.mxu0 %v457
    %v1746 = vpop.f32.mrf.mxu0
    %v1747 = vadd.f32 %v1594, %v1746
    %v1748 = vpop.f32.mrf.mxu0
    %v1749 = vadd.f32 %v1596, %v1748
    %v1750 = vpop.f32.mrf.mxu0
    %v1751 = vadd.f32 %v1598, %v1750
    %v1752 = vpop.f32.mrf.mxu0
    %v1753 = vadd.f32 %v1600, %v1752
    %1754 = vmatprep.mubr.bf16.mxu0 %v462
    %1755 = vmatmul.mubr.bf16.gmra.mxu0 %v461
    %v1756 = vpop.f32.mrf.mxu0
    %v1757 = vadd.f32 %v1604, %v1756
    %v1758 = vpop.f32.mrf.mxu0
    %v1759 = vadd.f32 %v1606, %v1758
    %v1760 = vpop.f32.mrf.mxu0
    %v1761 = vadd.f32 %v1608, %v1760
    %v1762 = vpop.f32.mrf.mxu0
    %v1763 = vadd.f32 %v1610, %v1762
    %1764 = vmatprep.mubr.bf16.mxu0 %v466
    %1765 = vmatmul.mubr.bf16.gmra.mxu0 %v465
    %v1766 = vpop.f32.mrf.mxu0
    %v1767 = vadd.f32 %v1614, %v1766
    %v1768 = vpop.f32.mrf.mxu0
    %v1769 = vadd.f32 %v1616, %v1768
    %v1770 = vpop.f32.mrf.mxu0
    %v1771 = vadd.f32 %v1618, %v1770
    %v1772 = vpop.f32.mrf.mxu0
    %v1773 = vadd.f32 %v1620, %v1772
    %1774 = vmatprep.mubr.bf16.mxu0 %v470
    %1775 = vmatmul.mubr.bf16.gmra.mxu0 %v469
    %v1776 = vpop.f32.mrf.mxu0
    %v1777 = vadd.f32 %v1624, %v1776
    %v1778 = vpop.f32.mrf.mxu0
    %v1779 = vadd.f32 %v1626, %v1778
    %v1780 = vpop.f32.mrf.mxu0
    %v1781 = vadd.f32 %v1628, %v1780
    %v1782 = vpop.f32.mrf.mxu0
    %v1783 = vadd.f32 %v1630, %v1782
    %1784 = vdwg.mxu0
    %1785 = vmatprep.subr.bf16.mxu0 %v1140
    %1786 = vmatpush1.bf16.msra.mxu0 %v1139
    %1787 = vmatprep.subr.bf16.mxu0 %v1134
    %1788 = vmatpush1.bf16.msra.mxu0 %v1133
    %1789 = vmatprep.subr.bf16.mxu0 %v1128
    %1790 = vmatpush1.bf16.msra.mxu0 %v1127
    %1791 = vmatprep.subr.bf16.mxu0 %v1122
    %1792 = vmatpush1.bf16.msra.mxu0 %v1121
    %1793 = vmatprep.subr.bf16.mxu0 %v1116
    %1794 = vmatpush1.bf16.msra.mxu0 %v1115
    %1795 = vmatprep.subr.bf16.mxu0 %v1110
    %1796 = vmatpush1.bf16.msra.mxu0 %v1109
    %1797 = vmatprep.subr.bf16.mxu0 %v1104
    %1798 = vmatpush1.bf16.msra.mxu0 %v1103
    %1799 = vmatprep.subr.bf16.mxu0 %v1098
    %1800 = vmatpush1.bf16.msra.mxu0 %v1097
    %1801 = vmatprep.subr.bf16.mxu0 %v1188
    %1802 = vmatpush2.bf16.msra.mxu0 %v1187
    %1803 = vmatprep.subr.bf16.mxu0 %v1182
    %1804 = vmatpush2.bf16.msra.mxu0 %v1181
    %1805 = vmatprep.subr.bf16.mxu0 %v1176
    %1806 = vmatpush2.bf16.msra.mxu0 %v1175
    %1807 = vmatprep.subr.bf16.mxu0 %v1170
    %1808 = vmatpush2.bf16.msra.mxu0 %v1169
    %1809 = vmatprep.subr.bf16.mxu0 %v1164
    %1810 = vmatpush2.bf16.msra.mxu0 %v1163
    %1811 = vmatprep.subr.bf16.mxu0 %v1158
    %1812 = vmatpush2.bf16.msra.mxu0 %v1157
    %1813 = vmatprep.subr.bf16.mxu0 %v1152
    %1814 = vmatpush2.bf16.msra.mxu0 %v1151
    %1815 = vmatprep.subr.bf16.mxu0 %v1146
    %1816 = vmatpush2.bf16.msra.mxu0 %v1145
    %1817 = vmatprep.mubr.bf16.mxu0 %v424
    %1818 = vmatmul.mubr.bf16.gmra.mxu0 %v423
    %v1819 = vpop.f32.mrf.mxu0
    %v1820 = vadd.f32 0.0, %v1819
    %v1821 = vpop.f32.mrf.mxu0
    %v1822 = vadd.f32 0.0, %v1821
    %v1823 = vpop.f32.mrf.mxu0
    %v1824 = vadd.f32 0.0, %v1823
    %v1825 = vpop.f32.mrf.mxu0
    %v1826 = vadd.f32 0.0, %v1825
    %1827 = vmatprep.mubr.bf16.mxu0 %v428
    %1828 = vmatmul.mubr.bf16.gmra.mxu0 %v427
    %v1829 = vpop.f32.mrf.mxu0
    %v1830 = vadd.f32 0.0, %v1829
    %v1831 = vpop.f32.mrf.mxu0
    %v1832 = vadd.f32 0.0, %v1831
    %v1833 = vpop.f32.mrf.mxu0
    %v1834 = vadd.f32 0.0, %v1833
    %v1835 = vpop.f32.mrf.mxu0
    %v1836 = vadd.f32 0.0, %v1835
    %1837 = vmatprep.mubr.bf16.mxu0 %v432
    %1838 = vmatmul.mubr.bf16.gmra.mxu0 %v431
    %v1839 = vpop.f32.mrf.mxu0
    %v1840 = vadd.f32 0.0, %v1839
    %v1841 = vpop.f32.mrf.mxu0
    %v1842 = vadd.f32 0.0, %v1841
    %v1843 = vpop.f32.mrf.mxu0
    %v1844 = vadd.f32 0.0, %v1843
    %v1845 = vpop.f32.mrf.mxu0
    %v1846 = vadd.f32 0.0, %v1845
    %1847 = vmatprep.mubr.bf16.mxu0 %v436
    %1848 = vmatmul.mubr.bf16.gmra.mxu0 %v435
    %v1849 = vpop.f32.mrf.mxu0
    %v1850 = vadd.f32 0.0, %v1849
    %v1851 = vpop.f32.mrf.mxu0
    %v1852 = vadd.f32 0.0, %v1851
    %v1853 = vpop.f32.mrf.mxu0
    %v1854 = vadd.f32 0.0, %v1853
    %v1855 = vpop.f32.mrf.mxu0
    %v1856 = vadd.f32 0.0, %v1855
    %1857 = vmatprep.mubr.bf16.mxu0 %v440
    %1858 = vmatmul.mubr.bf16.gmra.mxu0 %v439
    %v1859 = vpop.f32.mrf.mxu0
    %v1860 = vadd.f32 0.0, %v1859
    %v1861 = vpop.f32.mrf.mxu0
    %v1862 = vadd.f32 0.0, %v1861
    %v1863 = vpop.f32.mrf.mxu0
    %v1864 = vadd.f32 0.0, %v1863
    %v1865 = vpop.f32.mrf.mxu0
    %v1866 = vadd.f32 0.0, %v1865
    %1867 = vmatprep.mubr.bf16.mxu0 %v444
    %1868 = vmatmul.mubr.bf16.gmra.mxu0 %v443
    %v1869 = vpop.f32.mrf.mxu0
    %v1870 = vadd.f32 0.0, %v1869
    %v1871 = vpop.f32.mrf.mxu0
    %v1872 = vadd.f32 0.0, %v1871
    %v1873 = vpop.f32.mrf.mxu0
    %v1874 = vadd.f32 0.0, %v1873
    %v1875 = vpop.f32.mrf.mxu0
    %v1876 = vadd.f32 0.0, %v1875
    %1877 = vmatprep.mubr.bf16.mxu0 %v448
    %1878 = vmatmul.mubr.bf16.gmra.mxu0 %v447
    %v1879 = vpop.f32.mrf.mxu0
    %v1880 = vadd.f32 0.0, %v1879
    %v1881 = vpop.f32.mrf.mxu0
    %v1882 = vadd.f32 0.0, %v1881
    %v1883 = vpop.f32.mrf.mxu0
    %v1884 = vadd.f32 0.0, %v1883
    %v1885 = vpop.f32.mrf.mxu0
    %v1886 = vadd.f32 0.0, %v1885
    %1887 = vmatprep.mubr.bf16.mxu0 %v452
    %1888 = vmatmul.mubr.bf16.gmra.mxu0 %v451
    %v1889 = vpop.f32.mrf.mxu0
    %v1890 = vadd.f32 0.0, %v1889
    %v1891 = vpop.f32.mrf.mxu0
    %v1892 = vadd.f32 0.0, %v1891
    %v1893 = vpop.f32.mrf.mxu0
    %v1894 = vadd.f32 0.0, %v1893
    %v1895 = vpop.f32.mrf.mxu0
    %v1896 = vadd.f32 0.0, %v1895
    %1897 = vmatprep.mubr.bf16.mxu0 %v456
    %1898 = vmatmul.mubr.bf16.gmra.mxu0 %v455
    %v1899 = vpop.f32.mrf.mxu0
    %v1900 = vadd.f32 0.0, %v1899
    %v1901 = vpop.f32.mrf.mxu0
    %v1902 = vadd.f32 0.0, %v1901
    %v1903 = vpop.f32.mrf.mxu0
    %v1904 = vadd.f32 0.0, %v1903
    %v1905 = vpop.f32.mrf.mxu0
    %v1906 = vadd.f32 0.0, %v1905
    %1907 = vmatprep.mubr.bf16.mxu0 %v460
    %1908 = vmatmul.mubr.bf16.gmra.mxu0 %v459
    %v1909 = vpop.f32.mrf.mxu0
    %v1910 = vadd.f32 0.0, %v1909
    %v1911 = vpop.f32.mrf.mxu0
    %v1912 = vadd.f32 0.0, %v1911
    %v1913 = vpop.f32.mrf.mxu0
    %v1914 = vadd.f32 0.0, %v1913
    %v1915 = vpop.f32.mrf.mxu0
    %v1916 = vadd.f32 0.0, %v1915
    %1917 = vmatprep.mubr.bf16.mxu0 %v464
    %1918 = vmatmul.mubr.bf16.gmra.mxu0 %v463
    %v1919 = vpop.f32.mrf.mxu0
    %v1920 = vadd.f32 0.0, %v1919
    %v1921 = vpop.f32.mrf.mxu0
    %v1922 = vadd.f32 0.0, %v1921
    %v1923 = vpop.f32.mrf.mxu0
    %v1924 = vadd.f32 0.0, %v1923
    %v1925 = vpop.f32.mrf.mxu0
    %v1926 = vadd.f32 0.0, %v1925
    %1927 = vmatprep.mubr.bf16.mxu0 %v468
    %1928 = vmatmul.mubr.bf16.gmra.mxu0 %v467
    %v1929 = vpop.f32.mrf.mxu0
    %v1930 = vadd.f32 0.0, %v1929
    %v1931 = vpop.f32.mrf.mxu0
    %v1932 = vadd.f32 0.0, %v1931
    %v1933 = vpop.f32.mrf.mxu0
    %v1934 = vadd.f32 0.0, %v1933
    %v1935 = vpop.f32.mrf.mxu0
    %v1936 = vadd.f32 0.0, %v1935
    %1937 = vdwg.mxu0
    %1938 = vmatprep.subr.bf16.mxu0 %v1236
    %1939 = vmatpush1.bf16.msra.mxu0 %v1235
    %1940 = vmatprep.subr.bf16.mxu0 %v1230
    %1941 = vmatpush1.bf16.msra.mxu0 %v1229
    %1942 = vmatprep.subr.bf16.mxu0 %v1224
    %1943 = vmatpush1.bf16.msra.mxu0 %v1223
    %1944 = vmatprep.subr.bf16.mxu0 %v1218
    %1945 = vmatpush1.bf16.msra.mxu0 %v1217
    %1946 = vmatprep.subr.bf16.mxu0 %v1212
    %1947 = vmatpush1.bf16.msra.mxu0 %v1211
    %1948 = vmatprep.subr.bf16.mxu0 %v1206
    %1949 = vmatpush1.bf16.msra.mxu0 %v1205
    %1950 = vmatprep.subr.bf16.mxu0 %v1200
    %1951 = vmatpush1.bf16.msra.mxu0 %v1199
    %1952 = vmatprep.subr.bf16.mxu0 %v1194
    %1953 = vmatpush1.bf16.msra.mxu0 %v1193
    %1954 = vmatprep.subr.bf16.mxu0 %v1284
    %1955 = vmatpush2.bf16.msra.mxu0 %v1283
    %1956 = vmatprep.subr.bf16.mxu0 %v1278
    %1957 = vmatpush2.bf16.msra.mxu0 %v1277
    %1958 = vmatprep.subr.bf16.mxu0 %v1272
    %1959 = vmatpush2.bf16.msra.mxu0 %v1271
    %1960 = vmatprep.subr.bf16.mxu0 %v1266
    %1961 = vmatpush2.bf16.msra.mxu0 %v1265
    %1962 = vmatprep.subr.bf16.mxu0 %v1260
    %1963 = vmatpush2.bf16.msra.mxu0 %v1259
    %1964 = vmatprep.subr.bf16.mxu0 %v1254
    %1965 = vmatpush2.bf16.msra.mxu0 %v1253
    %1966 = vmatprep.subr.bf16.mxu0 %v1248
    %1967 = vmatpush2.bf16.msra.mxu0 %v1247
    %1968 = vmatprep.subr.bf16.mxu0 %v1242
    %1969 = vmatpush2.bf16.msra.mxu0 %v1241
    %1970 = vmatprep.mubr.bf16.mxu0 %v426
    %1971 = vmatmul.mubr.bf16.gmra.mxu0 %v425
    %v1972 = vpop.f32.mrf.mxu0
    %v1973 = vadd.f32 %v1820, %v1972
    %v1974 = vpop.f32.mrf.mxu0
    %v1975 = vadd.f32 %v1822, %v1974
    %v1976 = vpop.f32.mrf.mxu0
    %v1977 = vadd.f32 %v1824, %v1976
    %v1978 = vpop.f32.mrf.mxu0
    %v1979 = vadd.f32 %v1826, %v1978
    %1980 = vmatprep.mubr.bf16.mxu0 %v430
    %1981 = vmatmul.mubr.bf16.gmra.mxu0 %v429
    %v1982 = vpop.f32.mrf.mxu0
    %v1983 = vadd.f32 %v1830, %v1982
    %v1984 = vpop.f32.mrf.mxu0
    %v1985 = vadd.f32 %v1832, %v1984
    %v1986 = vpop.f32.mrf.mxu0
    %v1987 = vadd.f32 %v1834, %v1986
    %v1988 = vpop.f32.mrf.mxu0
    %v1989 = vadd.f32 %v1836, %v1988
    %1990 = vmatprep.mubr.bf16.mxu0 %v434
    %1991 = vmatmul.mubr.bf16.gmra.mxu0 %v433
    %v1992 = vpop.f32.mrf.mxu0
    %v1993 = vadd.f32 %v1840, %v1992
    %v1994 = vpop.f32.mrf.mxu0
    %v1995 = vadd.f32 %v1842, %v1994
    %v1996 = vpop.f32.mrf.mxu0
    %v1997 = vadd.f32 %v1844, %v1996
    %v1998 = vpop.f32.mrf.mxu0
    %v1999 = vadd.f32 %v1846, %v1998
    %2000 = vmatprep.mubr.bf16.mxu0 %v438
    %2001 = vmatmul.mubr.bf16.gmra.mxu0 %v437
    %v2002 = vpop.f32.mrf.mxu0
    %v2003 = vadd.f32 %v1850, %v2002
    %v2004 = vpop.f32.mrf.mxu0
    %v2005 = vadd.f32 %v1852, %v2004
    %v2006 = vpop.f32.mrf.mxu0
    %v2007 = vadd.f32 %v1854, %v2006
    %v2008 = vpop.f32.mrf.mxu0
    %v2009 = vadd.f32 %v1856, %v2008
    %2010 = vmatprep.mubr.bf16.mxu0 %v442
    %2011 = vmatmul.mubr.bf16.gmra.mxu0 %v441
    %v2012 = vpop.f32.mrf.mxu0
    %v2013 = vadd.f32 %v1860, %v2012
    %v2014 = vpop.f32.mrf.mxu0
    %v2015 = vadd.f32 %v1862, %v2014
    %v2016 = vpop.f32.mrf.mxu0
    %v2017 = vadd.f32 %v1864, %v2016
    %v2018 = vpop.f32.mrf.mxu0
    %v2019 = vadd.f32 %v1866, %v2018
    %2020 = vmatprep.mubr.bf16.mxu0 %v446
    %2021 = vmatmul.mubr.bf16.gmra.mxu0 %v445
    %v2022 = vpop.f32.mrf.mxu0
    %v2023 = vadd.f32 %v1870, %v2022
    %v2024 = vpop.f32.mrf.mxu0
    %v2025 = vadd.f32 %v1872, %v2024
    %v2026 = vpop.f32.mrf.mxu0
    %v2027 = vadd.f32 %v1874, %v2026
    %v2028 = vpop.f32.mrf.mxu0
    %v2029 = vadd.f32 %v1876, %v2028
    %2030 = vmatprep.mubr.bf16.mxu0 %v450
    %2031 = vmatmul.mubr.bf16.gmra.mxu0 %v449
    %v2032 = vpop.f32.mrf.mxu0
    %v2033 = vadd.f32 %v1880, %v2032
    %v2034 = vpop.f32.mrf.mxu0
    %v2035 = vadd.f32 %v1882, %v2034
    %v2036 = vpop.f32.mrf.mxu0
    %v2037 = vadd.f32 %v1884, %v2036
    %v2038 = vpop.f32.mrf.mxu0
    %v2039 = vadd.f32 %v1886, %v2038
    %2040 = vmatprep.mubr.bf16.mxu0 %v454
    %2041 = vmatmul.mubr.bf16.gmra.mxu0 %v453
    %v2042 = vpop.f32.mrf.mxu0
    %v2043 = vadd.f32 %v1890, %v2042
    %v2044 = vpop.f32.mrf.mxu0
    %v2045 = vadd.f32 %v1892, %v2044
    %v2046 = vpop.f32.mrf.mxu0
    %v2047 = vadd.f32 %v1894, %v2046
    %v2048 = vpop.f32.mrf.mxu0
    %v2049 = vadd.f32 %v1896, %v2048
    %2050 = vmatprep.mubr.bf16.mxu0 %v458
    %2051 = vmatmul.mubr.bf16.gmra.mxu0 %v457
    %v2052 = vpop.f32.mrf.mxu0
    %v2053 = vadd.f32 %v1900, %v2052
    %v2054 = vpop.f32.mrf.mxu0
    %v2055 = vadd.f32 %v1902, %v2054
    %v2056 = vpop.f32.mrf.mxu0
    %v2057 = vadd.f32 %v1904, %v2056
    %v2058 = vpop.f32.mrf.mxu0
    %v2059 = vadd.f32 %v1906, %v2058
    %2060 = vmatprep.mubr.bf16.mxu0 %v462
    %2061 = vmatmul.mubr.bf16.gmra.mxu0 %v461
    %v2062 = vpop.f32.mrf.mxu0
    %v2063 = vadd.f32 %v1910, %v2062
    %v2064 = vpop.f32.mrf.mxu0
    %v2065 = vadd.f32 %v1912, %v2064
    %v2066 = vpop.f32.mrf.mxu0
    %v2067 = vadd.f32 %v1914, %v2066
    %v2068 = vpop.f32.mrf.mxu0
    %v2069 = vadd.f32 %v1916, %v2068
    %2070 = vmatprep.mubr.bf16.mxu0 %v466
    %2071 = vmatmul.mubr.bf16.gmra.mxu0 %v465
    %v2072 = vpop.f32.mrf.mxu0
    %v2073 = vadd.f32 %v1920, %v2072
    %v2074 = vpop.f32.mrf.mxu0
    %v2075 = vadd.f32 %v1922, %v2074
    %v2076 = vpop.f32.mrf.mxu0
    %v2077 = vadd.f32 %v1924, %v2076
    %v2078 = vpop.f32.mrf.mxu0
    %v2079 = vadd.f32 %v1926, %v2078
    %2080 = vmatprep.mubr.bf16.mxu0 %v470
    %2081 = vmatmul.mubr.bf16.gmra.mxu0 %v469
    %v2082 = vpop.f32.mrf.mxu0
    %v2083 = vadd.f32 %v1930, %v2082
    %v2084 = vpop.f32.mrf.mxu0
    %v2085 = vadd.f32 %v1932, %v2084
    %v2086 = vpop.f32.mrf.mxu0
    %v2087 = vadd.f32 %v1934, %v2086
    %v2088 = vpop.f32.mrf.mxu0
    %v2089 = vadd.f32 %v1936, %v2088
    %2090 = vdwg.mxu0
    %2091 = vmatprep.subr.bf16.mxu0 %v1142
    %2092 = vmatpush1.bf16.msra.mxu0 %v1141
    %2093 = vmatprep.subr.bf16.mxu0 %v1136
    %2094 = vmatpush1.bf16.msra.mxu0 %v1135
    %2095 = vmatprep.subr.bf16.mxu0 %v1130
    %2096 = vmatpush1.bf16.msra.mxu0 %v1129
    %2097 = vmatprep.subr.bf16.mxu0 %v1124
    %2098 = vmatpush1.bf16.msra.mxu0 %v1123
    %2099 = vmatprep.subr.bf16.mxu0 %v1118
    %2100 = vmatpush1.bf16.msra.mxu0 %v1117
    %2101 = vmatprep.subr.bf16.mxu0 %v1112
    %2102 = vmatpush1.bf16.msra.mxu0 %v1111
    %2103 = vmatprep.subr.bf16.mxu0 %v1106
    %2104 = vmatpush1.bf16.msra.mxu0 %v1105
    %2105 = vmatprep.subr.bf16.mxu0 %v1100
    %2106 = vmatpush1.bf16.msra.mxu0 %v1099
    %2107 = vmatprep.subr.bf16.mxu0 %v1190
    %2108 = vmatpush2.bf16.msra.mxu0 %v1189
    %2109 = vmatprep.subr.bf16.mxu0 %v1184
    %2110 = vmatpush2.bf16.msra.mxu0 %v1183
    %2111 = vmatprep.subr.bf16.mxu0 %v1178
    %2112 = vmatpush2.bf16.msra.mxu0 %v1177
    %2113 = vmatprep.subr.bf16.mxu0 %v1172
    %2114 = vmatpush2.bf16.msra.mxu0 %v1171
    %2115 = vmatprep.subr.bf16.mxu0 %v1166
    %2116 = vmatpush2.bf16.msra.mxu0 %v1165
    %2117 = vmatprep.subr.bf16.mxu0 %v1160
    %2118 = vmatpush2.bf16.msra.mxu0 %v1159
    %2119 = vmatprep.subr.bf16.mxu0 %v1154
    %2120 = vmatpush2.bf16.msra.mxu0 %v1153
    %2121 = vmatprep.subr.bf16.mxu0 %v1148
    %2122 = vmatpush2.bf16.msra.mxu0 %v1147
    %2123 = vmatprep.mubr.bf16.mxu0 %v424
    %2124 = vmatmul.mubr.bf16.gmra.mxu0 %v423
    %v2125 = vpop.f32.mrf.mxu0
    %v2126 = vadd.f32 0.0, %v2125
    %v2127 = vpop.f32.mrf.mxu0
    %v2128 = vadd.f32 0.0, %v2127
    %v2129 = vpop.f32.mrf.mxu0
    %v2130 = vadd.f32 0.0, %v2129
    %v2131 = vpop.f32.mrf.mxu0
    %v2132 = vadd.f32 0.0, %v2131
    %2133 = vmatprep.mubr.bf16.mxu0 %v428
    %2134 = vmatmul.mubr.bf16.gmra.mxu0 %v427
    %v2135 = vpop.f32.mrf.mxu0
    %v2136 = vadd.f32 0.0, %v2135
    %v2137 = vpop.f32.mrf.mxu0
    %v2138 = vadd.f32 0.0, %v2137
    %v2139 = vpop.f32.mrf.mxu0
    %v2140 = vadd.f32 0.0, %v2139
    %v2141 = vpop.f32.mrf.mxu0
    %v2142 = vadd.f32 0.0, %v2141
    %2143 = vmatprep.mubr.bf16.mxu0 %v432
    %2144 = vmatmul.mubr.bf16.gmra.mxu0 %v431
    %v2145 = vpop.f32.mrf.mxu0
    %v2146 = vadd.f32 0.0, %v2145
    %v2147 = vpop.f32.mrf.mxu0
    %v2148 = vadd.f32 0.0, %v2147
    %v2149 = vpop.f32.mrf.mxu0
    %v2150 = vadd.f32 0.0, %v2149
    %v2151 = vpop.f32.mrf.mxu0
    %v2152 = vadd.f32 0.0, %v2151
    %2153 = vmatprep.mubr.bf16.mxu0 %v436
    %2154 = vmatmul.mubr.bf16.gmra.mxu0 %v435
    %v2155 = vpop.f32.mrf.mxu0
    %v2156 = vadd.f32 0.0, %v2155
    %v2157 = vpop.f32.mrf.mxu0
    %v2158 = vadd.f32 0.0, %v2157
    %v2159 = vpop.f32.mrf.mxu0
    %v2160 = vadd.f32 0.0, %v2159
    %v2161 = vpop.f32.mrf.mxu0
    %v2162 = vadd.f32 0.0, %v2161
    %2163 = vmatprep.mubr.bf16.mxu0 %v440
    %2164 = vmatmul.mubr.bf16.gmra.mxu0 %v439
    %v2165 = vpop.f32.mrf.mxu0
    %v2166 = vadd.f32 0.0, %v2165
    %v2167 = vpop.f32.mrf.mxu0
    %v2168 = vadd.f32 0.0, %v2167
    %v2169 = vpop.f32.mrf.mxu0
    %v2170 = vadd.f32 0.0, %v2169
    %v2171 = vpop.f32.mrf.mxu0
    %v2172 = vadd.f32 0.0, %v2171
    %2173 = vmatprep.mubr.bf16.mxu0 %v444
    %2174 = vmatmul.mubr.bf16.gmra.mxu0 %v443
    %v2175 = vpop.f32.mrf.mxu0
    %v2176 = vadd.f32 0.0, %v2175
    %v2177 = vpop.f32.mrf.mxu0
    %v2178 = vadd.f32 0.0, %v2177
    %v2179 = vpop.f32.mrf.mxu0
    %v2180 = vadd.f32 0.0, %v2179
    %v2181 = vpop.f32.mrf.mxu0
    %v2182 = vadd.f32 0.0, %v2181
    %2183 = vmatprep.mubr.bf16.mxu0 %v448
    %2184 = vmatmul.mubr.bf16.gmra.mxu0 %v447
    %v2185 = vpop.f32.mrf.mxu0
    %v2186 = vadd.f32 0.0, %v2185
    %v2187 = vpop.f32.mrf.mxu0
    %v2188 = vadd.f32 0.0, %v2187
    %v2189 = vpop.f32.mrf.mxu0
    %v2190 = vadd.f32 0.0, %v2189
    %v2191 = vpop.f32.mrf.mxu0
    %v2192 = vadd.f32 0.0, %v2191
    %2193 = vmatprep.mubr.bf16.mxu0 %v452
    %2194 = vmatmul.mubr.bf16.gmra.mxu0 %v451
    %v2195 = vpop.f32.mrf.mxu0
    %v2196 = vadd.f32 0.0, %v2195
    %v2197 = vpop.f32.mrf.mxu0
    %v2198 = vadd.f32 0.0, %v2197
    %v2199 = vpop.f32.mrf.mxu0
    %v2200 = vadd.f32 0.0, %v2199
    %v2201 = vpop.f32.mrf.mxu0
    %v2202 = vadd.f32 0.0, %v2201
    %2203 = vmatprep.mubr.bf16.mxu0 %v456
    %2204 = vmatmul.mubr.bf16.gmra.mxu0 %v455
    %v2205 = vpop.f32.mrf.mxu0
    %v2206 = vadd.f32 0.0, %v2205
    %v2207 = vpop.f32.mrf.mxu0
    %v2208 = vadd.f32 0.0, %v2207
    %v2209 = vpop.f32.mrf.mxu0
    %v2210 = vadd.f32 0.0, %v2209
    %v2211 = vpop.f32.mrf.mxu0
    %v2212 = vadd.f32 0.0, %v2211
    %2213 = vmatprep.mubr.bf16.mxu0 %v460
    %2214 = vmatmul.mubr.bf16.gmra.mxu0 %v459
    %v2215 = vpop.f32.mrf.mxu0
    %v2216 = vadd.f32 0.0, %v2215
    %v2217 = vpop.f32.mrf.mxu0
    %v2218 = vadd.f32 0.0, %v2217
    %v2219 = vpop.f32.mrf.mxu0
    %v2220 = vadd.f32 0.0, %v2219
    %v2221 = vpop.f32.mrf.mxu0
    %v2222 = vadd.f32 0.0, %v2221
    %2223 = vmatprep.mubr.bf16.mxu0 %v464
    %2224 = vmatmul.mubr.bf16.gmra.mxu0 %v463
    %v2225 = vpop.f32.mrf.mxu0
    %v2226 = vadd.f32 0.0, %v2225
    %v2227 = vpop.f32.mrf.mxu0
    %v2228 = vadd.f32 0.0, %v2227
    %v2229 = vpop.f32.mrf.mxu0
    %v2230 = vadd.f32 0.0, %v2229
    %v2231 = vpop.f32.mrf.mxu0
    %v2232 = vadd.f32 0.0, %v2231
    %2233 = vmatprep.mubr.bf16.mxu0 %v468
    %2234 = vmatmul.mubr.bf16.gmra.mxu0 %v467
    %v2235 = vpop.f32.mrf.mxu0
    %v2236 = vadd.f32 0.0, %v2235
    %v2237 = vpop.f32.mrf.mxu0
    %v2238 = vadd.f32 0.0, %v2237
    %v2239 = vpop.f32.mrf.mxu0
    %v2240 = vadd.f32 0.0, %v2239
    %v2241 = vpop.f32.mrf.mxu0
    %v2242 = vadd.f32 0.0, %v2241
    %2243 = vdwg.mxu0
    %2244 = vmatprep.subr.bf16.mxu0 %v1238
    %2245 = vmatpush1.bf16.msra.mxu0 %v1237
    %2246 = vmatprep.subr.bf16.mxu0 %v1232
    %2247 = vmatpush1.bf16.msra.mxu0 %v1231
    %2248 = vmatprep.subr.bf16.mxu0 %v1226
    %2249 = vmatpush1.bf16.msra.mxu0 %v1225
    %2250 = vmatprep.subr.bf16.mxu0 %v1220
    %2251 = vmatpush1.bf16.msra.mxu0 %v1219
    %2252 = vmatprep.subr.bf16.mxu0 %v1214
    %2253 = vmatpush1.bf16.msra.mxu0 %v1213
    %2254 = vmatprep.subr.bf16.mxu0 %v1208
    %2255 = vmatpush1.bf16.msra.mxu0 %v1207
    %2256 = vmatprep.subr.bf16.mxu0 %v1202
    %2257 = vmatpush1.bf16.msra.mxu0 %v1201
    %2258 = vmatprep.subr.bf16.mxu0 %v1196
    %2259 = vmatpush1.bf16.msra.mxu0 %v1195
    %2260 = vmatprep.subr.bf16.mxu0 %v1286
    %2261 = vmatpush2.bf16.msra.mxu0 %v1285
    %2262 = vmatprep.subr.bf16.mxu0 %v1280
    %2263 = vmatpush2.bf16.msra.mxu0 %v1279
    %2264 = vmatprep.subr.bf16.mxu0 %v1274
    %2265 = vmatpush2.bf16.msra.mxu0 %v1273
    %2266 = vmatprep.subr.bf16.mxu0 %v1268
    %2267 = vmatpush2.bf16.msra.mxu0 %v1267
    %2268 = vmatprep.subr.bf16.mxu0 %v1262
    %2269 = vmatpush2.bf16.msra.mxu0 %v1261
    %2270 = vmatprep.subr.bf16.mxu0 %v1256
    %2271 = vmatpush2.bf16.msra.mxu0 %v1255
    %2272 = vmatprep.subr.bf16.mxu0 %v1250
    %2273 = vmatpush2.bf16.msra.mxu0 %v1249
    %2274 = vmatprep.subr.bf16.mxu0 %v1244
    %2275 = vmatpush2.bf16.msra.mxu0 %v1243
    %2276 = vmatprep.mubr.bf16.mxu0 %v426
    %2277 = vmatmul.mubr.bf16.gmra.mxu0 %v425
    %v2278 = vpop.f32.mrf.mxu0
    %v2279 = vadd.f32 %v2126, %v2278
    %v2280 = vpop.f32.mrf.mxu0
    %v2281 = vadd.f32 %v2128, %v2280
    %v2282 = vpop.f32.mrf.mxu0
    %v2283 = vadd.f32 %v2130, %v2282
    %v2284 = vpop.f32.mrf.mxu0
    %v2285 = vadd.f32 %v2132, %v2284
    %2286 = vmatprep.mubr.bf16.mxu0 %v430
    %2287 = vmatmul.mubr.bf16.gmra.mxu0 %v429
    %v2288 = vpop.f32.mrf.mxu0
    %v2289 = vadd.f32 %v2136, %v2288
    %v2290 = vpop.f32.mrf.mxu0
    %v2291 = vadd.f32 %v2138, %v2290
    %v2292 = vpop.f32.mrf.mxu0
    %v2293 = vadd.f32 %v2140, %v2292
    %v2294 = vpop.f32.mrf.mxu0
    %v2295 = vadd.f32 %v2142, %v2294
    %2296 = vmatprep.mubr.bf16.mxu0 %v434
    %2297 = vmatmul.mubr.bf16.gmra.mxu0 %v433
    %v2298 = vpop.f32.mrf.mxu0
    %v2299 = vadd.f32 %v2146, %v2298
    %v2300 = vpop.f32.mrf.mxu0
    %v2301 = vadd.f32 %v2148, %v2300
    %v2302 = vpop.f32.mrf.mxu0
    %v2303 = vadd.f32 %v2150, %v2302
    %v2304 = vpop.f32.mrf.mxu0
    %v2305 = vadd.f32 %v2152, %v2304
    %2306 = vmatprep.mubr.bf16.mxu0 %v438
    %2307 = vmatmul.mubr.bf16.gmra.mxu0 %v437
    %v2308 = vpop.f32.mrf.mxu0
    %v2309 = vadd.f32 %v2156, %v2308
    %v2310 = vpop.f32.mrf.mxu0
    %v2311 = vadd.f32 %v2158, %v2310
    %v2312 = vpop.f32.mrf.mxu0
    %v2313 = vadd.f32 %v2160, %v2312
    %v2314 = vpop.f32.mrf.mxu0
    %v2315 = vadd.f32 %v2162, %v2314
    %2316 = vmatprep.mubr.bf16.mxu0 %v442
    %2317 = vmatmul.mubr.bf16.gmra.mxu0 %v441
    %v2318 = vpop.f32.mrf.mxu0
    %v2319 = vadd.f32 %v2166, %v2318
    %v2320 = vpop.f32.mrf.mxu0
    %v2321 = vadd.f32 %v2168, %v2320
    %v2322 = vpop.f32.mrf.mxu0
    %v2323 = vadd.f32 %v2170, %v2322
    %v2324 = vpop.f32.mrf.mxu0
    %v2325 = vadd.f32 %v2172, %v2324
    %2326 = vmatprep.mubr.bf16.mxu0 %v446
    %2327 = vmatmul.mubr.bf16.gmra.mxu0 %v445
    %v2328 = vpop.f32.mrf.mxu0
    %v2329 = vadd.f32 %v2176, %v2328
    %v2330 = vpop.f32.mrf.mxu0
    %v2331 = vadd.f32 %v2178, %v2330
    %v2332 = vpop.f32.mrf.mxu0
    %v2333 = vadd.f32 %v2180, %v2332
    %v2334 = vpop.f32.mrf.mxu0
    %v2335 = vadd.f32 %v2182, %v2334
    %2336 = vmatprep.mubr.bf16.mxu0 %v450
    %2337 = vmatmul.mubr.bf16.gmra.mxu0 %v449
    %v2338 = vpop.f32.mrf.mxu0
    %v2339 = vadd.f32 %v2186, %v2338
    %v2340 = vpop.f32.mrf.mxu0
    %v2341 = vadd.f32 %v2188, %v2340
    %v2342 = vpop.f32.mrf.mxu0
    %v2343 = vadd.f32 %v2190, %v2342
    %v2344 = vpop.f32.mrf.mxu0
    %v2345 = vadd.f32 %v2192, %v2344
    %2346 = vmatprep.mubr.bf16.mxu0 %v454
    %2347 = vmatmul.mubr.bf16.gmra.mxu0 %v453
    %v2348 = vpop.f32.mrf.mxu0
    %v2349 = vadd.f32 %v2196, %v2348
    %v2350 = vpop.f32.mrf.mxu0
    %v2351 = vadd.f32 %v2198, %v2350
    %v2352 = vpop.f32.mrf.mxu0
    %v2353 = vadd.f32 %v2200, %v2352
    %v2354 = vpop.f32.mrf.mxu0
    %v2355 = vadd.f32 %v2202, %v2354
    %2356 = vmatprep.mubr.bf16.mxu0 %v458
    %2357 = vmatmul.mubr.bf16.gmra.mxu0 %v457
    %v2358 = vpop.f32.mrf.mxu0
    %v2359 = vadd.f32 %v2206, %v2358
    %v2360 = vpop.f32.mrf.mxu0
    %v2361 = vadd.f32 %v2208, %v2360
    %v2362 = vpop.f32.mrf.mxu0
    %v2363 = vadd.f32 %v2210, %v2362
    %v2364 = vpop.f32.mrf.mxu0
    %v2365 = vadd.f32 %v2212, %v2364
    %2366 = vmatprep.mubr.bf16.mxu0 %v462
    %2367 = vmatmul.mubr.bf16.gmra.mxu0 %v461
    %v2368 = vpop.f32.mrf.mxu0
    %v2369 = vadd.f32 %v2216, %v2368
    %v2370 = vpop.f32.mrf.mxu0
    %v2371 = vadd.f32 %v2218, %v2370
    %v2372 = vpop.f32.mrf.mxu0
    %v2373 = vadd.f32 %v2220, %v2372
    %v2374 = vpop.f32.mrf.mxu0
    %v2375 = vadd.f32 %v2222, %v2374
    %2376 = vmatprep.mubr.bf16.mxu0 %v466
    %2377 = vmatmul.mubr.bf16.gmra.mxu0 %v465
    %v2378 = vpop.f32.mrf.mxu0
    %v2379 = vadd.f32 %v2226, %v2378
    %v2380 = vpop.f32.mrf.mxu0
    %v2381 = vadd.f32 %v2228, %v2380
    %v2382 = vpop.f32.mrf.mxu0
    %v2383 = vadd.f32 %v2230, %v2382
    %v2384 = vpop.f32.mrf.mxu0
    %v2385 = vadd.f32 %v2232, %v2384
    %2386 = vmatprep.mubr.bf16.mxu0 %v470
    %2387 = vmatmul.mubr.bf16.gmra.mxu0 %v469
    %v2388 = vpop.f32.mrf.mxu0
    %v2389 = vadd.f32 %v2236, %v2388
    %v2390 = vpop.f32.mrf.mxu0
    %v2391 = vadd.f32 %v2238, %v2390
    %v2392 = vpop.f32.mrf.mxu0
    %v2393 = vadd.f32 %v2240, %v2392
    %v2394 = vpop.f32.mrf.mxu0
    %v2395 = vadd.f32 %v2242, %v2394
    %2396 = vdwg.mxu0
    %v2397 = vld [vmem:[#allocation2] sm:$0xff]
    %v2398 = vld [vmem:[#allocation2 + $0x8] sm:$0xff]
    %v2399 = vld [vmem:[#allocation2 + $0x10] sm:$0xff]
    %v2400 = vld [vmem:[#allocation2 + $0x18] sm:$0xff]
    %v2401 = vld [vmem:[#allocation2 + $0x20] sm:$0xff]
    %v2402 = vld [vmem:[#allocation2 + $0x28] sm:$0xff]
    %v2403 = vld [vmem:[#allocation2 + $0x30] sm:$0xff]
    %v2404 = vld [vmem:[#allocation2 + $0x38] sm:$0xff]
    %v2405 = vld [vmem:[#allocation2 + $0x40] sm:$0xff]
    %v2406 = vld [vmem:[#allocation2 + $0x48] sm:$0xff]
    %v2407 = vld [vmem:[#allocation2 + $0x50] sm:$0xff]
    %v2408 = vld [vmem:[#allocation2 + $0x58] sm:$0xff]
    %v2409 = vld [vmem:[#allocation2 + $0x60] sm:$0xff]
    %v2410 = vld [vmem:[#allocation2 + $0x68] sm:$0xff]
    %v2411 = vld [vmem:[#allocation2 + $0x70] sm:$0xff]
    %v2412 = vld [vmem:[#allocation2 + $0x78] sm:$0xff]
    %v2413 = vld [vmem:[#allocation2 + $0x80] sm:$0xff]
    %v2414 = vld [vmem:[#allocation2 + $0x88] sm:$0xff]
    %v2415 = vadd.f32 %v1667, %v2397
    %v2416 = vadd.f32 %v1669, %v2398
    %v2417 = vadd.f32 %v1973, %v2399
    %v2418 = vadd.f32 %v1975, %v2400
    %v2419 = vadd.f32 %v2279, %v2401
    %v2420 = vadd.f32 %v2281, %v2402
    %v2421 = vadd.f32 %v1671, %v2403
    %v2422 = vadd.f32 %v1673, %v2404
    %v2423 = vadd.f32 %v1977, %v2405
    %v2424 = vadd.f32 %v1979, %v2406
    %v2425 = vadd.f32 %v2283, %v2407
    %v2426 = vadd.f32 %v2285, %v2408
    %v2427 = vadd.f32 %v1677, %v2409
    %v2428 = vadd.f32 %v1679, %v2410
    %v2429 = vadd.f32 %v1983, %v2411
    %v2430 = vadd.f32 %v1985, %v2412
    %v2431 = vadd.f32 %v2289, %v2413
    %v2432 = vadd.f32 %v2291, %v2414
    %v2433 = vadd.f32 %v1681, %v2397
    %v2434 = vadd.f32 %v1683, %v2398
    %v2435 = vadd.f32 %v1987, %v2399
    %v2436 = vadd.f32 %v1989, %v2400
    %v2437 = vadd.f32 %v2293, %v2401
    %v2438 = vadd.f32 %v2295, %v2402
    %v2439 = vadd.f32 %v1687, %v2403
    %v2440 = vadd.f32 %v1689, %v2404
    %v2441 = vadd.f32 %v1993, %v2405
    %v2442 = vadd.f32 %v1995, %v2406
    %v2443 = vadd.f32 %v2299, %v2407
    %v2444 = vadd.f32 %v2301, %v2408
    %v2445 = vadd.f32 %v1691, %v2409
    %v2446 = vadd.f32 %v1693, %v2410
    %v2447 = vadd.f32 %v1997, %v2411
    %v2448 = vadd.f32 %v1999, %v2412
    %v2449 = vadd.f32 %v2303, %v2413
    %v2450 = vadd.f32 %v2305, %v2414
    %v2451 = vadd.f32 %v1697, %v2397
    %v2452 = vadd.f32 %v1699, %v2398
    %v2453 = vadd.f32 %v2003, %v2399
    %v2454 = vadd.f32 %v2005, %v2400
    %v2455 = vadd.f32 %v2309, %v2401
    %v2456 = vadd.f32 %v2311, %v2402
    %v2457 = vadd.f32 %v1701, %v2403
    %v2458 = vadd.f32 %v1703, %v2404
    %v2459 = vadd.f32 %v2007, %v2405
    %v2460 = vadd.f32 %v2009, %v2406
    %v2461 = vadd.f32 %v2313, %v2407
    %v2462 = vadd.f32 %v2315, %v2408
    %v2463 = vadd.f32 %v1707, %v2409
    %v2464 = vadd.f32 %v1709, %v2410
    %v2465 = vadd.f32 %v2013, %v2411
    %v2466 = vadd.f32 %v2015, %v2412
    %v2467 = vadd.f32 %v2319, %v2413
    %v2468 = vadd.f32 %v2321, %v2414
    %v2469 = vadd.f32 %v1711, %v2397
    %v2470 = vadd.f32 %v1713, %v2398
    %v2471 = vadd.f32 %v2017, %v2399
    %v2472 = vadd.f32 %v2019, %v2400
    %v2473 = vadd.f32 %v2323, %v2401
    %v2474 = vadd.f32 %v2325, %v2402
    %v2475 = vadd.f32 %v1717, %v2403
    %v2476 = vadd.f32 %v1719, %v2404
    %v2477 = vadd.f32 %v2023, %v2405
    %v2478 = vadd.f32 %v2025, %v2406
    %v2479 = vadd.f32 %v2329, %v2407
    %v2480 = vadd.f32 %v2331, %v2408
    %v2481 = vadd.f32 %v1721, %v2409
    %v2482 = vadd.f32 %v1723, %v2410
    %v2483 = vadd.f32 %v2027, %v2411
    %v2484 = vadd.f32 %v2029, %v2412
    %v2485 = vadd.f32 %v2333, %v2413
    %v2486 = vadd.f32 %v2335, %v2414
    %v2487 = vadd.f32 %v1727, %v2397
    %v2488 = vadd.f32 %v1729, %v2398
    %v2489 = vadd.f32 %v2033, %v2399
    %v2490 = vadd.f32 %v2035, %v2400
    %v2491 = vadd.f32 %v2339, %v2401
    %v2492 = vadd.f32 %v2341, %v2402
    %v2493 = vadd.f32 %v1731, %v2403
    %v2494 = vadd.f32 %v1733, %v2404
    %v2495 = vadd.f32 %v2037, %v2405
    %v2496 = vadd.f32 %v2039, %v2406
    %v2497 = vadd.f32 %v2343, %v2407
    %v2498 = vadd.f32 %v2345, %v2408
    %v2499 = vadd.f32 %v1737, %v2409
    %v2500 = vadd.f32 %v1739, %v2410
    %v2501 = vadd.f32 %v2043, %v2411
    %v2502 = vadd.f32 %v2045, %v2412
    %v2503 = vadd.f32 %v2349, %v2413
    %v2504 = vadd.f32 %v2351, %v2414
    %v2505 = vadd.f32 %v1741, %v2397
    %v2506 = vadd.f32 %v1743, %v2398
    %v2507 = vadd.f32 %v2047, %v2399
    %v2508 = vadd.f32 %v2049, %v2400
    %v2509 = vadd.f32 %v2353, %v2401
    %v2510 = vadd.f32 %v2355, %v2402
    %v2511 = vadd.f32 %v1747, %v2403
    %v2512 = vadd.f32 %v1749, %v2404
    %v2513 = vadd.f32 %v2053, %v2405
    %v2514 = vadd.f32 %v2055, %v2406
    %v2515 = vadd.f32 %v2359, %v2407
    %v2516 = vadd.f32 %v2361, %v2408
    %v2517 = vadd.f32 %v1751, %v2409
    %v2518 = vadd.f32 %v1753, %v2410
    %v2519 = vadd.f32 %v2057, %v2411
    %v2520 = vadd.f32 %v2059, %v2412
    %v2521 = vadd.f32 %v2363, %v2413
    %v2522 = vadd.f32 %v2365, %v2414
    %v2523 = vadd.f32 %v1757, %v2397
    %v2524 = vadd.f32 %v1759, %v2398
    %v2525 = vadd.f32 %v2063, %v2399
    %v2526 = vadd.f32 %v2065, %v2400
    %v2527 = vadd.f32 %v2369, %v2401
    %v2528 = vadd.f32 %v2371, %v2402
    %v2529 = vadd.f32 %v1761, %v2403
    %v2530 = vadd.f32 %v1763, %v2404
    %v2531 = vadd.f32 %v2067, %v2405
    %v2532 = vadd.f32 %v2069, %v2406
    %v2533 = vadd.f32 %v2373, %v2407
    %v2534 = vadd.f32 %v2375, %v2408
    %v2535 = vadd.f32 %v1767, %v2409
    %v2536 = vadd.f32 %v1769, %v2410
    %v2537 = vadd.f32 %v2073, %v2411
    %v2538 = vadd.f32 %v2075, %v2412
    %v2539 = vadd.f32 %v2379, %v2413
    %v2540 = vadd.f32 %v2381, %v2414
    %v2541 = vadd.f32 %v1771, %v2397
    %v2542 = vadd.f32 %v1773, %v2398
    %v2543 = vadd.f32 %v2077, %v2399
    %v2544 = vadd.f32 %v2079, %v2400
    %v2545 = vadd.f32 %v2383, %v2401
    %v2546 = vadd.f32 %v2385, %v2402
    %v2547 = vadd.f32 %v1777, %v2403
    %v2548 = vadd.f32 %v1779, %v2404
    %v2549 = vadd.f32 %v2083, %v2405
    %v2550 = vadd.f32 %v2085, %v2406
    %v2551 = vadd.f32 %v2389, %v2407
    %v2552 = vadd.f32 %v2391, %v2408
    %v2553 = vadd.f32 %v1781, %v2409
    %v2554 = vadd.f32 %v1783, %v2410
    %v2555 = vadd.f32 %v2087, %v2411
    %v2556 = vadd.f32 %v2089, %v2412
    %v2557 = vadd.f32 %v2393, %v2413
    %v2558 = vadd.f32 %v2395, %v2414
    %v2559 = vmax.f32 %v2415, %v2421
    %v2560 = vmax.f32 %v2559, %v2427
    %v2561 = vrot.slane %v2560, 4
    %v2562 = vmax.f32 %v2560, %v2561
    %v2563 = vrot.slane %v2562, 2
    %v2564 = vmax.f32 %v2562, %v2563
    %v2565 = vrot.slane %v2564, 1
    %v2566 = vmax.f32 %v2564, %v2565
    %v2567 = vmax.f32 %v2416, %v2422
    %v2568 = vmax.f32 %v2567, %v2428
    %v2569 = vrot.slane %v2568, 4
    %v2570 = vmax.f32 %v2568, %v2569
    %v2571 = vrot.slane %v2570, 2
    %v2572 = vmax.f32 %v2570, %v2571
    %v2573 = vrot.slane %v2572, 1
    %v2574 = vmax.f32 %v2572, %v2573
    %v2575 = vmax.f32 %v2417, %v2423
    %v2576 = vmax.f32 %v2575, %v2429
    %v2577 = vrot.slane %v2576, 4
    %v2578 = vmax.f32 %v2576, %v2577
    %v2579 = vrot.slane %v2578, 2
    %v2580 = vmax.f32 %v2578, %v2579
    %v2581 = vrot.slane %v2580, 1
    %v2582 = vmax.f32 %v2580, %v2581
    %v2583 = vmax.f32 %v2418, %v2424
    %v2584 = vmax.f32 %v2583, %v2430
    %v2585 = vrot.slane %v2584, 4
    %v2586 = vmax.f32 %v2584, %v2585
    %v2587 = vrot.slane %v2586, 2
    %v2588 = vmax.f32 %v2586, %v2587
    %v2589 = vrot.slane %v2588, 1
    %v2590 = vmax.f32 %v2588, %v2589
    %v2591 = vmax.f32 %v2419, %v2425
    %v2592 = vmax.f32 %v2591, %v2431
    %v2593 = vrot.slane %v2592, 4
    %v2594 = vmax.f32 %v2592, %v2593
    %v2595 = vrot.slane %v2594, 2
    %v2596 = vmax.f32 %v2594, %v2595
    %v2597 = vrot.slane %v2596, 1
    %v2598 = vmax.f32 %v2596, %v2597
    %v2599 = vmax.f32 %v2420, %v2426
    %v2600 = vmax.f32 %v2599, %v2432
    %v2601 = vrot.slane %v2600, 4
    %v2602 = vmax.f32 %v2600, %v2601
    %v2603 = vrot.slane %v2602, 2
    %v2604 = vmax.f32 %v2602, %v2603
    %v2605 = vrot.slane %v2604, 1
    %v2606 = vmax.f32 %v2604, %v2605
    %v2607 = vmax.f32 %v2433, %v2439
    %v2608 = vmax.f32 %v2607, %v2445
    %v2609 = vrot.slane %v2608, 4
    %v2610 = vmax.f32 %v2608, %v2609
    %v2611 = vrot.slane %v2610, 2
    %v2612 = vmax.f32 %v2610, %v2611
    %v2613 = vrot.slane %v2612, 1
    %v2614 = vmax.f32 %v2612, %v2613
    %v2615 = vmax.f32 %v2434, %v2440
    %v2616 = vmax.f32 %v2615, %v2446
    %v2617 = vrot.slane %v2616, 4
    %v2618 = vmax.f32 %v2616, %v2617
    %v2619 = vrot.slane %v2618, 2
    %v2620 = vmax.f32 %v2618, %v2619
    %v2621 = vrot.slane %v2620, 1
    %v2622 = vmax.f32 %v2620, %v2621
    %v2623 = vmax.f32 %v2435, %v2441
    %v2624 = vmax.f32 %v2623, %v2447
    %v2625 = vrot.slane %v2624, 4
    %v2626 = vmax.f32 %v2624, %v2625
    %v2627 = vrot.slane %v2626, 2
    %v2628 = vmax.f32 %v2626, %v2627
    %v2629 = vrot.slane %v2628, 1
    %v2630 = vmax.f32 %v2628, %v2629
    %v2631 = vmax.f32 %v2436, %v2442
    %v2632 = vmax.f32 %v2631, %v2448
    %v2633 = vrot.slane %v2632, 4
    %v2634 = vmax.f32 %v2632, %v2633
    %v2635 = vrot.slane %v2634, 2
    %v2636 = vmax.f32 %v2634, %v2635
    %v2637 = vrot.slane %v2636, 1
    %v2638 = vmax.f32 %v2636, %v2637
    %v2639 = vmax.f32 %v2437, %v2443
    %v2640 = vmax.f32 %v2639, %v2449
    %v2641 = vrot.slane %v2640, 4
    %v2642 = vmax.f32 %v2640, %v2641
    %v2643 = vrot.slane %v2642, 2
    %v2644 = vmax.f32 %v2642, %v2643
    %v2645 = vrot.slane %v2644, 1
    %v2646 = vmax.f32 %v2644, %v2645
    %v2647 = vmax.f32 %v2438, %v2444
    %v2648 = vmax.f32 %v2647, %v2450
    %v2649 = vrot.slane %v2648, 4
    %v2650 = vmax.f32 %v2648, %v2649
    %v2651 = vrot.slane %v2650, 2
    %v2652 = vmax.f32 %v2650, %v2651
    %v2653 = vrot.slane %v2652, 1
    %v2654 = vmax.f32 %v2652, %v2653
    %v2655 = vmax.f32 %v2451, %v2457
    %v2656 = vmax.f32 %v2655, %v2463
    %v2657 = vrot.slane %v2656, 4
    %v2658 = vmax.f32 %v2656, %v2657
    %v2659 = vrot.slane %v2658, 2
    %v2660 = vmax.f32 %v2658, %v2659
    %v2661 = vrot.slane %v2660, 1
    %v2662 = vmax.f32 %v2660, %v2661
    %v2663 = vmax.f32 %v2452, %v2458
    %v2664 = vmax.f32 %v2663, %v2464
    %v2665 = vrot.slane %v2664, 4
    %v2666 = vmax.f32 %v2664, %v2665
    %v2667 = vrot.slane %v2666, 2
    %v2668 = vmax.f32 %v2666, %v2667
    %v2669 = vrot.slane %v2668, 1
    %v2670 = vmax.f32 %v2668, %v2669
    %v2671 = vmax.f32 %v2453, %v2459
    %v2672 = vmax.f32 %v2671, %v2465
    %v2673 = vrot.slane %v2672, 4
    %v2674 = vmax.f32 %v2672, %v2673
    %v2675 = vrot.slane %v2674, 2
    %v2676 = vmax.f32 %v2674, %v2675
    %v2677 = vrot.slane %v2676, 1
    %v2678 = vmax.f32 %v2676, %v2677
    %v2679 = vmax.f32 %v2454, %v2460
    %v2680 = vmax.f32 %v2679, %v2466
    %v2681 = vrot.slane %v2680, 4
    %v2682 = vmax.f32 %v2680, %v2681
    %v2683 = vrot.slane %v2682, 2
    %v2684 = vmax.f32 %v2682, %v2683
    %v2685 = vrot.slane %v2684, 1
    %v2686 = vmax.f32 %v2684, %v2685
    %v2687 = vmax.f32 %v2455, %v2461
    %v2688 = vmax.f32 %v2687, %v2467
    %v2689 = vrot.slane %v2688, 4
    %v2690 = vmax.f32 %v2688, %v2689
    %v2691 = vrot.slane %v2690, 2
    %v2692 = vmax.f32 %v2690, %v2691
    %v2693 = vrot.slane %v2692, 1
    %v2694 = vmax.f32 %v2692, %v2693
    %v2695 = vmax.f32 %v2456, %v2462
    %v2696 = vmax.f32 %v2695, %v2468
    %v2697 = vrot.slane %v2696, 4
    %v2698 = vmax.f32 %v2696, %v2697
    %v2699 = vrot.slane %v2698, 2
    %v2700 = vmax.f32 %v2698, %v2699
    %v2701 = vrot.slane %v2700, 1
    %v2702 = vmax.f32 %v2700, %v2701
    %v2703 = vmax.f32 %v2469, %v2475
    %v2704 = vmax.f32 %v2703, %v2481
    %v2705 = vrot.slane %v2704, 4
    %v2706 = vmax.f32 %v2704, %v2705
    %v2707 = vrot.slane %v2706, 2
    %v2708 = vmax.f32 %v2706, %v2707
    %v2709 = vrot.slane %v2708, 1
    %v2710 = vmax.f32 %v2708, %v2709
    %v2711 = vmax.f32 %v2470, %v2476
    %v2712 = vmax.f32 %v2711, %v2482
    %v2713 = vrot.slane %v2712, 4
    %v2714 = vmax.f32 %v2712, %v2713
    %v2715 = vrot.slane %v2714, 2
    %v2716 = vmax.f32 %v2714, %v2715
    %v2717 = vrot.slane %v2716, 1
    %v2718 = vmax.f32 %v2716, %v2717
    %v2719 = vmax.f32 %v2471, %v2477
    %v2720 = vmax.f32 %v2719, %v2483
    %v2721 = vrot.slane %v2720, 4
    %v2722 = vmax.f32 %v2720, %v2721
    %v2723 = vrot.slane %v2722, 2
    %v2724 = vmax.f32 %v2722, %v2723
    %v2725 = vrot.slane %v2724, 1
    %v2726 = vmax.f32 %v2724, %v2725
    %v2727 = vmax.f32 %v2472, %v2478
    %v2728 = vmax.f32 %v2727, %v2484
    %v2729 = vrot.slane %v2728, 4
    %v2730 = vmax.f32 %v2728, %v2729
    %v2731 = vrot.slane %v2730, 2
    %v2732 = vmax.f32 %v2730, %v2731
    %v2733 = vrot.slane %v2732, 1
    %v2734 = vmax.f32 %v2732, %v2733
    %v2735 = vmax.f32 %v2473, %v2479
    %v2736 = vmax.f32 %v2735, %v2485
    %v2737 = vrot.slane %v2736, 4
    %v2738 = vmax.f32 %v2736, %v2737
    %v2739 = vrot.slane %v2738, 2
    %v2740 = vmax.f32 %v2738, %v2739
    %v2741 = vrot.slane %v2740, 1
    %v2742 = vmax.f32 %v2740, %v2741
    %v2743 = vmax.f32 %v2474, %v2480
    %v2744 = vmax.f32 %v2743, %v2486
    %v2745 = vrot.slane %v2744, 4
    %v2746 = vmax.f32 %v2744, %v2745
    %v2747 = vrot.slane %v2746, 2
    %v2748 = vmax.f32 %v2746, %v2747
    %v2749 = vrot.slane %v2748, 1
    %v2750 = vmax.f32 %v2748, %v2749
    %v2751 = vmax.f32 %v2487, %v2493
    %v2752 = vmax.f32 %v2751, %v2499
    %v2753 = vrot.slane %v2752, 4
    %v2754 = vmax.f32 %v2752, %v2753
    %v2755 = vrot.slane %v2754, 2
    %v2756 = vmax.f32 %v2754, %v2755
    %v2757 = vrot.slane %v2756, 1
    %v2758 = vmax.f32 %v2756, %v2757
    %v2759 = vmax.f32 %v2488, %v2494
    %v2760 = vmax.f32 %v2759, %v2500
    %v2761 = vrot.slane %v2760, 4
    %v2762 = vmax.f32 %v2760, %v2761
    %v2763 = vrot.slane %v2762, 2
    %v2764 = vmax.f32 %v2762, %v2763
    %v2765 = vrot.slane %v2764, 1
    %v2766 = vmax.f32 %v2764, %v2765
    %v2767 = vmax.f32 %v2489, %v2495
    %v2768 = vmax.f32 %v2767, %v2501
    %v2769 = vrot.slane %v2768, 4
    %v2770 = vmax.f32 %v2768, %v2769
    %v2771 = vrot.slane %v2770, 2
    %v2772 = vmax.f32 %v2770, %v2771
    %v2773 = vrot.slane %v2772, 1
    %v2774 = vmax.f32 %v2772, %v2773
    %v2775 = vmax.f32 %v2490, %v2496
    %v2776 = vmax.f32 %v2775, %v2502
    %v2777 = vrot.slane %v2776, 4
    %v2778 = vmax.f32 %v2776, %v2777
    %v2779 = vrot.slane %v2778, 2
    %v2780 = vmax.f32 %v2778, %v2779
    %v2781 = vrot.slane %v2780, 1
    %v2782 = vmax.f32 %v2780, %v2781
    %v2783 = vmax.f32 %v2491, %v2497
    %v2784 = vmax.f32 %v2783, %v2503
    %v2785 = vrot.slane %v2784, 4
    %v2786 = vmax.f32 %v2784, %v2785
    %v2787 = vrot.slane %v2786, 2
    %v2788 = vmax.f32 %v2786, %v2787
    %v2789 = vrot.slane %v2788, 1
    %v2790 = vmax.f32 %v2788, %v2789
    %v2791 = vmax.f32 %v2492, %v2498
    %v2792 = vmax.f32 %v2791, %v2504
    %v2793 = vrot.slane %v2792, 4
    %v2794 = vmax.f32 %v2792, %v2793
    %v2795 = vrot.slane %v2794, 2
    %v2796 = vmax.f32 %v2794, %v2795
    %v2797 = vrot.slane %v2796, 1
    %v2798 = vmax.f32 %v2796, %v2797
    %v2799 = vmax.f32 %v2505, %v2511
    %v2800 = vmax.f32 %v2799, %v2517
    %v2801 = vrot.slane %v2800, 4
    %v2802 = vmax.f32 %v2800, %v2801
    %v2803 = vrot.slane %v2802, 2
    %v2804 = vmax.f32 %v2802, %v2803
    %v2805 = vrot.slane %v2804, 1
    %v2806 = vmax.f32 %v2804, %v2805
    %v2807 = vmax.f32 %v2506, %v2512
    %v2808 = vmax.f32 %v2807, %v2518
    %v2809 = vrot.slane %v2808, 4
    %v2810 = vmax.f32 %v2808, %v2809
    %v2811 = vrot.slane %v2810, 2
    %v2812 = vmax.f32 %v2810, %v2811
    %v2813 = vrot.slane %v2812, 1
    %v2814 = vmax.f32 %v2812, %v2813
    %v2815 = vmax.f32 %v2507, %v2513
    %v2816 = vmax.f32 %v2815, %v2519
    %v2817 = vrot.slane %v2816, 4
    %v2818 = vmax.f32 %v2816, %v2817
    %v2819 = vrot.slane %v2818, 2
    %v2820 = vmax.f32 %v2818, %v2819
    %v2821 = vrot.slane %v2820, 1
    %v2822 = vmax.f32 %v2820, %v2821
    %v2823 = vmax.f32 %v2508, %v2514
    %v2824 = vmax.f32 %v2823, %v2520
    %v2825 = vrot.slane %v2824, 4
    %v2826 = vmax.f32 %v2824, %v2825
    %v2827 = vrot.slane %v2826, 2
    %v2828 = vmax.f32 %v2826, %v2827
    %v2829 = vrot.slane %v2828, 1
    %v2830 = vmax.f32 %v2828, %v2829
    %v2831 = vmax.f32 %v2509, %v2515
    %v2832 = vmax.f32 %v2831, %v2521
    %v2833 = vrot.slane %v2832, 4
    %v2834 = vmax.f32 %v2832, %v2833
    %v2835 = vrot.slane %v2834, 2
    %v2836 = vmax.f32 %v2834, %v2835
    %v2837 = vrot.slane %v2836, 1
    %v2838 = vmax.f32 %v2836, %v2837
    %v2839 = vmax.f32 %v2510, %v2516
    %v2840 = vmax.f32 %v2839, %v2522
    %v2841 = vrot.slane %v2840, 4
    %v2842 = vmax.f32 %v2840, %v2841
    %v2843 = vrot.slane %v2842, 2
    %v2844 = vmax.f32 %v2842, %v2843
    %v2845 = vrot.slane %v2844, 1
    %v2846 = vmax.f32 %v2844, %v2845
    %v2847 = vmax.f32 %v2523, %v2529
    %v2848 = vmax.f32 %v2847, %v2535
    %v2849 = vrot.slane %v2848, 4
    %v2850 = vmax.f32 %v2848, %v2849
    %v2851 = vrot.slane %v2850, 2
    %v2852 = vmax.f32 %v2850, %v2851
    %v2853 = vrot.slane %v2852, 1
    %v2854 = vmax.f32 %v2852, %v2853
    %v2855 = vmax.f32 %v2524, %v2530
    %v2856 = vmax.f32 %v2855, %v2536
    %v2857 = vrot.slane %v2856, 4
    %v2858 = vmax.f32 %v2856, %v2857
    %v2859 = vrot.slane %v2858, 2
    %v2860 = vmax.f32 %v2858, %v2859
    %v2861 = vrot.slane %v2860, 1
    %v2862 = vmax.f32 %v2860, %v2861
    %v2863 = vmax.f32 %v2525, %v2531
    %v2864 = vmax.f32 %v2863, %v2537
    %v2865 = vrot.slane %v2864, 4
    %v2866 = vmax.f32 %v2864, %v2865
    %v2867 = vrot.slane %v2866, 2
    %v2868 = vmax.f32 %v2866, %v2867
    %v2869 = vrot.slane %v2868, 1
    %v2870 = vmax.f32 %v2868, %v2869
    %v2871 = vmax.f32 %v2526, %v2532
    %v2872 = vmax.f32 %v2871, %v2538
    %v2873 = vrot.slane %v2872, 4
    %v2874 = vmax.f32 %v2872, %v2873
    %v2875 = vrot.slane %v2874, 2
    %v2876 = vmax.f32 %v2874, %v2875
    %v2877 = vrot.slane %v2876, 1
    %v2878 = vmax.f32 %v2876, %v2877
    %v2879 = vmax.f32 %v2527, %v2533
    %v2880 = vmax.f32 %v2879, %v2539
    %v2881 = vrot.slane %v2880, 4
    %v2882 = vmax.f32 %v2880, %v2881
    %v2883 = vrot.slane %v2882, 2
    %v2884 = vmax.f32 %v2882, %v2883
    %v2885 = vrot.slane %v2884, 1
    %v2886 = vmax.f32 %v2884, %v2885
    %v2887 = vmax.f32 %v2528, %v2534
    %v2888 = vmax.f32 %v2887, %v2540
    %v2889 = vrot.slane %v2888, 4
    %v2890 = vmax.f32 %v2888, %v2889
    %v2891 = vrot.slane %v2890, 2
    %v2892 = vmax.f32 %v2890, %v2891
    %v2893 = vrot.slane %v2892, 1
    %v2894 = vmax.f32 %v2892, %v2893
    %v2895 = vmax.f32 %v2541, %v2547
    %v2896 = vmax.f32 %v2895, %v2553
    %v2897 = vrot.slane %v2896, 4
    %v2898 = vmax.f32 %v2896, %v2897
    %v2899 = vrot.slane %v2898, 2
    %v2900 = vmax.f32 %v2898, %v2899
    %v2901 = vrot.slane %v2900, 1
    %v2902 = vmax.f32 %v2900, %v2901
    %v2903 = vmax.f32 %v2542, %v2548
    %v2904 = vmax.f32 %v2903, %v2554
    %v2905 = vrot.slane %v2904, 4
    %v2906 = vmax.f32 %v2904, %v2905
    %v2907 = vrot.slane %v2906, 2
    %v2908 = vmax.f32 %v2906, %v2907
    %v2909 = vrot.slane %v2908, 1
    %v2910 = vmax.f32 %v2908, %v2909
    %v2911 = vmax.f32 %v2543, %v2549
    %v2912 = vmax.f32 %v2911, %v2555
    %v2913 = vrot.slane %v2912, 4
    %v2914 = vmax.f32 %v2912, %v2913
    %v2915 = vrot.slane %v2914, 2
    %v2916 = vmax.f32 %v2914, %v2915
    %v2917 = vrot.slane %v2916, 1
    %v2918 = vmax.f32 %v2916, %v2917
    %v2919 = vmax.f32 %v2544, %v2550
    %v2920 = vmax.f32 %v2919, %v2556
    %v2921 = vrot.slane %v2920, 4
    %v2922 = vmax.f32 %v2920, %v2921
    %v2923 = vrot.slane %v2922, 2
    %v2924 = vmax.f32 %v2922, %v2923
    %v2925 = vrot.slane %v2924, 1
    %v2926 = vmax.f32 %v2924, %v2925
    %v2927 = vmax.f32 %v2545, %v2551
    %v2928 = vmax.f32 %v2927, %v2557
    %v2929 = vrot.slane %v2928, 4
    %v2930 = vmax.f32 %v2928, %v2929
    %v2931 = vrot.slane %v2930, 2
    %v2932 = vmax.f32 %v2930, %v2931
    %v2933 = vrot.slane %v2932, 1
    %v2934 = vmax.f32 %v2932, %v2933
    %v2935 = vmax.f32 %v2546, %v2552
    %v2936 = vmax.f32 %v2935, %v2558
    %v2937 = vrot.slane %v2936, 4
    %v2938 = vmax.f32 %v2936, %v2937
    %v2939 = vrot.slane %v2938, 2
    %v2940 = vmax.f32 %v2938, %v2939
    %v2941 = vrot.slane %v2940, 1
    %v2942 = vmax.f32 %v2940, %v2941
    %v2943 = vld [vmem:[%s3] sm:$0x3f]
    %v2945 = vlaneseq
    %v2946 = vshrl.u32 %v2945, 7
    %v2947 = vsub.s32 0, %v2946
    %v2948 = vrot.slane %v2943, %v2947
    %v2949 = vlaneseq
    %v2950 = vshrl.u32 %v2949, 7
    %v2951 = vsub.s32 1, %v2950
    %v2952 = vrot.slane %v2943, %v2951
    %v2953 = vlaneseq
    %v2954 = vshrl.u32 %v2953, 7
    %v2955 = vsub.s32 2, %v2954
    %v2956 = vrot.slane %v2943, %v2955
    %v2957 = vlaneseq
    %v2958 = vshrl.u32 %v2957, 7
    %v2959 = vsub.s32 3, %v2958
    %v2960 = vrot.slane %v2943, %v2959
    %v2961 = vlaneseq
    %v2962 = vshrl.u32 %v2961, 7
    %v2963 = vsub.s32 4, %v2962
    %v2964 = vrot.slane %v2943, %v2963
    %v2965 = vlaneseq
    %v2966 = vshrl.u32 %v2965, 7
    %v2967 = vsub.s32 5, %v2966
    %v2968 = vrot.slane %v2943, %v2967
    %v2975 = vadd.f32 %v2566, %v2948
    %v2976 = vadd.f32 %v2574, %v2952
    %v2977 = vadd.f32 %v2582, %v2956
    %v2978 = vadd.f32 %v2590, %v2960
    %v2979 = vadd.f32 %v2598, %v2964
    %v2980 = vadd.f32 %v2606, %v2968
    %v2981 = vadd.f32 %v2614, %v2948
    %v2982 = vadd.f32 %v2622, %v2952
    %v2983 = vadd.f32 %v2630, %v2956
    %v2984 = vadd.f32 %v2638, %v2960
    %v2985 = vadd.f32 %v2646, %v2964
    %v2986 = vadd.f32 %v2654, %v2968
    %v2987 = vadd.f32 %v2662, %v2948
    %v2988 = vadd.f32 %v2670, %v2952
    %v2989 = vadd.f32 %v2678, %v2956
    %v2990 = vadd.f32 %v2686, %v2960
    %v2991 = vadd.f32 %v2694, %v2964
    %v2992 = vadd.f32 %v2702, %v2968
    %v2993 = vadd.f32 %v2710, %v2948
    %v2994 = vadd.f32 %v2718, %v2952
    %v2995 = vadd.f32 %v2726, %v2956
    %v2996 = vadd.f32 %v2734, %v2960
    %v2997 = vadd.f32 %v2742, %v2964
    %v2998 = vadd.f32 %v2750, %v2968
    %v2999 = vadd.f32 %v2758, %v2948
    %v3000 = vadd.f32 %v2766, %v2952
    %v3001 = vadd.f32 %v2774, %v2956
    %v3002 = vadd.f32 %v2782, %v2960
    %v3003 = vadd.f32 %v2790, %v2964
    %v3004 = vadd.f32 %v2798, %v2968
    %v3005 = vadd.f32 %v2806, %v2948
    %v3006 = vadd.f32 %v2814, %v2952
    %v3007 = vadd.f32 %v2822, %v2956
    %v3008 = vadd.f32 %v2830, %v2960
    %v3009 = vadd.f32 %v2838, %v2964
    %v3010 = vadd.f32 %v2846, %v2968
    %v3011 = vadd.f32 %v2854, %v2948
    %v3012 = vadd.f32 %v2862, %v2952
    %v3013 = vadd.f32 %v2870, %v2956
    %v3014 = vadd.f32 %v2878, %v2960
    %v3015 = vadd.f32 %v2886, %v2964
    %v3016 = vadd.f32 %v2894, %v2968
    %v3017 = vadd.f32 %v2902, %v2948
    %v3018 = vadd.f32 %v2910, %v2952
    %v3019 = vadd.f32 %v2918, %v2956
    %v3020 = vadd.f32 %v2926, %v2960
    %v3021 = vadd.f32 %v2934, %v2964
    %v3022 = vadd.f32 %v2942, %v2968
    %vm3023 = vcmp.gt.f32.partialorder %v2975, 0.0
    %vm3024 = vcmp.gt.f32.partialorder %v2976, 0.0
    %vm3025 = vcmp.gt.f32.partialorder %v2977, 0.0
    %vm3026 = vcmp.gt.f32.partialorder %v2978, 0.0
    %vm3027 = vcmp.gt.f32.partialorder %v2979, 0.0
    %vm3028 = vcmp.gt.f32.partialorder %v2980, 0.0
    %vm3029 = vcmp.gt.f32.partialorder %v2981, 0.0
    %vm3030 = vcmp.gt.f32.partialorder %v2982, 0.0
    %vm3031 = vcmp.gt.f32.partialorder %v2983, 0.0
    %vm3032 = vcmp.gt.f32.partialorder %v2984, 0.0
    %vm3033 = vcmp.gt.f32.partialorder %v2985, 0.0
    %vm3034 = vcmp.gt.f32.partialorder %v2986, 0.0
    %vm3035 = vcmp.gt.f32.partialorder %v2987, 0.0
    %vm3036 = vcmp.gt.f32.partialorder %v2988, 0.0
    %vm3037 = vcmp.gt.f32.partialorder %v2989, 0.0
    %vm3038 = vcmp.gt.f32.partialorder %v2990, 0.0
    %vm3039 = vcmp.gt.f32.partialorder %v2991, 0.0
    %vm3040 = vcmp.gt.f32.partialorder %v2992, 0.0
    %vm3041 = vcmp.gt.f32.partialorder %v2993, 0.0
    %vm3042 = vcmp.gt.f32.partialorder %v2994, 0.0
    %vm3043 = vcmp.gt.f32.partialorder %v2995, 0.0
    %vm3044 = vcmp.gt.f32.partialorder %v2996, 0.0
    %vm3045 = vcmp.gt.f32.partialorder %v2997, 0.0
    %vm3046 = vcmp.gt.f32.partialorder %v2998, 0.0
    %vm3047 = vcmp.gt.f32.partialorder %v2999, 0.0
    %vm3048 = vcmp.gt.f32.partialorder %v3000, 0.0
    %vm3049 = vcmp.gt.f32.partialorder %v3001, 0.0
    %vm3050 = vcmp.gt.f32.partialorder %v3002, 0.0
    %vm3051 = vcmp.gt.f32.partialorder %v3003, 0.0
    %vm3052 = vcmp.gt.f32.partialorder %v3004, 0.0
    %vm3053 = vcmp.gt.f32.partialorder %v3005, 0.0
    %vm3054 = vcmp.gt.f32.partialorder %v3006, 0.0
    %vm3055 = vcmp.gt.f32.partialorder %v3007, 0.0
    %vm3056 = vcmp.gt.f32.partialorder %v3008, 0.0
    %vm3057 = vcmp.gt.f32.partialorder %v3009, 0.0
    %vm3058 = vcmp.gt.f32.partialorder %v3010, 0.0
    %vm3059 = vcmp.gt.f32.partialorder %v3011, 0.0
    %vm3060 = vcmp.gt.f32.partialorder %v3012, 0.0
    %vm3061 = vcmp.gt.f32.partialorder %v3013, 0.0
    %vm3062 = vcmp.gt.f32.partialorder %v3014, 0.0
    %vm3063 = vcmp.gt.f32.partialorder %v3015, 0.0
    %vm3064 = vcmp.gt.f32.partialorder %v3016, 0.0
    %vm3065 = vcmp.gt.f32.partialorder %v3017, 0.0
    %vm3066 = vcmp.gt.f32.partialorder %v3018, 0.0
    %vm3067 = vcmp.gt.f32.partialorder %v3019, 0.0
    %vm3068 = vcmp.gt.f32.partialorder %v3020, 0.0
    %vm3069 = vcmp.gt.f32.partialorder %v3021, 0.0
    %vm3070 = vcmp.gt.f32.partialorder %v3022, 0.0
    %v3071 = vmul.f32 %v2975, 0.01
    %v3072 = vmul.f32 %v2976, 0.01
    %v3073 = vmul.f32 %v2977, 0.01
    %v3074 = vmul.f32 %v2978, 0.01
    %v3075 = vmul.f32 %v2979, 0.01
    %v3076 = vmul.f32 %v2980, 0.01
    %v3077 = vmul.f32 %v2981, 0.01
    %v3078 = vmul.f32 %v2982, 0.01
    %v3079 = vmul.f32 %v2983, 0.01
    %v3080 = vmul.f32 %v2984, 0.01
    %v3081 = vmul.f32 %v2985, 0.01
    %v3082 = vmul.f32 %v2986, 0.01
    %v3083 = vmul.f32 %v2987, 0.01
    %v3084 = vmul.f32 %v2988, 0.01
    %v3085 = vmul.f32 %v2989, 0.01
    %v3086 = vmul.f32 %v2990, 0.01
    %v3087 = vmul.f32 %v2991, 0.01
    %v3088 = vmul.f32 %v2992, 0.01
    %v3089 = vmul.f32 %v2993, 0.01
    %v3090 = vmul.f32 %v2994, 0.01
    %v3091 = vmul.f32 %v2995, 0.01
    %v3092 = vmul.f32 %v2996, 0.01
    %v3093 = vmul.f32 %v2997, 0.01
    %v3094 = vmul.f32 %v2998, 0.01
    %v3095 = vmul.f32 %v2999, 0.01
    %v3096 = vmul.f32 %v3000, 0.01
    %v3097 = vmul.f32 %v3001, 0.01
    %v3098 = vmul.f32 %v3002, 0.01
    %v3099 = vmul.f32 %v3003, 0.01
    %v3100 = vmul.f32 %v3004, 0.01
    %v3101 = vmul.f32 %v3005, 0.01
    %v3102 = vmul.f32 %v3006, 0.01
    %v3103 = vmul.f32 %v3007, 0.01
    %v3104 = vmul.f32 %v3008, 0.01
    %v3105 = vmul.f32 %v3009, 0.01
    %v3106 = vmul.f32 %v3010, 0.01
    %v3107 = vmul.f32 %v3011, 0.01
    %v3108 = vmul.f32 %v3012, 0.01
    %v3109 = vmul.f32 %v3013, 0.01
    %v3110 = vmul.f32 %v3014, 0.01
    %v3111 = vmul.f32 %v3015, 0.01
    %v3112 = vmul.f32 %v3016, 0.01
    %v3113 = vmul.f32 %v3017, 0.01
    %v3114 = vmul.f32 %v3018, 0.01
    %v3115 = vmul.f32 %v3019, 0.01
    %v3116 = vmul.f32 %v3020, 0.01
    %v3117 = vmul.f32 %v3021, 0.01
    %v3118 = vmul.f32 %v3022, 0.01
    %v3119 = vsel %vm3023, %v2975, %v3071
    %v3120 = vsel %vm3024, %v2976, %v3072
    %v3121 = vsel %vm3025, %v2977, %v3073
    %v3122 = vsel %vm3026, %v2978, %v3074
    %v3123 = vsel %vm3027, %v2979, %v3075
    %v3124 = vsel %vm3028, %v2980, %v3076
    %v3125 = vsel %vm3029, %v2981, %v3077
    %v3126 = vsel %vm3030, %v2982, %v3078
    %v3127 = vsel %vm3031, %v2983, %v3079
    %v3128 = vsel %vm3032, %v2984, %v3080
    %v3129 = vsel %vm3033, %v2985, %v3081
    %v3130 = vsel %vm3034, %v2986, %v3082
    %v3131 = vsel %vm3035, %v2987, %v3083
    %v3132 = vsel %vm3036, %v2988, %v3084
    %v3133 = vsel %vm3037, %v2989, %v3085
    %v3134 = vsel %vm3038, %v2990, %v3086
    %v3135 = vsel %vm3039, %v2991, %v3087
    %v3136 = vsel %vm3040, %v2992, %v3088
    %v3137 = vsel %vm3041, %v2993, %v3089
    %v3138 = vsel %vm3042, %v2994, %v3090
    %v3139 = vsel %vm3043, %v2995, %v3091
    %v3140 = vsel %vm3044, %v2996, %v3092
    %v3141 = vsel %vm3045, %v2997, %v3093
    %v3142 = vsel %vm3046, %v2998, %v3094
    %v3143 = vsel %vm3047, %v2999, %v3095
    %v3144 = vsel %vm3048, %v3000, %v3096
    %v3145 = vsel %vm3049, %v3001, %v3097
    %v3146 = vsel %vm3050, %v3002, %v3098
    %v3147 = vsel %vm3051, %v3003, %v3099
    %v3148 = vsel %vm3052, %v3004, %v3100
    %v3149 = vsel %vm3053, %v3005, %v3101
    %v3150 = vsel %vm3054, %v3006, %v3102
    %v3151 = vsel %vm3055, %v3007, %v3103
    %v3152 = vsel %vm3056, %v3008, %v3104
    %v3153 = vsel %vm3057, %v3009, %v3105
    %v3154 = vsel %vm3058, %v3010, %v3106
    %v3155 = vsel %vm3059, %v3011, %v3107
    %v3156 = vsel %vm3060, %v3012, %v3108
    %v3157 = vsel %vm3061, %v3013, %v3109
    %v3158 = vsel %vm3062, %v3014, %v3110
    %v3159 = vsel %vm3063, %v3015, %v3111
    %v3160 = vsel %vm3064, %v3016, %v3112
    %v3161 = vsel %vm3065, %v3017, %v3113
    %v3162 = vsel %vm3066, %v3018, %v3114
    %v3163 = vsel %vm3067, %v3019, %v3115
    %v3164 = vsel %vm3068, %v3020, %v3116
    %v3165 = vsel %vm3069, %v3021, %v3117
    %v3166 = vsel %vm3070, %v3022, %v3118
    %v3215 = vrot.slane %v3125, 7
    %vm3216 = vcmask 1041409
    %v3217 = vsel %vm3216, %v3215, %v3119
    %v3218 = vrot.slane %v3131, 6
    %vm3219 = vcmask 1042434
    %v3220 = vsel %vm3219, %v3218, %v3217
    %v3221 = vrot.slane %v3137, 5
    %vm3222 = vcmask 1043459
    %v3223 = vsel %vm3222, %v3221, %v3220
    %v3224 = vrot.slane %v3143, 4
    %vm3225 = vcmask 1044484
    %v3226 = vsel %vm3225, %v3224, %v3223
    %v3227 = vrot.slane %v3149, 3
    %vm3228 = vcmask 1045509
    %v3229 = vsel %vm3228, %v3227, %v3226
    %v3230 = vrot.slane %v3155, 2
    %vm3231 = vcmask 1046534
    %v3232 = vsel %vm3231, %v3230, %v3229
    %v3233 = vrot.slane %v3161, 1
    %vm3234 = vcmask 1047559
    %v3235 = vsel %vm3234, %v3233, %v3232
    %v3236 = vrot.slane %v3126, 7
    %v3237 = vsel %vm3216, %v3236, %v3120
    %v3238 = vrot.slane %v3132, 6
    %v3239 = vsel %vm3219, %v3238, %v3237
    %v3240 = vrot.slane %v3138, 5
    %v3241 = vsel %vm3222, %v3240, %v3239
    %v3242 = vrot.slane %v3144, 4
    %v3243 = vsel %vm3225, %v3242, %v3241
    %v3244 = vrot.slane %v3150, 3
    %v3245 = vsel %vm3228, %v3244, %v3243
    %v3246 = vrot.slane %v3156, 2
    %v3247 = vsel %vm3231, %v3246, %v3245
    %v3248 = vrot.slane %v3162, 1
    %v3249 = vsel %vm3234, %v3248, %v3247
    %v3250 = vrot.slane %v3127, 7
    %v3251 = vsel %vm3216, %v3250, %v3121
    %v3252 = vrot.slane %v3133, 6
    %v3253 = vsel %vm3219, %v3252, %v3251
    %v3254 = vrot.slane %v3139, 5
    %v3255 = vsel %vm3222, %v3254, %v3253
    %v3256 = vrot.slane %v3145, 4
    %v3257 = vsel %vm3225, %v3256, %v3255
    %v3258 = vrot.slane %v3151, 3
    %v3259 = vsel %vm3228, %v3258, %v3257
    %v3260 = vrot.slane %v3157, 2
    %v3261 = vsel %vm3231, %v3260, %v3259
    %v3262 = vrot.slane %v3163, 1
    %v3263 = vsel %vm3234, %v3262, %v3261
    %v3264 = vrot.slane %v3128, 7
    %v3265 = vsel %vm3216, %v3264, %v3122
    %v3266 = vrot.slane %v3134, 6
    %v3267 = vsel %vm3219, %v3266, %v3265
    %v3268 = vrot.slane %v3140, 5
    %v3269 = vsel %vm3222, %v3268, %v3267
    %v3270 = vrot.slane %v3146, 4
    %v3271 = vsel %vm3225, %v3270, %v3269
    %v3272 = vrot.slane %v3152, 3
    %v3273 = vsel %vm3228, %v3272, %v3271
    %v3274 = vrot.slane %v3158, 2
    %v3275 = vsel %vm3231, %v3274, %v3273
    %v3276 = vrot.slane %v3164, 1
    %v3277 = vsel %vm3234, %v3276, %v3275
    %v3278 = vrot.slane %v3129, 7
    %v3279 = vsel %vm3216, %v3278, %v3123
    %v3280 = vrot.slane %v3135, 6
    %v3281 = vsel %vm3219, %v3280, %v3279
    %v3282 = vrot.slane %v3141, 5
    %v3283 = vsel %vm3222, %v3282, %v3281
    %v3284 = vrot.slane %v3147, 4
    %v3285 = vsel %vm3225, %v3284, %v3283
    %v3286 = vrot.slane %v3153, 3
    %v3287 = vsel %vm3228, %v3286, %v3285
    %v3288 = vrot.slane %v3159, 2
    %v3289 = vsel %vm3231, %v3288, %v3287
    %v3290 = vrot.slane %v3165, 1
    %v3291 = vsel %vm3234, %v3290, %v3289
    %v3292 = vrot.slane %v3130, 7
    %v3293 = vsel %vm3216, %v3292, %v3124
    %v3294 = vrot.slane %v3136, 6
    %v3295 = vsel %vm3219, %v3294, %v3293
    %v3296 = vrot.slane %v3142, 5
    %v3297 = vsel %vm3222, %v3296, %v3295
    %v3298 = vrot.slane %v3148, 4
    %v3299 = vsel %vm3225, %v3298, %v3297
    %v3300 = vrot.slane %v3154, 3
    %v3301 = vsel %vm3228, %v3300, %v3299
    %v3302 = vrot.slane %v3160, 2
    %v3303 = vsel %vm3231, %v3302, %v3301
    %v3304 = vrot.slane %v3166, 1
    %v3305 = vsel %vm3234, %v3304, %v3303
    %3312 = vst [vmem:[%s6] sm:$0xff] %v3235
    %3313 = vst [vmem:[%s6 + $0x8] sm:$0xff] %v3249
    %3314 = vst [vmem:[%s6 + $0x10] sm:$0xff] %v3263
    %3315 = vst [vmem:[%s6 + $0x18] sm:$0xff] %v3277
    %3316 = vst [vmem:[%s6 + $0x20] sm:$0xff] %v3291
    %3317 = vst [vmem:[%s6 + $0x28] sm:$0xff] %v3305
    %v3318 = vld [vmem:[%s4] sm:$0xff]
    %v3319 = vld [vmem:[%s4 + $0x8] sm:$0xff]
    %v3320 = vld [vmem:[%s4 + $0x10] sm:$0xff]
    %v3321 = vld [vmem:[%s4 + $0x18] sm:$0xff]
    %v3322 = vld [vmem:[%s4 + $0x20] sm:$0xff]
    %v3323 = vld [vmem:[%s4 + $0x28] sm:$0xff]
    %v3324 = vld [vmem:[%s4 + $0x30] sm:$0xff]
    %v3325 = vld [vmem:[%s4 + $0x38] sm:$0xff]
    %v3326 = vld [vmem:[%s4 + $0x40] sm:$0xff]
    %v3327 = vld [vmem:[%s4 + $0x48] sm:$0xff]
    %v3328 = vld [vmem:[%s4 + $0x50] sm:$0xff]
    %v3329 = vld [vmem:[%s4 + $0x58] sm:$0xff]
    %v3330 = vld [vmem:[%s4 + $0x60] sm:$0xff]
    %v3331 = vld [vmem:[%s4 + $0x68] sm:$0xff]
    %v3332 = vld [vmem:[%s4 + $0x70] sm:$0xff]
    %v3333 = vld [vmem:[%s4 + $0x78] sm:$0xff]
    %v3334 = vld [vmem:[%s4 + $0x80] sm:$0xff]
    %v3335 = vld [vmem:[%s4 + $0x88] sm:$0xff]
    %v3336 = vld [vmem:[%s4 + $0x90] sm:$0xff]
    %v3337 = vld [vmem:[%s4 + $0x98] sm:$0xff]
    %v3338 = vld [vmem:[%s4 + $0xa0] sm:$0xff]
    %v3339 = vld [vmem:[%s4 + $0xa8] sm:$0xff]
    %v3340 = vld [vmem:[%s4 + $0xb0] sm:$0xff]
    %v3341 = vld [vmem:[%s4 + $0xb8] sm:$0xff]
    %v3342 = vld [vmem:[%s4 + $0xc0] sm:$0xff]
    %v3343 = vld [vmem:[%s4 + $0xc8] sm:$0xff]
    %v3344 = vld [vmem:[%s4 + $0xd0] sm:$0xff]
    %v3345 = vld [vmem:[%s4 + $0xd8] sm:$0xff]
    %v3346 = vld [vmem:[%s4 + $0xe0] sm:$0xff]
    %v3347 = vld [vmem:[%s4 + $0xe8] sm:$0xff]
    %v3348 = vld [vmem:[%s4 + $0xf0] sm:$0xff]
    %v3349 = vld [vmem:[%s4 + $0xf8] sm:$0xff]
    %v3350 = vld [vmem:[%s4 + $0x100] sm:$0xff]
    %v3351 = vld [vmem:[%s4 + $0x108] sm:$0xff]
    %v3352 = vld [vmem:[%s4 + $0x110] sm:$0xff]
    %v3353 = vld [vmem:[%s4 + $0x118] sm:$0xff]
    %v3354 = vld [vmem:[%s4 + $0x120] sm:$0xff]
    %v3355 = vld [vmem:[%s4 + $0x128] sm:$0xff]
    %v3356 = vld [vmem:[%s4 + $0x130] sm:$0xff]
    %v3357 = vld [vmem:[%s4 + $0x138] sm:$0xff]
    %v3358 = vld [vmem:[%s4 + $0x140] sm:$0xff]
    %v3359 = vld [vmem:[%s4 + $0x148] sm:$0xff]
    %v3360 = vld [vmem:[%s4 + $0x150] sm:$0xff]
    %v3361 = vld [vmem:[%s4 + $0x158] sm:$0xff]
    %v3362 = vld [vmem:[%s4 + $0x160] sm:$0xff]
    %v3363 = vld [vmem:[%s4 + $0x168] sm:$0xff]
    %v3364 = vld [vmem:[%s4 + $0x170] sm:$0xff]
    %v3365 = vld [vmem:[%s4 + $0x178] sm:$0xff]
    %v3366 = vld [vmem:[%s4 + $0x180] sm:$0xff]
    %v3367 = vld [vmem:[%s4 + $0x188] sm:$0xff]
    %v3368 = vld [vmem:[%s4 + $0x190] sm:$0xff]
    %v3369 = vld [vmem:[%s4 + $0x198] sm:$0xff]
    %v3370 = vld [vmem:[%s4 + $0x1a0] sm:$0xff]
    %v3371 = vld [vmem:[%s4 + $0x1a8] sm:$0xff]
    %v3372 = vld [vmem:[%s4 + $0x1b0] sm:$0xff]
    %v3373 = vld [vmem:[%s4 + $0x1b8] sm:$0xff]
    %v3374 = vld [vmem:[%s4 + $0x1c0] sm:$0xff]
    %v3375 = vld [vmem:[%s4 + $0x1c8] sm:$0xff]
    %v3376 = vld [vmem:[%s4 + $0x1d0] sm:$0xff]
    %v3377 = vld [vmem:[%s4 + $0x1d8] sm:$0xff]
    %v3378 = vld [vmem:[%s4 + $0x1e0] sm:$0xff]
    %v3379 = vld [vmem:[%s4 + $0x1e8] sm:$0xff]
    %v3380 = vld [vmem:[%s4 + $0x1f0] sm:$0xff]
    %v3381 = vld [vmem:[%s4 + $0x1f8] sm:$0xff]
    %v3382 = vld [vmem:[%s4 + $0x200] sm:$0xff]
    %v3383 = vld [vmem:[%s4 + $0x208] sm:$0xff]
    %v3384 = vld [vmem:[%s4 + $0x210] sm:$0xff]
    %v3385 = vld [vmem:[%s4 + $0x218] sm:$0xff]
    %v3386 = vld [vmem:[%s4 + $0x220] sm:$0xff]
    %v3387 = vld [vmem:[%s4 + $0x228] sm:$0xff]
    %v3388 = vld [vmem:[%s4 + $0x230] sm:$0xff]
    %v3389 = vld [vmem:[%s4 + $0x238] sm:$0xff]
    %v3390 = vld [vmem:[%s4 + $0x240] sm:$0xff]
    %v3391 = vld [vmem:[%s4 + $0x248] sm:$0xff]
    %v3392 = vld [vmem:[%s4 + $0x250] sm:$0xff]
    %v3393 = vld [vmem:[%s4 + $0x258] sm:$0xff]
    %v3394 = vld [vmem:[%s4 + $0x260] sm:$0xff]
    %v3395 = vld [vmem:[%s4 + $0x268] sm:$0xff]
    %v3396 = vld [vmem:[%s4 + $0x270] sm:$0xff]
    %v3397 = vld [vmem:[%s4 + $0x278] sm:$0xff]
    %v3398 = vld [vmem:[%s4 + $0x280] sm:$0xff]
    %v3399 = vld [vmem:[%s4 + $0x288] sm:$0xff]
    %v3400 = vld [vmem:[%s4 + $0x290] sm:$0xff]
    %v3401 = vld [vmem:[%s4 + $0x298] sm:$0xff]
    %v3402 = vld [vmem:[%s4 + $0x2a0] sm:$0xff]
    %v3403 = vld [vmem:[%s4 + $0x2a8] sm:$0xff]
    %v3404 = vld [vmem:[%s4 + $0x2b0] sm:$0xff]
    %v3405 = vld [vmem:[%s4 + $0x2b8] sm:$0xff]
    %v3406 = vld [vmem:[%s4 + $0x2c0] sm:$0xff]
    %v3407 = vld [vmem:[%s4 + $0x2c8] sm:$0xff]
    %v3408 = vld [vmem:[%s4 + $0x2d0] sm:$0xff]
    %v3409 = vld [vmem:[%s4 + $0x2d8] sm:$0xff]
    %v3410 = vld [vmem:[%s4 + $0x2e0] sm:$0xff]
    %v3411 = vld [vmem:[%s4 + $0x2e8] sm:$0xff]
    %v3412 = vld [vmem:[%s4 + $0x2f0] sm:$0xff]
    %v3413 = vld [vmem:[%s4 + $0x2f8] sm:$0xff]
    %v3414 = vld [vmem:[%s5] sm:$0x1]
    %v3416 = vlaneseq
    %v3417 = vshrl.u32 %v3416, 7
    %v3418 = vsub.s32 0, %v3417
    %v3419 = vrot.slane %v3414, %v3418
    %3421 = vmatprep.subr.mxu0 0.0
    %3422 = vmatpush1.msra.mxu0 %v3333
    %3423 = vmatprep.subr.mxu0 0.0
    %3424 = vmatpush1.msra.mxu0 %v3332
    %3425 = vmatprep.subr.mxu0 0.0
    %3426 = vmatpush1.msra.mxu0 %v3331
    %3427 = vmatprep.subr.mxu0 0.0
    %3428 = vmatpush1.msra.mxu0 %v3330
    %3429 = vmatprep.subr.mxu0 0.0
    %3430 = vmatpush1.msra.mxu0 %v3329
    %3431 = vmatprep.subr.mxu0 0.0
    %3432 = vmatpush1.msra.mxu0 %v3328
    %3433 = vmatprep.subr.mxu0 0.0
    %3434 = vmatpush1.msra.mxu0 %v3327
    %3435 = vmatprep.subr.mxu0 0.0
    %3436 = vmatpush1.msra.mxu0 %v3326
    %3437 = vmatprep.subr.mxu0 0.0
    %3438 = vmatpush1.msra.mxu0 %v3325
    %3439 = vmatprep.subr.mxu0 0.0
    %3440 = vmatpush1.msra.mxu0 %v3324
    %3441 = vmatprep.subr.mxu0 0.0
    %3442 = vmatpush1.msra.mxu0 %v3323
    %3443 = vmatprep.subr.mxu0 0.0
    %3444 = vmatpush1.msra.mxu0 %v3322
    %3445 = vmatprep.subr.mxu0 0.0
    %3446 = vmatpush1.msra.mxu0 %v3321
    %3447 = vmatprep.subr.mxu0 0.0
    %3448 = vmatpush1.msra.mxu0 %v3320
    %3449 = vmatprep.subr.mxu0 0.0
    %3450 = vmatpush1.msra.mxu0 %v3319
    %3451 = vmatprep.subr.mxu0 0.0
    %3452 = vmatpush1.msra.mxu0 %v3318
    %3453 = vmatprep.subr.mxu0 0.0
    %3454 = vmatpush2.msra.mxu0 %v3349
    %3455 = vmatprep.subr.mxu0 0.0
    %3456 = vmatpush2.msra.mxu0 %v3348
    %3457 = vmatprep.subr.mxu0 0.0
    %3458 = vmatpush2.msra.mxu0 %v3347
    %3459 = vmatprep.subr.mxu0 0.0
    %3460 = vmatpush2.msra.mxu0 %v3346
    %3461 = vmatprep.subr.mxu0 0.0
    %3462 = vmatpush2.msra.mxu0 %v3345
    %3463 = vmatprep.subr.mxu0 0.0
    %3464 = vmatpush2.msra.mxu0 %v3344
    %3465 = vmatprep.subr.mxu0 0.0
    %3466 = vmatpush2.msra.mxu0 %v3343
    %3467 = vmatprep.subr.mxu0 0.0
    %3468 = vmatpush2.msra.mxu0 %v3342
    %3469 = vmatprep.subr.mxu0 0.0
    %3470 = vmatpush2.msra.mxu0 %v3341
    %3471 = vmatprep.subr.mxu0 0.0
    %3472 = vmatpush2.msra.mxu0 %v3340
    %3473 = vmatprep.subr.mxu0 0.0
    %3474 = vmatpush2.msra.mxu0 %v3339
    %3475 = vmatprep.subr.mxu0 0.0
    %3476 = vmatpush2.msra.mxu0 %v3338
    %3477 = vmatprep.subr.mxu0 0.0
    %3478 = vmatpush2.msra.mxu0 %v3337
    %3479 = vmatprep.subr.mxu0 0.0
    %3480 = vmatpush2.msra.mxu0 %v3336
    %3481 = vmatprep.subr.mxu0 0.0
    %3482 = vmatpush2.msra.mxu0 %v3335
    %3483 = vmatprep.subr.mxu0 0.0
    %3484 = vmatpush2.msra.mxu0 %v3334
    %3485 = vmatprep.mubr.f32.mxu0 %v3249
    %3486 = vmatmul.mubr.f32.gmra.mxu0 %v3235
    %v3487 = vpop.f32.mrf.mxu0
    %v3488 = vadd.f32 %v3419, %v3487
    %v3489 = vpop.f32.mrf.mxu0
    %3490 = vdwg.mxu0
    %3491 = vmatprep.subr.mxu0 0.0
    %3492 = vmatpush1.msra.mxu0 %v3365
    %3493 = vmatprep.subr.mxu0 0.0
    %3494 = vmatpush1.msra.mxu0 %v3364
    %3495 = vmatprep.subr.mxu0 0.0
    %3496 = vmatpush1.msra.mxu0 %v3363
    %3497 = vmatprep.subr.mxu0 0.0
    %3498 = vmatpush1.msra.mxu0 %v3362
    %3499 = vmatprep.subr.mxu0 0.0
    %3500 = vmatpush1.msra.mxu0 %v3361
    %3501 = vmatprep.subr.mxu0 0.0
    %3502 = vmatpush1.msra.mxu0 %v3360
    %3503 = vmatprep.subr.mxu0 0.0
    %3504 = vmatpush1.msra.mxu0 %v3359
    %3505 = vmatprep.subr.mxu0 0.0
    %3506 = vmatpush1.msra.mxu0 %v3358
    %3507 = vmatprep.subr.mxu0 0.0
    %3508 = vmatpush1.msra.mxu0 %v3357
    %3509 = vmatprep.subr.mxu0 0.0
    %3510 = vmatpush1.msra.mxu0 %v3356
    %3511 = vmatprep.subr.mxu0 0.0
    %3512 = vmatpush1.msra.mxu0 %v3355
    %3513 = vmatprep.subr.mxu0 0.0
    %3514 = vmatpush1.msra.mxu0 %v3354
    %3515 = vmatprep.subr.mxu0 0.0
    %3516 = vmatpush1.msra.mxu0 %v3353
    %3517 = vmatprep.subr.mxu0 0.0
    %3518 = vmatpush1.msra.mxu0 %v3352
    %3519 = vmatprep.subr.mxu0 0.0
    %3520 = vmatpush1.msra.mxu0 %v3351
    %3521 = vmatprep.subr.mxu0 0.0
    %3522 = vmatpush1.msra.mxu0 %v3350
    %3523 = vmatprep.subr.mxu0 0.0
    %3524 = vmatpush2.msra.mxu0 %v3381
    %3525 = vmatprep.subr.mxu0 0.0
    %3526 = vmatpush2.msra.mxu0 %v3380
    %3527 = vmatprep.subr.mxu0 0.0
    %3528 = vmatpush2.msra.mxu0 %v3379
    %3529 = vmatprep.subr.mxu0 0.0
    %3530 = vmatpush2.msra.mxu0 %v3378
    %3531 = vmatprep.subr.mxu0 0.0
    %3532 = vmatpush2.msra.mxu0 %v3377
    %3533 = vmatprep.subr.mxu0 0.0
    %3534 = vmatpush2.msra.mxu0 %v3376
    %3535 = vmatprep.subr.mxu0 0.0
    %3536 = vmatpush2.msra.mxu0 %v3375
    %3537 = vmatprep.subr.mxu0 0.0
    %3538 = vmatpush2.msra.mxu0 %v3374
    %3539 = vmatprep.subr.mxu0 0.0
    %3540 = vmatpush2.msra.mxu0 %v3373
    %3541 = vmatprep.subr.mxu0 0.0
    %3542 = vmatpush2.msra.mxu0 %v3372
    %3543 = vmatprep.subr.mxu0 0.0
    %3544 = vmatpush2.msra.mxu0 %v3371
    %3545 = vmatprep.subr.mxu0 0.0
    %3546 = vmatpush2.msra.mxu0 %v3370
    %3547 = vmatprep.subr.mxu0 0.0
    %3548 = vmatpush2.msra.mxu0 %v3369
    %3549 = vmatprep.subr.mxu0 0.0
    %3550 = vmatpush2.msra.mxu0 %v3368
    %3551 = vmatprep.subr.mxu0 0.0
    %3552 = vmatpush2.msra.mxu0 %v3367
    %3553 = vmatprep.subr.mxu0 0.0
    %3554 = vmatpush2.msra.mxu0 %v3366
    %3555 = vmatprep.mubr.f32.mxu0 %v3277
    %3556 = vmatmul.mubr.f32.gmra.mxu0 %v3263
    %v3557 = vpop.f32.mrf.mxu0
    %v3558 = vadd.f32 %v3488, %v3557
    %v3559 = vpop.f32.mrf.mxu0
    %3560 = vdwg.mxu0
    %3561 = vmatprep.subr.mxu0 0.0
    %3562 = vmatpush1.msra.mxu0 %v3397
    %3563 = vmatprep.subr.mxu0 0.0
    %3564 = vmatpush1.msra.mxu0 %v3396
    %3565 = vmatprep.subr.mxu0 0.0
    %3566 = vmatpush1.msra.mxu0 %v3395
    %3567 = vmatprep.subr.mxu0 0.0
    %3568 = vmatpush1.msra.mxu0 %v3394
    %3569 = vmatprep.subr.mxu0 0.0
    %3570 = vmatpush1.msra.mxu0 %v3393
    %3571 = vmatprep.subr.mxu0 0.0
    %3572 = vmatpush1.msra.mxu0 %v3392
    %3573 = vmatprep.subr.mxu0 0.0
    %3574 = vmatpush1.msra.mxu0 %v3391
    %3575 = vmatprep.subr.mxu0 0.0
    %3576 = vmatpush1.msra.mxu0 %v3390
    %3577 = vmatprep.subr.mxu0 0.0
    %3578 = vmatpush1.msra.mxu0 %v3389
    %3579 = vmatprep.subr.mxu0 0.0
    %3580 = vmatpush1.msra.mxu0 %v3388
    %3581 = vmatprep.subr.mxu0 0.0
    %3582 = vmatpush1.msra.mxu0 %v3387
    %3583 = vmatprep.subr.mxu0 0.0
    %3584 = vmatpush1.msra.mxu0 %v3386
    %3585 = vmatprep.subr.mxu0 0.0
    %3586 = vmatpush1.msra.mxu0 %v3385
    %3587 = vmatprep.subr.mxu0 0.0
    %3588 = vmatpush1.msra.mxu0 %v3384
    %3589 = vmatprep.subr.mxu0 0.0
    %3590 = vmatpush1.msra.mxu0 %v3383
    %3591 = vmatprep.subr.mxu0 0.0
    %3592 = vmatpush1.msra.mxu0 %v3382
    %3593 = vmatprep.subr.mxu0 0.0
    %3594 = vmatpush2.msra.mxu0 %v3413
    %3595 = vmatprep.subr.mxu0 0.0
    %3596 = vmatpush2.msra.mxu0 %v3412
    %3597 = vmatprep.subr.mxu0 0.0
    %3598 = vmatpush2.msra.mxu0 %v3411
    %3599 = vmatprep.subr.mxu0 0.0
    %3600 = vmatpush2.msra.mxu0 %v3410
    %3601 = vmatprep.subr.mxu0 0.0
    %3602 = vmatpush2.msra.mxu0 %v3409
    %3603 = vmatprep.subr.mxu0 0.0
    %3604 = vmatpush2.msra.mxu0 %v3408
    %3605 = vmatprep.subr.mxu0 0.0
    %3606 = vmatpush2.msra.mxu0 %v3407
    %3607 = vmatprep.subr.mxu0 0.0
    %3608 = vmatpush2.msra.mxu0 %v3406
    %3609 = vmatprep.subr.mxu0 0.0
    %3610 = vmatpush2.msra.mxu0 %v3405
    %3611 = vmatprep.subr.mxu0 0.0
    %3612 = vmatpush2.msra.mxu0 %v3404
    %3613 = vmatprep.subr.mxu0 0.0
    %3614 = vmatpush2.msra.mxu0 %v3403
    %3615 = vmatprep.subr.mxu0 0.0
    %3616 = vmatpush2.msra.mxu0 %v3402
    %3617 = vmatprep.subr.mxu0 0.0
    %3618 = vmatpush2.msra.mxu0 %v3401
    %3619 = vmatprep.subr.mxu0 0.0
    %3620 = vmatpush2.msra.mxu0 %v3400
    %3621 = vmatprep.subr.mxu0 0.0
    %3622 = vmatpush2.msra.mxu0 %v3399
    %3623 = vmatprep.subr.mxu0 0.0
    %3624 = vmatpush2.msra.mxu0 %v3398
    %3625 = vmatprep.mubr.f32.mxu0 %v3305
    %3626 = vmatmul.mubr.f32.gmra.mxu0 %v3291
    %v3627 = vpop.f32.mrf.mxu0
    %v3628 = vadd.f32 %v3558, %v3627
    %v3629 = vpop.f32.mrf.mxu0
    %3630 = vdwg.mxu0
    %3631 = vst [vmem:[%s7] sm:$0xff] %v3628
    // Predicated region
    $region30: #{textcnn_forward.1} parent=1 // pred_check
      _
    $region31: #{textcnn_forward.1} parent=1 // pred_check_branch
      %3633 = sbr.rel (0) target = $region33
    $region32: #{textcnn_forward.1} parent=1 // pred_region
      _
    $region33: #{textcnn_forward.1} parent=1 // pred_fallthru
      _
    // Predicated region
    $region34: #{textcnn_forward.1} parent=1 // pred_check
      _
    $region35: #{textcnn_forward.1} parent=1 // pred_check_branch
      %3635 = sbr.rel (0) target = $region37
    $region36: #{textcnn_forward.1} parent=1 // pred_region
      _
    $region37: #{textcnn_forward.1} parent=1 // pred_fallthru
      _
    // Predicated region
    $region38: #{textcnn_forward.1} parent=1 // pred_check
      _
    $region39: #{textcnn_forward.1} parent=1 // pred_check_branch
      %3637 = sbr.rel (0) target = $region41
    $region40: #{textcnn_forward.1} parent=1 // pred_region
      _
    $region41: #{textcnn_forward.1} parent=1 // pred_fallthru
      _
    // Predicated region
    $region42: #{textcnn_forward.1} parent=1 // pred_check
      _
    $region43: #{textcnn_forward.1} parent=1 // pred_check_branch
      %3639 = sbr.rel (0) target = $region45
    $region44: #{textcnn_forward.1} parent=1 // pred_region
      _
    $region45: #{textcnn_forward.1} parent=1 // pred_fallthru
      _
    %3640 = vsyncpa [#allocation3], 1

</llo_original>
